<compile_context>
chip_gen: v5e
topology: v5e:2x2
jax: 0.10.0
libtpu: 0.0.40
codegen_flags: <defaults>
</compile_context>

<pallas_src>
import numpy as np
import jax
import jax.numpy as jnp
from jax.experimental import pallas as pl
from jax.experimental.pallas import tpu as pltpu

VMEM_LIMIT_BYTES = 32 * 1024 * 1024
_BN_EPS = 1e-5


# ---------------------------------------------------------------------------
# Static geometry (numpy, trace-time only)
# ---------------------------------------------------------------------------

def _conv_out(n, k, s, p):
    return (n + 2 * p - k) // s + 1


def _conv_select(h, w, k, s, p):
    """Per-tap 0/1 row-selection matrices implementing im2col-as-matmul.

    Returns:
      S    : (len(keep)*mo, mi) float32, vertical stack of per-tap selection matrices
      keep : original tap indices (di*k+dj) that touch at least one in-range pixel
      mo, mi, oh, ow
    """
    oh, ow = _conv_out(h, k, s, p), _conv_out(w, k, s, p)
    mo, mi = oh * ow, h * w
    mats, keep = [], []
    for di in range(k):
        for dj in range(k):
            S = np.zeros((mo, mi), np.float32)
            valid = False
            for i in range(oh):
                for j in range(ow):
                    hi, wi = i * s + di - p, j * s + dj - p
                    if 0 <= hi < h and 0 <= wi < w:
                        S[i * ow + j, hi * w + wi] = 1.0
                        valid = True
            if valid:
                mats.append(S)
                keep.append(di * k + dj)
    return dict(S=np.concatenate(mats, axis=0), keep=keep, mo=mo, mi=mi, oh=oh, ow=ow)


def _np_ones_patches(h, w, cin, k, s, p):
    """im2col of an all-ones single image (zero padded) -> (oh*ow, k*k*cin) constant."""
    x = np.ones((1, h, w, cin), np.float32)
    xp = np.pad(x, ((0, 0), (p, p), (p, p), (0, 0)))
    oh, ow = _conv_out(h, k, s, p), _conv_out(w, k, s, p)
    taps = [xp[:, i:i + (oh - 1) * s + 1:s, j:j + (ow - 1) * s + 1:s, :]
            for i in range(k) for j in range(k)]
    return np.stack(taps, axis=3).reshape(oh * ow, k * k * cin)


def make_geometry(h, w):
    g = {}
    h1, w1 = _conv_out(h, 7, 2, 3), _conv_out(w, 7, 2, 3)     # conv1 output map
    g["m_img"] = h1 * w1
    g["ones_patches"] = _np_ones_patches(h, w, 2, 7, 2, 3)
    g["mp"] = _conv_select(h1, w1, 3, 2, 1)                   # maxpool taps
    hw = (g["mp"]["oh"], g["mp"]["ow"])
    blocks = []
    for planes in (64, 128, 256):                             # layer1..3, stride 2 each
        c1 = _conv_select(hw[0], hw[1], 3, 2, 1)
        c2 = _conv_select(c1["oh"], c1["ow"], 3, 1, 1)
        ds = _conv_select(hw[0], hw[1], 1, 2, 0)
        blocks.append(dict(c1=c1, c2=c2, ds=ds, planes=planes))
        hw = (c2["oh"], c2["ow"])
    g["blocks"] = blocks
    return g


# ---------------------------------------------------------------------------
# XLA layout glue (only on the raw HBM input; everything downstream is in-kernel)
# ---------------------------------------------------------------------------

def im2col(x, kh, kw, stride, padding):
    n, h, w, c = x.shape
    xp = jnp.pad(x, ((0, 0), (padding, padding), (padding, padding), (0, 0)))
    ho, wo = _conv_out(h, kh, stride, padding), _conv_out(w, kw, stride, padding)
    taps = [xp[:, i:i + (ho - 1) * stride + 1:stride,
               j:j + (wo - 1) * stride + 1:stride, :]
            for i in range(kh) for j in range(kw)]
    cols = jnp.stack(taps, axis=3)                            # (N, Ho, Wo, KH*KW, C)
    return cols.reshape(n * ho * wo, kh * kw * c)


# ---------------------------------------------------------------------------
# The fused whole-network kernel
# ---------------------------------------------------------------------------

def _make_resnet_kernel(names, geo):
    mp = geo["mp"]
    blocks = geo["blocks"]

    def gathered_conv(x, w_ref, b, s_ref, sel, relu):
        """3x3 conv + folded BN bias:  sum_t S_t @ (x @ W_t)   (fp32 accumulation)."""
        cout = w_ref.shape[1] // 9
        mo, mi, keep, = sel["mo"], sel["mi"], sel["keep"]
        y = jnp.dot(x.astype(jnp.bfloat16), w_ref[...],
                    preferred_element_type=jnp.float32)          # (mi, 9*cout)
        s_val = s_ref[...] if (mo, mi) != (1, 1) else None
        acc = None
        for idx, t in enumerate(keep):
            ys = y[:, t * cout:(t + 1) * cout]
            if (mo, mi) == (1, 1):
                g = ys                                            # 1x1-spatial identity gather
            else:
                g = jnp.dot(s_val[idx * mo:(idx + 1) * mo, :], ys,
                            preferred_element_type=jnp.float32)
            acc = g if acc is None else acc + g
        acc = acc + b
        return jnp.maximum(acc, 0.0) if relu else acc

    def ds_conv(x, w_ref, s_ref, sel):
        """1x1 stride-s downsample conv of the residual branch (bias folded into c2_b)."""
        if (sel["mo"], sel["mi"]) == (1, 1):
            xg = x
        else:
            xg = jnp.dot(s_ref[...], x, preferred_element_type=jnp.float32)
        return jnp.dot(xg.astype(jnp.bfloat16), w_ref[...],
                       preferred_element_type=jnp.float32)

    def kernel(*refs):
        r = dict(zip(names, refs))
        out_ref = refs[-1]

        # ---- norm_data folded into the conv1 prologue ----------------------------------
        xall = r["x_flat"][...]
        mn = jnp.min(xall, keepdims=True)                         # (1, 1)
        mx = jnp.max(xall, keepdims=True)
        # reference divides by 0 for a constant tensor; tiny floor keeps the kernel finite.
        inv = 1.0 / jnp.maximum(mx - mn, 1e-30)

        # ---- conv1(7x7,s2) + bn1 + relu:  conv(norm(x)) = inv*conv(x) - mn*inv*conv(1) --
        acc = jnp.dot(r["patches"][...], r["w1"][...], preferred_element_type=jnp.float32)
        ones = jnp.dot(r["ones_patches"][...], r["w1"][...], preferred_element_type=jnp.float32)
        y = jnp.maximum(inv * acc - (mn * inv) * ones + r["b1"][...], 0.0)   # (64, 64)

        # ---- maxpool 3x3/s2/p1 (zero padding == -inf padding since y >= 0 post-ReLU) ----
        s_val = r["mp_S"][...]
        mo = mp["mo"]
        pooled = None
        for idx in range(len(mp["keep"])):
            g = jnp.dot(s_val[idx * mo:(idx + 1) * mo, :], y,
                        preferred_element_type=jnp.float32)
            pooled = g if pooled is None else jnp.maximum(pooled, g)
        y = pooled                                                           # (16, 64)

        # ---- layer1..layer3 (BasicBlock, stride 2, 1x1 downsample) ----------------------
        for li, blk in enumerate(blocks, start=1):
            pre = f"l{li}_"
            o1 = gathered_conv(y, r[pre + "c1_W"], r[pre + "c1_b"][...],
                               r.get(pre + "c1_S"), blk["c1"], relu=True)
            o2 = gathered_conv(o1, r[pre + "c2_W"], r[pre + "c2_b"][...],
                               r.get(pre + "c2_S"), blk["c2"], relu=False)
            d = ds_conv(y, r[pre + "ds_W"], r.get(pre + "ds_S"), blk["ds"])
            y = jnp.maximum(o2 + d, 0.0)

        # ---- avgpool + flatten + fc (fc padded to 128 lanes -> lane-dense store) --------
        feat = jnp.mean(y, axis=0, keepdims=True)                            # (1, 256)
        logits = jnp.dot(feat, r["fc_w"][...],
                         preferred_element_type=jnp.float32) + r["fc_b"][...]
        out_ref[0, :, :] = jnp.broadcast_to(logits, (8, 128))

    return kernel


# ---------------------------------------------------------------------------
# Parameters (eval-mode BN folded; weights pre-laid-out for the kernel)
# ---------------------------------------------------------------------------

def init_params(key):
    keys = iter(jax.random.split(key, 64))

    def conv_w(kh, kw, cin, cout):
        std = (2.0 / (kh * kw * cin)) ** 0.5
        return jax.random.normal(next(keys), (kh, kw, cin, cout), jnp.float32) * std

    def bn(c):
        gamma = jax.random.uniform(next(keys), (c,), jnp.float32, 0.5, 1.5)
        beta = jax.random.normal(next(keys), (c,), jnp.float32) * 0.1
        scale = gamma / jnp.sqrt(1.0 + _BN_EPS)    # eval-mode BN -> per-channel affine
        return scale, beta

    def tap_major(w, scale):
        # (3,3,cin,cout) -> (cin, 9*cout) with tap-major columns; BN scale folded in.
        kh, kw, cin, cout = w.shape
        wm = (w * scale).transpose((2, 0, 1, 3)).reshape(cin, kh * kw * cout)
        return wm.astype(jnp.bfloat16)

    def block(cin, planes):
        p = {}
        s1, b1 = bn(planes)
        p["c1_W"] = tap_major(conv_w(3, 3, cin, planes), s1)
        p["c1_b"] = b1.reshape(1, planes)
        s2, b2 = bn(planes)
        p["c2_W"] = tap_major(conv_w(3, 3, planes, planes), s2)
        sd, bd = bn(planes)
        ds_bias = jax.random.normal(next(keys), (planes,), jnp.float32) * 0.05
        p["ds_W"] = (conv_w(1, 1, cin, planes).reshape(cin, planes) * sd).astype(jnp.bfloat16)
        # conv2's BN beta and the (bias=True, per the nn.Conv2d default) downsample path's
        # folded bias add at the same point of the residual sum -> single bias vector.
        p["c2_b"] = (b2 + sd * ds_bias + bd).reshape(1, planes)
        return p

    params = {}
    s, b = bn(64)
    params["w1"] = (conv_w(7, 7, 2, 64) * s).reshape(98, 64).astype(jnp.bfloat16)
    params["b1"] = b.reshape(1, 64)
    params["layer1"] = block(64, 64)
    params["layer2"] = block(64, 128)
    params["layer3"] = block(128, 256)

    fc_w = jax.random.normal(next(keys), (256, 2), jnp.float32) * (1.0 / 256.0) ** 0.5
    fc_b = jax.random.normal(next(keys), (2,), jnp.float32) * 0.05
    params["fc_w"] = jnp.pad(fc_w, ((0, 0), (0, 126)))           # pad to 128 output lanes
    params["fc_b"] = jnp.pad(fc_b.reshape(1, 2), ((0, 0), (0, 126)))
    return params


# ---------------------------------------------------------------------------
# Forward pass (single fused pallas_call)
# ---------------------------------------------------------------------------

def resnet_forward(params, src, tgt):
    n = src.shape[0]
    x = jnp.concatenate([src, tgt], axis=1)                      # (N, 2, H, W)
    x = jnp.transpose(x, (0, 2, 3, 1))                           # -> NHWC
    _, h, w, _ = x.shape
    geo = make_geometry(h, w)
    m_img = geo["m_img"]

    total = x.size
    x_flat = x.reshape(total // 128, 128) if total % 128 == 0 else x.reshape(1, total)
    # cast BEFORE the 49x im2col amplification; min/max stays on the fp32 tensor above.
    patches = im2col(x.astype(jnp.bfloat16), 7, 7, 2, 3)         # (N*m_img, 98) bf16

    names, vals, specs = [], [], []

    def add(name, arr, spec=None):
        arr = jnp.asarray(arr)
        if spec is None:                                          # VMEM-resident block
            spec = pl.BlockSpec(arr.shape, lambda i: (0, 0))
        names.append(name)
        vals.append(arr)
        specs.append(spec)

    add("x_flat", x_flat)
    add("patches", patches, pl.BlockSpec((m_img, patches.shape[1]), lambda i: (i, 0)))
    add("ones_patches", jnp.asarray(geo["ones_patches"], jnp.bfloat16))
    add("w1", params["w1"])
    add("b1", params["b1"])
    add("mp_S", geo["mp"]["S"])
    for li, blk in enumerate(geo["blocks"], start=1):
        p = params[f"layer{li}"]
        pre = f"l{li}_"
        for cname in ("c1", "c2"):
            sel = blk[cname]
            if (sel["mo"], sel["mi"]) != (1, 1):                  # skip trivial 1x1 gathers
                add(pre + cname + "_S", sel["S"])
            add(pre + cname + "_W", p[cname + "_W"])
            add(pre + cname + "_b", p[cname + "_b"])
        if (blk["ds"]["mo"], blk["ds"]["mi"]) != (1, 1):
            add(pre + "ds_S", blk["ds"]["S"])
        add(pre + "ds_W", p["ds_W"])
    add("fc_w", params["fc_w"])
    add("fc_b", params["fc_b"])

    kernel = _make_resnet_kernel(names, geo)

    out = pl.pallas_call(
        kernel,
        grid=(n,),                                                # batch-parallel (v7x 2 cores)
        in_specs=specs,
        out_specs=pl.BlockSpec((1, 8, 128), lambda i: (i, 0, 0)),
        out_shape=jax.ShapeDtypeStruct((n, 8, 128), jnp.float32),
        compiler_params=pltpu.CompilerParams(
            dimension_semantics=("parallel",),
            vmem_limit_bytes=VMEM_LIMIT_BYTES),
    )(*vals)
    return out[:, 0, :2]                                          # (N, num_classes)


if __name__ == "__main__":
    key = jax.random.PRNGKey(0)
    kp, ks, kt = jax.random.split(key, 3)
    params = init_params(kp)

    N, H, W = 2, 16, 16
    src = jax.random.normal(ks, (N, 1, H, W), jnp.float32)
    tgt = jax.random.normal(kt, (N, 1, H, W), jnp.float32)

    forward = jax.jit(resnet_forward)
    out = jax.block_until_ready(forward(params, src, tgt))
    assert out.shape == (N, 2) and out.dtype == jnp.float32
    print("KERNEL_OK")
</pallas_src>

<mosaic_0001>
module attributes {stable_mosaic.version = 11 : i64} {
  func.func @kernel(%arg0: i32, %arg1: memref<8x128xf32, #tpu.memory_space<vmem>>, %arg2: memref<64x98xbf16, #tpu.memory_space<vmem>>, %arg3: memref<64x98xbf16, #tpu.memory_space<vmem>>, %arg4: memref<98x64xbf16, #tpu.memory_space<vmem>>, %arg5: memref<1x64xf32, #tpu.memory_space<vmem>>, %arg6: memref<144x64xf32, #tpu.memory_space<vmem>>, %arg7: memref<36x16xf32, #tpu.memory_space<vmem>>, %arg8: memref<64x576xbf16, #tpu.memory_space<vmem>>, %arg9: memref<1x64xf32, #tpu.memory_space<vmem>>, %arg10: memref<36x4xf32, #tpu.memory_space<vmem>>, %arg11: memref<64x576xbf16, #tpu.memory_space<vmem>>, %arg12: memref<1x64xf32, #tpu.memory_space<vmem>>, %arg13: memref<4x16xf32, #tpu.memory_space<vmem>>, %arg14: memref<64x64xbf16, #tpu.memory_space<vmem>>, %arg15: memref<4x4xf32, #tpu.memory_space<vmem>>, %arg16: memref<64x1152xbf16, #tpu.memory_space<vmem>>, %arg17: memref<1x128xf32, #tpu.memory_space<vmem>>, %arg18: memref<128x1152xbf16, #tpu.memory_space<vmem>>, %arg19: memref<1x128xf32, #tpu.memory_space<vmem>>, %arg20: memref<1x4xf32, #tpu.memory_space<vmem>>, %arg21: memref<64x128xbf16, #tpu.memory_space<vmem>>, %arg22: memref<128x2304xbf16, #tpu.memory_space<vmem>>, %arg23: memref<1x256xf32, #tpu.memory_space<vmem>>, %arg24: memref<256x2304xbf16, #tpu.memory_space<vmem>>, %arg25: memref<1x256xf32, #tpu.memory_space<vmem>>, %arg26: memref<128x256xbf16, #tpu.memory_space<vmem>>, %arg27: memref<256x128xf32, #tpu.memory_space<vmem>>, %arg28: memref<1x128xf32, #tpu.memory_space<vmem>>, %arg29: memref<1x8x128xf32, #tpu.memory_space<vmem>>) attributes {dimension_semantics = [#tpu.dimension_semantics<parallel>], iteration_bounds = array<i64: 2>, scalar_prefetch = 0 : i64, scratch_operands = 0 : i64, tpu.core_type = #tpu.core_type<tc>, window_params = [{pipeline_mode = #tpu.pipeline_mode<synchronous>, transform_indices = @transform_0, window_bounds = array<i64: 8, 128>}, {transform_indices = @transform_1, window_bounds = array<i64: 64, 98>}, {pipeline_mode = #tpu.pipeline_mode<synchronous>, transform_indices = @transform_2, window_bounds = array<i64: 64, 98>}, {pipeline_mode = #tpu.pipeline_mode<synchronous>, transform_indices = @transform_3, window_bounds = array<i64: 98, 64>}, {pipeline_mode = #tpu.pipeline_mode<synchronous>, transform_indices = @transform_4, window_bounds = array<i64: 1, 64>}, {pipeline_mode = #tpu.pipeline_mode<synchronous>, transform_indices = @transform_5, window_bounds = array<i64: 144, 64>}, {pipeline_mode = #tpu.pipeline_mode<synchronous>, transform_indices = @transform_6, window_bounds = array<i64: 36, 16>}, {pipeline_mode = #tpu.pipeline_mode<synchronous>, transform_indices = @transform_7, window_bounds = array<i64: 64, 576>}, {pipeline_mode = #tpu.pipeline_mode<synchronous>, transform_indices = @transform_8, window_bounds = array<i64: 1, 64>}, {pipeline_mode = #tpu.pipeline_mode<synchronous>, transform_indices = @transform_9, window_bounds = array<i64: 36, 4>}, {pipeline_mode = #tpu.pipeline_mode<synchronous>, transform_indices = @transform_10, window_bounds = array<i64: 64, 576>}, {pipeline_mode = #tpu.pipeline_mode<synchronous>, transform_indices = @transform_11, window_bounds = array<i64: 1, 64>}, {pipeline_mode = #tpu.pipeline_mode<synchronous>, transform_indices = @transform_12, window_bounds = array<i64: 4, 16>}, {pipeline_mode = #tpu.pipeline_mode<synchronous>, transform_indices = @transform_13, window_bounds = array<i64: 64, 64>}, {pipeline_mode = #tpu.pipeline_mode<synchronous>, transform_indices = @transform_14, window_bounds = array<i64: 4, 4>}, {pipeline_mode = #tpu.pipeline_mode<synchronous>, transform_indices = @transform_15, window_bounds = array<i64: 64, 1152>}, {pipeline_mode = #tpu.pipeline_mode<synchronous>, transform_indices = @transform_16, window_bounds = array<i64: 1, 128>}, {pipeline_mode = #tpu.pipeline_mode<synchronous>, transform_indices = @transform_17, window_bounds = array<i64: 128, 1152>}, {pipeline_mode = #tpu.pipeline_mode<synchronous>, transform_indices = @transform_18, window_bounds = array<i64: 1, 128>}, {pipeline_mode = #tpu.pipeline_mode<synchronous>, transform_indices = @transform_19, window_bounds = array<i64: 1, 4>}, {pipeline_mode = #tpu.pipeline_mode<synchronous>, transform_indices = @transform_20, window_bounds = array<i64: 64, 128>}, {pipeline_mode = #tpu.pipeline_mode<synchronous>, transform_indices = @transform_21, window_bounds = array<i64: 128, 2304>}, {pipeline_mode = #tpu.pipeline_mode<synchronous>, transform_indices = @transform_22, window_bounds = array<i64: 1, 256>}, {pipeline_mode = #tpu.pipeline_mode<synchronous>, transform_indices = @transform_23, window_bounds = array<i64: 256, 2304>}, {pipeline_mode = #tpu.pipeline_mode<synchronous>, transform_indices = @transform_24, window_bounds = array<i64: 1, 256>}, {pipeline_mode = #tpu.pipeline_mode<synchronous>, transform_indices = @transform_25, window_bounds = array<i64: 128, 256>}, {pipeline_mode = #tpu.pipeline_mode<synchronous>, transform_indices = @transform_26, window_bounds = array<i64: 256, 128>}, {pipeline_mode = #tpu.pipeline_mode<synchronous>, transform_indices = @transform_27, window_bounds = array<i64: 1, 128>}, {transform_indices = @transform_28, window_bounds = array<i64: 1, 8, 128>}]} {
    %c0 = arith.constant 0 : index
    %c0_0 = arith.constant 0 : index
    %0 = vector.load %arg1[%c0, %c0_0] : memref<8x128xf32, #tpu.memory_space<vmem>>, vector<8x128xf32>
    %1 = vector.shape_cast %0 : vector<8x128xf32> to vector<1x8x128xf32>
    %cst = arith.constant dense<0x7F800000> : vector<1xf32>
    %2 = vector.multi_reduction <minimumf>, %1, %cst [1, 2] : vector<1x8x128xf32> to vector<1xf32>
    %3 = vector.shape_cast %2 : vector<1xf32> to vector<1x1x1xf32>
    %4 = vector.extract %3[0, 0, 0] : f32 from vector<1x1x1xf32>
    %5 = vector.broadcast %4 : f32 to vector<1x1xf32>
    %6 = vector.shape_cast %0 : vector<8x128xf32> to vector<1x8x128xf32>
    %cst_1 = arith.constant dense<0xFF800000> : vector<1xf32>
    %7 = vector.multi_reduction <maximumf>, %6, %cst_1 [1, 2] : vector<1x8x128xf32> to vector<1xf32>
    %8 = vector.shape_cast %7 : vector<1xf32> to vector<1x1x1xf32>
    %9 = vector.extract %8[0, 0, 0] : f32 from vector<1x1x1xf32>
    %10 = vector.broadcast %9 : f32 to vector<1x1xf32>
    %11 = arith.subf %10, %5 : vector<1x1xf32>
    %cst_2 = arith.constant 1.000000e-30 : f32
    %12 = vector.broadcast %cst_2 : f32 to vector<1x1xf32>
    %13 = arith.maximumf %11, %12 : vector<1x1xf32>
    %cst_3 = arith.constant 1.000000e+00 : f32
    %14 = vector.broadcast %cst_3 : f32 to vector<1x1xf32>
    %15 = arith.divf %14, %13 : vector<1x1xf32>
    %c0_4 = arith.constant 0 : index
    %c0_5 = arith.constant 0 : index
    %16 = vector.load %arg2[%c0_4, %c0_5] : memref<64x98xbf16, #tpu.memory_space<vmem>>, vector<64x98xbf16>
    %c0_6 = arith.constant 0 : index
    %c0_7 = arith.constant 0 : index
    %17 = vector.load %arg4[%c0_6, %c0_7] : memref<98x64xbf16, #tpu.memory_space<vmem>>, vector<98x64xbf16>
    %cst_8 = arith.constant dense<0.000000e+00> : vector<64x64xf32>
    %18 = tpu.matmul %16, %17, %cst_8 {dimension_numbers = #tpu.dot_dimension_numbers<[1], [0], [0], [1], [0, 0, 1, 1], [], []>} : vector<64x98xbf16>, vector<98x64xbf16>, vector<64x64xf32> -> vector<64x64xf32>
    %c0_9 = arith.constant 0 : index
    %c0_10 = arith.constant 0 : index
    %19 = vector.load %arg3[%c0_9, %c0_10] : memref<64x98xbf16, #tpu.memory_space<vmem>>, vector<64x98xbf16>
    %c0_11 = arith.constant 0 : index
    %c0_12 = arith.constant 0 : index
    %20 = vector.load %arg4[%c0_11, %c0_12] : memref<98x64xbf16, #tpu.memory_space<vmem>>, vector<98x64xbf16>
    %cst_13 = arith.constant dense<0.000000e+00> : vector<64x64xf32>
    %21 = tpu.matmul %19, %20, %cst_13 {dimension_numbers = #tpu.dot_dimension_numbers<[1], [0], [0], [1], [0, 0, 1, 1], [], []>} : vector<64x98xbf16>, vector<98x64xbf16>, vector<64x64xf32> -> vector<64x64xf32>
    %22 = vector.broadcast %15 : vector<1x1xf32> to vector<64x64xf32>
    %23 = arith.mulf %22, %18 : vector<64x64xf32>
    %24 = arith.mulf %5, %15 : vector<1x1xf32>
    %25 = vector.broadcast %24 : vector<1x1xf32> to vector<64x64xf32>
    %26 = arith.mulf %25, %21 : vector<64x64xf32>
    %27 = arith.subf %23, %26 : vector<64x64xf32>
    %c0_14 = arith.constant 0 : index
    %c0_15 = arith.constant 0 : index
    %28 = vector.load %arg5[%c0_14, %c0_15] : memref<1x64xf32, #tpu.memory_space<vmem>>, vector<1x64xf32>
    %29 = vector.broadcast %28 : vector<1x64xf32> to vector<64x64xf32>
    %30 = arith.addf %27, %29 : vector<64x64xf32>
    %cst_16 = arith.constant 0.000000e+00 : f32
    %31 = vector.broadcast %cst_16 : f32 to vector<64x64xf32>
    %32 = arith.maximumf %30, %31 : vector<64x64xf32>
    %c0_17 = arith.constant 0 : index
    %c0_18 = arith.constant 0 : index
    %33 = vector.load %arg6[%c0_17, %c0_18] : memref<144x64xf32, #tpu.memory_space<vmem>>, vector<144x64xf32>
    %34 = vector.extract_strided_slice %33 {offsets = [0, 0], sizes = [16, 64], strides = [1, 1]} : vector<144x64xf32> to vector<16x64xf32>
    %cst_19 = arith.constant dense<0.000000e+00> : vector<16x64xf32>
    %35 = tpu.matmul %34, %32, %cst_19 {dimension_numbers = #tpu.dot_dimension_numbers<[1], [0], [0], [1], [0, 0, 1, 1], [], []>} : vector<16x64xf32>, vector<64x64xf32>, vector<16x64xf32> -> vector<16x64xf32>
    %36 = vector.extract_strided_slice %33 {offsets = [16, 0], sizes = [16, 64], strides = [1, 1]} : vector<144x64xf32> to vector<16x64xf32>
    %cst_20 = arith.constant dense<0.000000e+00> : vector<16x64xf32>
    %37 = tpu.matmul %36, %32, %cst_20 {dimension_numbers = #tpu.dot_dimension_numbers<[1], [0], [0], [1], [0, 0, 1, 1], [], []>} : vector<16x64xf32>, vector<64x64xf32>, vector<16x64xf32> -> vector<16x64xf32>
    %38 = arith.maximumf %35, %37 : vector<16x64xf32>
    %39 = vector.extract_strided_slice %33 {offsets = [32, 0], sizes = [16, 64], strides = [1, 1]} : vector<144x64xf32> to vector<16x64xf32>
    %cst_21 = arith.constant dense<0.000000e+00> : vector<16x64xf32>
    %40 = tpu.matmul %39, %32, %cst_21 {dimension_numbers = #tpu.dot_dimension_numbers<[1], [0], [0], [1], [0, 0, 1, 1], [], []>} : vector<16x64xf32>, vector<64x64xf32>, vector<16x64xf32> -> vector<16x64xf32>
    %41 = arith.maximumf %38, %40 : vector<16x64xf32>
    %42 = vector.extract_strided_slice %33 {offsets = [48, 0], sizes = [16, 64], strides = [1, 1]} : vector<144x64xf32> to vector<16x64xf32>
    %cst_22 = arith.constant dense<0.000000e+00> : vector<16x64xf32>
    %43 = tpu.matmul %42, %32, %cst_22 {dimension_numbers = #tpu.dot_dimension_numbers<[1], [0], [0], [1], [0, 0, 1, 1], [], []>} : vector<16x64xf32>, vector<64x64xf32>, vector<16x64xf32> -> vector<16x64xf32>
    %44 = arith.maximumf %41, %43 : vector<16x64xf32>
    %45 = vector.extract_strided_slice %33 {offsets = [64, 0], sizes = [16, 64], strides = [1, 1]} : vector<144x64xf32> to vector<16x64xf32>
    %cst_23 = arith.constant dense<0.000000e+00> : vector<16x64xf32>
    %46 = tpu.matmul %45, %32, %cst_23 {dimension_numbers = #tpu.dot_dimension_numbers<[1], [0], [0], [1], [0, 0, 1, 1], [], []>} : vector<16x64xf32>, vector<64x64xf32>, vector<16x64xf32> -> vector<16x64xf32>
    %47 = arith.maximumf %44, %46 : vector<16x64xf32>
    %48 = vector.extract_strided_slice %33 {offsets = [80, 0], sizes = [16, 64], strides = [1, 1]} : vector<144x64xf32> to vector<16x64xf32>
    %cst_24 = arith.constant dense<0.000000e+00> : vector<16x64xf32>
    %49 = tpu.matmul %48, %32, %cst_24 {dimension_numbers = #tpu.dot_dimension_numbers<[1], [0], [0], [1], [0, 0, 1, 1], [], []>} : vector<16x64xf32>, vector<64x64xf32>, vector<16x64xf32> -> vector<16x64xf32>
    %50 = arith.maximumf %47, %49 : vector<16x64xf32>
    %51 = vector.extract_strided_slice %33 {offsets = [96, 0], sizes = [16, 64], strides = [1, 1]} : vector<144x64xf32> to vector<16x64xf32>
    %cst_25 = arith.constant dense<0.000000e+00> : vector<16x64xf32>
    %52 = tpu.matmul %51, %32, %cst_25 {dimension_numbers = #tpu.dot_dimension_numbers<[1], [0], [0], [1], [0, 0, 1, 1], [], []>} : vector<16x64xf32>, vector<64x64xf32>, vector<16x64xf32> -> vector<16x64xf32>
    %53 = arith.maximumf %50, %52 : vector<16x64xf32>
    %54 = vector.extract_strided_slice %33 {offsets = [112, 0], sizes = [16, 64], strides = [1, 1]} : vector<144x64xf32> to vector<16x64xf32>
    %cst_26 = arith.constant dense<0.000000e+00> : vector<16x64xf32>
    %55 = tpu.matmul %54, %32, %cst_26 {dimension_numbers = #tpu.dot_dimension_numbers<[1], [0], [0], [1], [0, 0, 1, 1], [], []>} : vector<16x64xf32>, vector<64x64xf32>, vector<16x64xf32> -> vector<16x64xf32>
    %56 = arith.maximumf %53, %55 : vector<16x64xf32>
    %57 = vector.extract_strided_slice %33 {offsets = [128, 0], sizes = [16, 64], strides = [1, 1]} : vector<144x64xf32> to vector<16x64xf32>
    %cst_27 = arith.constant dense<0.000000e+00> : vector<16x64xf32>
    %58 = tpu.matmul %57, %32, %cst_27 {dimension_numbers = #tpu.dot_dimension_numbers<[1], [0], [0], [1], [0, 0, 1, 1], [], []>} : vector<16x64xf32>, vector<64x64xf32>, vector<16x64xf32> -> vector<16x64xf32>
    %59 = arith.maximumf %56, %58 : vector<16x64xf32>
    %c0_28 = arith.constant 0 : index
    %c0_29 = arith.constant 0 : index
    %60 = vector.load %arg9[%c0_28, %c0_29] : memref<1x64xf32, #tpu.memory_space<vmem>>, vector<1x64xf32>
    %61 = arith.truncf %59 : vector<16x64xf32> to vector<16x64xbf16>
    %c0_30 = arith.constant 0 : index
    %c0_31 = arith.constant 0 : index
    %62 = vector.load %arg8[%c0_30, %c0_31] : memref<64x576xbf16, #tpu.memory_space<vmem>>, vector<64x576xbf16>
    %cst_32 = arith.constant dense<0.000000e+00> : vector<16x576xf32>
    %63 = tpu.matmul %61, %62, %cst_32 {dimension_numbers = #tpu.dot_dimension_numbers<[1], [0], [0], [1], [0, 0, 1, 1], [], []>} : vector<16x64xbf16>, vector<64x576xbf16>, vector<16x576xf32> -> vector<16x576xf32>
    %c0_33 = arith.constant 0 : index
    %c0_34 = arith.constant 0 : index
    %64 = vector.load %arg7[%c0_33, %c0_34] : memref<36x16xf32, #tpu.memory_space<vmem>>, vector<36x16xf32>
    %65 = vector.extract_strided_slice %63 {offsets = [0, 0], sizes = [16, 64], strides = [1, 1]} : vector<16x576xf32> to vector<16x64xf32>
    %66 = vector.extract_strided_slice %64 {offsets = [0, 0], sizes = [4, 16], strides = [1, 1]} : vector<36x16xf32> to vector<4x16xf32>
    %cst_35 = arith.constant dense<0.000000e+00> : vector<4x64xf32>
    %67 = tpu.matmul %66, %65, %cst_35 {dimension_numbers = #tpu.dot_dimension_numbers<[1], [0], [0], [1], [0, 0, 1, 1], [], []>} : vector<4x16xf32>, vector<16x64xf32>, vector<4x64xf32> -> vector<4x64xf32>
    %68 = vector.extract_strided_slice %63 {offsets = [0, 64], sizes = [16, 64], strides = [1, 1]} : vector<16x576xf32> to vector<16x64xf32>
    %69 = vector.extract_strided_slice %64 {offsets = [4, 0], sizes = [4, 16], strides = [1, 1]} : vector<36x16xf32> to vector<4x16xf32>
    %cst_36 = arith.constant dense<0.000000e+00> : vector<4x64xf32>
    %70 = tpu.matmul %69, %68, %cst_36 {dimension_numbers = #tpu.dot_dimension_numbers<[1], [0], [0], [1], [0, 0, 1, 1], [], []>} : vector<4x16xf32>, vector<16x64xf32>, vector<4x64xf32> -> vector<4x64xf32>
    %71 = arith.addf %67, %70 : vector<4x64xf32>
    %72 = vector.extract_strided_slice %63 {offsets = [0, 128], sizes = [16, 64], strides = [1, 1]} : vector<16x576xf32> to vector<16x64xf32>
    %73 = vector.extract_strided_slice %64 {offsets = [8, 0], sizes = [4, 16], strides = [1, 1]} : vector<36x16xf32> to vector<4x16xf32>
    %cst_37 = arith.constant dense<0.000000e+00> : vector<4x64xf32>
    %74 = tpu.matmul %73, %72, %cst_37 {dimension_numbers = #tpu.dot_dimension_numbers<[1], [0], [0], [1], [0, 0, 1, 1], [], []>} : vector<4x16xf32>, vector<16x64xf32>, vector<4x64xf32> -> vector<4x64xf32>
    %75 = arith.addf %71, %74 : vector<4x64xf32>
    %76 = vector.extract_strided_slice %63 {offsets = [0, 192], sizes = [16, 64], strides = [1, 1]} : vector<16x576xf32> to vector<16x64xf32>
    %77 = vector.extract_strided_slice %64 {offsets = [12, 0], sizes = [4, 16], strides = [1, 1]} : vector<36x16xf32> to vector<4x16xf32>
    %cst_38 = arith.constant dense<0.000000e+00> : vector<4x64xf32>
    %78 = tpu.matmul %77, %76, %cst_38 {dimension_numbers = #tpu.dot_dimension_numbers<[1], [0], [0], [1], [0, 0, 1, 1], [], []>} : vector<4x16xf32>, vector<16x64xf32>, vector<4x64xf32> -> vector<4x64xf32>
    %79 = arith.addf %75, %78 : vector<4x64xf32>
    %80 = vector.extract_strided_slice %63 {offsets = [0, 256], sizes = [16, 64], strides = [1, 1]} : vector<16x576xf32> to vector<16x64xf32>
    %81 = vector.extract_strided_slice %64 {offsets = [16, 0], sizes = [4, 16], strides = [1, 1]} : vector<36x16xf32> to vector<4x16xf32>
    %cst_39 = arith.constant dense<0.000000e+00> : vector<4x64xf32>
    %82 = tpu.matmul %81, %80, %cst_39 {dimension_numbers = #tpu.dot_dimension_numbers<[1], [0], [0], [1], [0, 0, 1, 1], [], []>} : vector<4x16xf32>, vector<16x64xf32>, vector<4x64xf32> -> vector<4x64xf32>
    %83 = arith.addf %79, %82 : vector<4x64xf32>
    %84 = vector.extract_strided_slice %63 {offsets = [0, 320], sizes = [16, 64], strides = [1, 1]} : vector<16x576xf32> to vector<16x64xf32>
    %85 = vector.extract_strided_slice %64 {offsets = [20, 0], sizes = [4, 16], strides = [1, 1]} : vector<36x16xf32> to vector<4x16xf32>
    %cst_40 = arith.constant dense<0.000000e+00> : vector<4x64xf32>
    %86 = tpu.matmul %85, %84, %cst_40 {dimension_numbers = #tpu.dot_dimension_numbers<[1], [0], [0], [1], [0, 0, 1, 1], [], []>} : vector<4x16xf32>, vector<16x64xf32>, vector<4x64xf32> -> vector<4x64xf32>
    %87 = arith.addf %83, %86 : vector<4x64xf32>
    %88 = vector.extract_strided_slice %63 {offsets = [0, 384], sizes = [16, 64], strides = [1, 1]} : vector<16x576xf32> to vector<16x64xf32>
    %89 = vector.extract_strided_slice %64 {offsets = [24, 0], sizes = [4, 16], strides = [1, 1]} : vector<36x16xf32> to vector<4x16xf32>
    %cst_41 = arith.constant dense<0.000000e+00> : vector<4x64xf32>
    %90 = tpu.matmul %89, %88, %cst_41 {dimension_numbers = #tpu.dot_dimension_numbers<[1], [0], [0], [1], [0, 0, 1, 1], [], []>} : vector<4x16xf32>, vector<16x64xf32>, vector<4x64xf32> -> vector<4x64xf32>
    %91 = arith.addf %87, %90 : vector<4x64xf32>
    %92 = vector.extract_strided_slice %63 {offsets = [0, 448], sizes = [16, 64], strides = [1, 1]} : vector<16x576xf32> to vector<16x64xf32>
    %93 = vector.extract_strided_slice %64 {offsets = [28, 0], sizes = [4, 16], strides = [1, 1]} : vector<36x16xf32> to vector<4x16xf32>
    %cst_42 = arith.constant dense<0.000000e+00> : vector<4x64xf32>
    %94 = tpu.matmul %93, %92, %cst_42 {dimension_numbers = #tpu.dot_dimension_numbers<[1], [0], [0], [1], [0, 0, 1, 1], [], []>} : vector<4x16xf32>, vector<16x64xf32>, vector<4x64xf32> -> vector<4x64xf32>
    %95 = arith.addf %91, %94 : vector<4x64xf32>
    %96 = vector.extract_strided_slice %63 {offsets = [0, 512], sizes = [16, 64], strides = [1, 1]} : vector<16x576xf32> to vector<16x64xf32>
    %97 = vector.extract_strided_slice %64 {offsets = [32, 0], sizes = [4, 16], strides = [1, 1]} : vector<36x16xf32> to vector<4x16xf32>
    %cst_43 = arith.constant dense<0.000000e+00> : vector<4x64xf32>
    %98 = tpu.matmul %97, %96, %cst_43 {dimension_numbers = #tpu.dot_dimension_numbers<[1], [0], [0], [1], [0, 0, 1, 1], [], []>} : vector<4x16xf32>, vector<16x64xf32>, vector<4x64xf32> -> vector<4x64xf32>
    %99 = arith.addf %95, %98 : vector<4x64xf32>
    %100 = vector.broadcast %60 : vector<1x64xf32> to vector<4x64xf32>
    %101 = arith.addf %99, %100 : vector<4x64xf32>
    %cst_44 = arith.constant 0.000000e+00 : f32
    %102 = vector.broadcast %cst_44 : f32 to vector<4x64xf32>
    %103 = arith.maximumf %101, %102 : vector<4x64xf32>
    %c0_45 = arith.constant 0 : index
    %c0_46 = arith.constant 0 : index
    %104 = vector.load %arg12[%c0_45, %c0_46] : memref<1x64xf32, #tpu.memory_space<vmem>>, vector<1x64xf32>
    %105 = arith.truncf %103 : vector<4x64xf32> to vector<4x64xbf16>
    %c0_47 = arith.constant 0 : index
    %c0_48 = arith.constant 0 : index
    %106 = vector.load %arg11[%c0_47, %c0_48] : memref<64x576xbf16, #tpu.memory_space<vmem>>, vector<64x576xbf16>
    %cst_49 = arith.constant dense<0.000000e+00> : vector<4x576xf32>
    %107 = tpu.matmul %105, %106, %cst_49 {dimension_numbers = #tpu.dot_dimension_numbers<[1], [0], [0], [1], [0, 0, 1, 1], [], []>} : vector<4x64xbf16>, vector<64x576xbf16>, vector<4x576xf32> -> vector<4x576xf32>
    %c0_50 = arith.constant 0 : index
    %c0_51 = arith.constant 0 : index
    %108 = vector.load %arg10[%c0_50, %c0_51] : memref<36x4xf32, #tpu.memory_space<vmem>>, vector<36x4xf32>
    %109 = vector.extract_strided_slice %107 {offsets = [0, 0], sizes = [4, 64], strides = [1, 1]} : vector<4x576xf32> to vector<4x64xf32>
    %110 = vector.extract_strided_slice %108 {offsets = [0, 0], sizes = [4, 4], strides = [1, 1]} : vector<36x4xf32> to vector<4x4xf32>
    %cst_52 = arith.constant dense<0.000000e+00> : vector<4x64xf32>
    %111 = tpu.matmul %110, %109, %cst_52 {dimension_numbers = #tpu.dot_dimension_numbers<[1], [0], [0], [1], [0, 0, 1, 1], [], []>} : vector<4x4xf32>, vector<4x64xf32>, vector<4x64xf32> -> vector<4x64xf32>
    %112 = vector.extract_strided_slice %107 {offsets = [0, 64], sizes = [4, 64], strides = [1, 1]} : vector<4x576xf32> to vector<4x64xf32>
    %113 = vector.extract_strided_slice %108 {offsets = [4, 0], sizes = [4, 4], strides = [1, 1]} : vector<36x4xf32> to vector<4x4xf32>
    %cst_53 = arith.constant dense<0.000000e+00> : vector<4x64xf32>
    %114 = tpu.matmul %113, %112, %cst_53 {dimension_numbers = #tpu.dot_dimension_numbers<[1], [0], [0], [1], [0, 0, 1, 1], [], []>} : vector<4x4xf32>, vector<4x64xf32>, vector<4x64xf32> -> vector<4x64xf32>
    %115 = arith.addf %111, %114 : vector<4x64xf32>
    %116 = vector.extract_strided_slice %107 {offsets = [0, 128], sizes = [4, 64], strides = [1, 1]} : vector<4x576xf32> to vector<4x64xf32>
    %117 = vector.extract_strided_slice %108 {offsets = [8, 0], sizes = [4, 4], strides = [1, 1]} : vector<36x4xf32> to vector<4x4xf32>
    %cst_54 = arith.constant dense<0.000000e+00> : vector<4x64xf32>
    %118 = tpu.matmul %117, %116, %cst_54 {dimension_numbers = #tpu.dot_dimension_numbers<[1], [0], [0], [1], [0, 0, 1, 1], [], []>} : vector<4x4xf32>, vector<4x64xf32>, vector<4x64xf32> -> vector<4x64xf32>
    %119 = arith.addf %115, %118 : vector<4x64xf32>
    %120 = vector.extract_strided_slice %107 {offsets = [0, 192], sizes = [4, 64], strides = [1, 1]} : vector<4x576xf32> to vector<4x64xf32>
    %121 = vector.extract_strided_slice %108 {offsets = [12, 0], sizes = [4, 4], strides = [1, 1]} : vector<36x4xf32> to vector<4x4xf32>
    %cst_55 = arith.constant dense<0.000000e+00> : vector<4x64xf32>
    %122 = tpu.matmul %121, %120, %cst_55 {dimension_numbers = #tpu.dot_dimension_numbers<[1], [0], [0], [1], [0, 0, 1, 1], [], []>} : vector<4x4xf32>, vector<4x64xf32>, vector<4x64xf32> -> vector<4x64xf32>
    %123 = arith.addf %119, %122 : vector<4x64xf32>
    %124 = vector.extract_strided_slice %107 {offsets = [0, 256], sizes = [4, 64], strides = [1, 1]} : vector<4x576xf32> to vector<4x64xf32>
    %125 = vector.extract_strided_slice %108 {offsets = [16, 0], sizes = [4, 4], strides = [1, 1]} : vector<36x4xf32> to vector<4x4xf32>
    %cst_56 = arith.constant dense<0.000000e+00> : vector<4x64xf32>
    %126 = tpu.matmul %125, %124, %cst_56 {dimension_numbers = #tpu.dot_dimension_numbers<[1], [0], [0], [1], [0, 0, 1, 1], [], []>} : vector<4x4xf32>, vector<4x64xf32>, vector<4x64xf32> -> vector<4x64xf32>
    %127 = arith.addf %123, %126 : vector<4x64xf32>
    %128 = vector.extract_strided_slice %107 {offsets = [0, 320], sizes = [4, 64], strides = [1, 1]} : vector<4x576xf32> to vector<4x64xf32>
    %129 = vector.extract_strided_slice %108 {offsets = [20, 0], sizes = [4, 4], strides = [1, 1]} : vector<36x4xf32> to vector<4x4xf32>
    %cst_57 = arith.constant dense<0.000000e+00> : vector<4x64xf32>
    %130 = tpu.matmul %129, %128, %cst_57 {dimension_numbers = #tpu.dot_dimension_numbers<[1], [0], [0], [1], [0, 0, 1, 1], [], []>} : vector<4x4xf32>, vector<4x64xf32>, vector<4x64xf32> -> vector<4x64xf32>
    %131 = arith.addf %127, %130 : vector<4x64xf32>
    %132 = vector.extract_strided_slice %107 {offsets = [0, 384], sizes = [4, 64], strides = [1, 1]} : vector<4x576xf32> to vector<4x64xf32>
    %133 = vector.extract_strided_slice %108 {offsets = [24, 0], sizes = [4, 4], strides = [1, 1]} : vector<36x4xf32> to vector<4x4xf32>
    %cst_58 = arith.constant dense<0.000000e+00> : vector<4x64xf32>
    %134 = tpu.matmul %133, %132, %cst_58 {dimension_numbers = #tpu.dot_dimension_numbers<[1], [0], [0], [1], [0, 0, 1, 1], [], []>} : vector<4x4xf32>, vector<4x64xf32>, vector<4x64xf32> -> vector<4x64xf32>
    %135 = arith.addf %131, %134 : vector<4x64xf32>
    %136 = vector.extract_strided_slice %107 {offsets = [0, 448], sizes = [4, 64], strides = [1, 1]} : vector<4x576xf32> to vector<4x64xf32>
    %137 = vector.extract_strided_slice %108 {offsets = [28, 0], sizes = [4, 4], strides = [1, 1]} : vector<36x4xf32> to vector<4x4xf32>
    %cst_59 = arith.constant dense<0.000000e+00> : vector<4x64xf32>
    %138 = tpu.matmul %137, %136, %cst_59 {dimension_numbers = #tpu.dot_dimension_numbers<[1], [0], [0], [1], [0, 0, 1, 1], [], []>} : vector<4x4xf32>, vector<4x64xf32>, vector<4x64xf32> -> vector<4x64xf32>
    %139 = arith.addf %135, %138 : vector<4x64xf32>
    %140 = vector.extract_strided_slice %107 {offsets = [0, 512], sizes = [4, 64], strides = [1, 1]} : vector<4x576xf32> to vector<4x64xf32>
    %141 = vector.extract_strided_slice %108 {offsets = [32, 0], sizes = [4, 4], strides = [1, 1]} : vector<36x4xf32> to vector<4x4xf32>
    %cst_60 = arith.constant dense<0.000000e+00> : vector<4x64xf32>
    %142 = tpu.matmul %141, %140, %cst_60 {dimension_numbers = #tpu.dot_dimension_numbers<[1], [0], [0], [1], [0, 0, 1, 1], [], []>} : vector<4x4xf32>, vector<4x64xf32>, vector<4x64xf32> -> vector<4x64xf32>
    %143 = arith.addf %139, %142 : vector<4x64xf32>
    %144 = vector.broadcast %104 : vector<1x64xf32> to vector<4x64xf32>
    %145 = arith.addf %143, %144 : vector<4x64xf32>
    %c0_61 = arith.constant 0 : index
    %c0_62 = arith.constant 0 : index
    %146 = vector.load %arg13[%c0_61, %c0_62] : memref<4x16xf32, #tpu.memory_space<vmem>>, vector<4x16xf32>
    %cst_63 = arith.constant dense<0.000000e+00> : vector<4x64xf32>
    %147 = tpu.matmul %146, %59, %cst_63 {dimension_numbers = #tpu.dot_dimension_numbers<[1], [0], [0], [1], [0, 0, 1, 1], [], []>} : vector<4x16xf32>, vector<16x64xf32>, vector<4x64xf32> -> vector<4x64xf32>
    %148 = arith.truncf %147 : vector<4x64xf32> to vector<4x64xbf16>
    %c0_64 = arith.constant 0 : index
    %c0_65 = arith.constant 0 : index
    %149 = vector.load %arg14[%c0_64, %c0_65] : memref<64x64xbf16, #tpu.memory_space<vmem>>, vector<64x64xbf16>
    %cst_66 = arith.constant dense<0.000000e+00> : vector<4x64xf32>
    %150 = tpu.matmul %148, %149, %cst_66 {dimension_numbers = #tpu.dot_dimension_numbers<[1], [0], [0], [1], [0, 0, 1, 1], [], []>} : vector<4x64xbf16>, vector<64x64xbf16>, vector<4x64xf32> -> vector<4x64xf32>
    %151 = arith.addf %145, %150 : vector<4x64xf32>
    %cst_67 = arith.constant 0.000000e+00 : f32
    %152 = vector.broadcast %cst_67 : f32 to vector<4x64xf32>
    %153 = arith.maximumf %151, %152 : vector<4x64xf32>
    %c0_68 = arith.constant 0 : index
    %c0_69 = arith.constant 0 : index
    %154 = vector.load %arg17[%c0_68, %c0_69] : memref<1x128xf32, #tpu.memory_space<vmem>>, vector<1x128xf32>
    %155 = arith.truncf %153 : vector<4x64xf32> to vector<4x64xbf16>
    %c0_70 = arith.constant 0 : index
    %c0_71 = arith.constant 0 : index
    %156 = vector.load %arg16[%c0_70, %c0_71] : memref<64x1152xbf16, #tpu.memory_space<vmem>>, vector<64x1152xbf16>
    %cst_72 = arith.constant dense<0.000000e+00> : vector<4x1152xf32>
    %157 = tpu.matmul %155, %156, %cst_72 {dimension_numbers = #tpu.dot_dimension_numbers<[1], [0], [0], [1], [0, 0, 1, 1], [], []>} : vector<4x64xbf16>, vector<64x1152xbf16>, vector<4x1152xf32> -> vector<4x1152xf32>
    %c0_73 = arith.constant 0 : index
    %c0_74 = arith.constant 0 : index
    %158 = vector.load %arg15[%c0_73, %c0_74] : memref<4x4xf32, #tpu.memory_space<vmem>>, vector<4x4xf32>
    %159 = vector.extract_strided_slice %157 {offsets = [0, 512], sizes = [4, 128], strides = [1, 1]} : vector<4x1152xf32> to vector<4x128xf32>
    %160 = vector.extract_strided_slice %158 {offsets = [0, 0], sizes = [1, 4], strides = [1, 1]} : vector<4x4xf32> to vector<1x4xf32>
    %cst_75 = arith.constant dense<0.000000e+00> : vector<1x128xf32>
    %161 = tpu.matmul %160, %159, %cst_75 {dimension_numbers = #tpu.dot_dimension_numbers<[1], [0], [0], [1], [0, 0, 1, 1], [], []>} : vector<1x4xf32>, vector<4x128xf32>, vector<1x128xf32> -> vector<1x128xf32>
    %162 = vector.extract_strided_slice %157 {offsets = [0, 640], sizes = [4, 128], strides = [1, 1]} : vector<4x1152xf32> to vector<4x128xf32>
    %163 = vector.extract_strided_slice %158 {offsets = [1, 0], sizes = [1, 4], strides = [1, 1]} : vector<4x4xf32> to vector<1x4xf32>
    %cst_76 = arith.constant dense<0.000000e+00> : vector<1x128xf32>
    %164 = tpu.matmul %163, %162, %cst_76 {dimension_numbers = #tpu.dot_dimension_numbers<[1], [0], [0], [1], [0, 0, 1, 1], [], []>} : vector<1x4xf32>, vector<4x128xf32>, vector<1x128xf32> -> vector<1x128xf32>
    %165 = arith.addf %161, %164 : vector<1x128xf32>
    %166 = vector.extract_strided_slice %157 {offsets = [0, 896], sizes = [4, 128], strides = [1, 1]} : vector<4x1152xf32> to vector<4x128xf32>
    %167 = vector.extract_strided_slice %158 {offsets = [2, 0], sizes = [1, 4], strides = [1, 1]} : vector<4x4xf32> to vector<1x4xf32>
    %cst_77 = arith.constant dense<0.000000e+00> : vector<1x128xf32>
    %168 = tpu.matmul %167, %166, %cst_77 {dimension_numbers = #tpu.dot_dimension_numbers<[1], [0], [0], [1], [0, 0, 1, 1], [], []>} : vector<1x4xf32>, vector<4x128xf32>, vector<1x128xf32> -> vector<1x128xf32>
    %169 = arith.addf %165, %168 : vector<1x128xf32>
    %170 = vector.extract_strided_slice %157 {offsets = [0, 1024], sizes = [4, 128], strides = [1, 1]} : vector<4x1152xf32> to vector<4x128xf32>
    %171 = vector.extract_strided_slice %158 {offsets = [3, 0], sizes = [1, 4], strides = [1, 1]} : vector<4x4xf32> to vector<1x4xf32>
    %cst_78 = arith.constant dense<0.000000e+00> : vector<1x128xf32>
    %172 = tpu.matmul %171, %170, %cst_78 {dimension_numbers = #tpu.dot_dimension_numbers<[1], [0], [0], [1], [0, 0, 1, 1], [], []>} : vector<1x4xf32>, vector<4x128xf32>, vector<1x128xf32> -> vector<1x128xf32>
    %173 = arith.addf %169, %172 : vector<1x128xf32>
    %174 = arith.addf %173, %154 : vector<1x128xf32>
    %cst_79 = arith.constant 0.000000e+00 : f32
    %175 = vector.broadcast %cst_79 : f32 to vector<1x128xf32>
    %176 = arith.maximumf %174, %175 : vector<1x128xf32>
    %c0_80 = arith.constant 0 : index
    %c0_81 = arith.constant 0 : index
    %177 = vector.load %arg19[%c0_80, %c0_81] : memref<1x128xf32, #tpu.memory_space<vmem>>, vector<1x128xf32>
    %178 = arith.truncf %176 : vector<1x128xf32> to vector<1x128xbf16>
    %c0_82 = arith.constant 0 : index
    %c0_83 = arith.constant 0 : index
    %179 = vector.load %arg18[%c0_82, %c0_83] : memref<128x1152xbf16, #tpu.memory_space<vmem>>, vector<128x1152xbf16>
    %cst_84 = arith.constant dense<0.000000e+00> : vector<1x1152xf32>
    %180 = tpu.matmul %178, %179, %cst_84 {dimension_numbers = #tpu.dot_dimension_numbers<[1], [0], [0], [1], [0, 0, 1, 1], [], []>} : vector<1x128xbf16>, vector<128x1152xbf16>, vector<1x1152xf32> -> vector<1x1152xf32>
    %181 = vector.extract_strided_slice %180 {offsets = [0, 512], sizes = [1, 128], strides = [1, 1]} : vector<1x1152xf32> to vector<1x128xf32>
    %182 = arith.addf %181, %177 : vector<1x128xf32>
    %c0_85 = arith.constant 0 : index
    %c0_86 = arith.constant 0 : index
    %183 = vector.load %arg20[%c0_85, %c0_86] : memref<1x4xf32, #tpu.memory_space<vmem>>, vector<1x4xf32>
    %cst_87 = arith.constant dense<0.000000e+00> : vector<1x64xf32>
    %184 = tpu.matmul %183, %153, %cst_87 {dimension_numbers = #tpu.dot_dimension_numbers<[1], [0], [0], [1], [0, 0, 1, 1], [], []>} : vector<1x4xf32>, vector<4x64xf32>, vector<1x64xf32> -> vector<1x64xf32>
    %185 = arith.truncf %184 : vector<1x64xf32> to vector<1x64xbf16>
    %c0_88 = arith.constant 0 : index
    %c0_89 = arith.constant 0 : index
    %186 = vector.load %arg21[%c0_88, %c0_89] : memref<64x128xbf16, #tpu.memory_space<vmem>>, vector<64x128xbf16>
    %cst_90 = arith.constant dense<0.000000e+00> : vector<1x128xf32>
    %187 = tpu.matmul %185, %186, %cst_90 {dimension_numbers = #tpu.dot_dimension_numbers<[1], [0], [0], [1], [0, 0, 1, 1], [], []>} : vector<1x64xbf16>, vector<64x128xbf16>, vector<1x128xf32> -> vector<1x128xf32>
    %188 = arith.addf %182, %187 : vector<1x128xf32>
    %cst_91 = arith.constant 0.000000e+00 : f32
    %189 = vector.broadcast %cst_91 : f32 to vector<1x128xf32>
    %190 = arith.maximumf %188, %189 : vector<1x128xf32>
    %c0_92 = arith.constant 0 : index
    %c0_93 = arith.constant 0 : index
    %191 = vector.load %arg23[%c0_92, %c0_93] : memref<1x256xf32, #tpu.memory_space<vmem>>, vector<1x256xf32>
    %192 = arith.truncf %190 : vector<1x128xf32> to vector<1x128xbf16>
    %c0_94 = arith.constant 0 : index
    %c0_95 = arith.constant 0 : index
    %193 = vector.load %arg22[%c0_94, %c0_95] : memref<128x2304xbf16, #tpu.memory_space<vmem>>, vector<128x2304xbf16>
    %cst_96 = arith.constant dense<0.000000e+00> : vector<1x2304xf32>
    %194 = tpu.matmul %192, %193, %cst_96 {dimension_numbers = #tpu.dot_dimension_numbers<[1], [0], [0], [1], [0, 0, 1, 1], [], []>} : vector<1x128xbf16>, vector<128x2304xbf16>, vector<1x2304xf32> -> vector<1x2304xf32>
    %195 = vector.extract_strided_slice %194 {offsets = [0, 1024], sizes = [1, 256], strides = [1, 1]} : vector<1x2304xf32> to vector<1x256xf32>
    %196 = arith.addf %195, %191 : vector<1x256xf32>
    %cst_97 = arith.constant 0.000000e+00 : f32
    %197 = vector.broadcast %cst_97 : f32 to vector<1x256xf32>
    %198 = arith.maximumf %196, %197 : vector<1x256xf32>
    %c0_98 = arith.constant 0 : index
    %c0_99 = arith.constant 0 : index
    %199 = vector.load %arg25[%c0_98, %c0_99] : memref<1x256xf32, #tpu.memory_space<vmem>>, vector<1x256xf32>
    %200 = arith.truncf %198 : vector<1x256xf32> to vector<1x256xbf16>
    %c0_100 = arith.constant 0 : index
    %c0_101 = arith.constant 0 : index
    %201 = vector.load %arg24[%c0_100, %c0_101] : memref<256x2304xbf16, #tpu.memory_space<vmem>>, vector<256x2304xbf16>
    %cst_102 = arith.constant dense<0.000000e+00> : vector<1x2304xf32>
    %202 = tpu.matmul %200, %201, %cst_102 {dimension_numbers = #tpu.dot_dimension_numbers<[1], [0], [0], [1], [0, 0, 1, 1], [], []>} : vector<1x256xbf16>, vector<256x2304xbf16>, vector<1x2304xf32> -> vector<1x2304xf32>
    %203 = vector.extract_strided_slice %202 {offsets = [0, 1024], sizes = [1, 256], strides = [1, 1]} : vector<1x2304xf32> to vector<1x256xf32>
    %204 = arith.addf %203, %199 : vector<1x256xf32>
    %205 = arith.truncf %190 : vector<1x128xf32> to vector<1x128xbf16>
    %c0_103 = arith.constant 0 : index
    %c0_104 = arith.constant 0 : index
    %206 = vector.load %arg26[%c0_103, %c0_104] : memref<128x256xbf16, #tpu.memory_space<vmem>>, vector<128x256xbf16>
    %cst_105 = arith.constant dense<0.000000e+00> : vector<1x256xf32>
    %207 = tpu.matmul %205, %206, %cst_105 {dimension_numbers = #tpu.dot_dimension_numbers<[1], [0], [0], [1], [0, 0, 1, 1], [], []>} : vector<1x128xbf16>, vector<128x256xbf16>, vector<1x256xf32> -> vector<1x256xf32>
    %208 = arith.addf %204, %207 : vector<1x256xf32>
    %cst_106 = arith.constant 0.000000e+00 : f32
    %209 = vector.broadcast %cst_106 : f32 to vector<1x256xf32>
    %210 = arith.maximumf %208, %209 : vector<1x256xf32>
    %cst_107 = arith.constant dense<0.000000e+00> : vector<256xf32>
    %211 = vector.multi_reduction <add>, %210, %cst_107 [0] : vector<1x256xf32> to vector<256xf32>
    %212 = vector.shape_cast %211 : vector<256xf32> to vector<1x256xf32>
    %cst_108 = arith.constant 1.000000e+00 : f32
    %213 = vector.broadcast %cst_108 : f32 to vector<1x256xf32>
    %214 = arith.divf %212, %213 : vector<1x256xf32>
    %c0_109 = arith.constant 0 : index
    %c0_110 = arith.constant 0 : index
    %215 = vector.load %arg27[%c0_109, %c0_110] : memref<256x128xf32, #tpu.memory_space<vmem>>, vector<256x128xf32>
    %cst_111 = arith.constant dense<0.000000e+00> : vector<1x128xf32>
    %216 = tpu.matmul %214, %215, %cst_111 {dimension_numbers = #tpu.dot_dimension_numbers<[1], [0], [0], [1], [0, 0, 1, 1], [], []>} : vector<1x256xf32>, vector<256x128xf32>, vector<1x128xf32> -> vector<1x128xf32>
    %c0_112 = arith.constant 0 : index
    %c0_113 = arith.constant 0 : index
    %217 = vector.load %arg28[%c0_112, %c0_113] : memref<1x128xf32, #tpu.memory_space<vmem>>, vector<1x128xf32>
    %218 = arith.addf %216, %217 : vector<1x128xf32>
    %219 = vector.shape_cast %218 : vector<1x128xf32> to vector<1x128xf32>
    %220 = vector.broadcast %219 : vector<1x128xf32> to vector<8x128xf32>
    %c0_114 = arith.constant 0 : index
    %c0_115 = arith.constant 0 : index
    %c0_116 = arith.constant 0 : index
    %221 = vector.load %arg29[%c0_114, %c0_115, %c0_116] : memref<1x8x128xf32, #tpu.memory_space<vmem>>, vector<1x8x128xf32>
    %222 = vector.shape_cast %221 : vector<1x8x128xf32> to vector<8x128xf32>
    %223 = vector.shape_cast %220 : vector<8x128xf32> to vector<1x8x128xf32>
    tpu.vector_store %arg29[%c0_114, %c0_115, %c0_116], %223 {strides = array<i32>} : memref<1x8x128xf32, #tpu.memory_space<vmem>>, vector<1x8x128xf32>,
    return
  }
  func.func @transform_0(%arg0: i32) -> (i32, i32) {
    %c0_i32 = arith.constant 0 : i32
    %c0_i32_0 = arith.constant 0 : i32
    %c0_i32_1 = arith.constant 0 : i32
    return %c0_i32, %c0_i32_0 : i32, i32
  }
  func.func @transform_1(%arg0: i32) -> (i32, i32) {
    %c0_i32 = arith.constant 0 : i32
    %c0_i32_0 = arith.constant 0 : i32
    return %arg0, %c0_i32 : i32, i32
  }
  func.func @transform_2(%arg0: i32) -> (i32, i32) {
    %c0_i32 = arith.constant 0 : i32
    %c0_i32_0 = arith.constant 0 : i32
    %c0_i32_1 = arith.constant 0 : i32
    return %c0_i32, %c0_i32_0 : i32, i32
  }
  func.func @transform_3(%arg0: i32) -> (i32, i32) {
    %c0_i32 = arith.constant 0 : i32
    %c0_i32_0 = arith.constant 0 : i32
    %c0_i32_1 = arith.constant 0 : i32
    return %c0_i32, %c0_i32_0 : i32, i32
  }
  func.func @transform_4(%arg0: i32) -> (i32, i32) {
    %c0_i32 = arith.constant 0 : i32
    %c0_i32_0 = arith.constant 0 : i32
    %c0_i32_1 = arith.constant 0 : i32
    return %c0_i32, %c0_i32_0 : i32, i32
  }
  func.func @transform_5(%arg0: i32) -> (i32, i32) {
    %c0_i32 = arith.constant 0 : i32
    %c0_i32_0 = arith.constant 0 : i32
    %c0_i32_1 = arith.constant 0 : i32
    return %c0_i32, %c0_i32_0 : i32, i32
  }
  func.func @transform_6(%arg0: i32) -> (i32, i32) {
    %c0_i32 = arith.constant 0 : i32
    %c0_i32_0 = arith.constant 0 : i32
    %c0_i32_1 = arith.constant 0 : i32
    return %c0_i32, %c0_i32_0 : i32, i32
  }
  func.func @transform_7(%arg0: i32) -> (i32, i32) {
    %c0_i32 = arith.constant 0 : i32
    %c0_i32_0 = arith.constant 0 : i32
    %c0_i32_1 = arith.constant 0 : i32
    return %c0_i32, %c0_i32_0 : i32, i32
  }
  func.func @transform_8(%arg0: i32) -> (i32, i32) {
    %c0_i32 = arith.constant 0 : i32
    %c0_i32_0 = arith.constant 0 : i32
    %c0_i32_1 = arith.constant 0 : i32
    return %c0_i32, %c0_i32_0 : i32, i32
  }
  func.func @transform_9(%arg0: i32) -> (i32, i32) {
    %c0_i32 = arith.constant 0 : i32
    %c0_i32_0 = arith.constant 0 : i32
    %c0_i32_1 = arith.constant 0 : i32
    return %c0_i32, %c0_i32_0 : i32, i32
  }
  func.func @transform_10(%arg0: i32) -> (i32, i32) {
    %c0_i32 = arith.constant 0 : i32
    %c0_i32_0 = arith.constant 0 : i32
    %c0_i32_1 = arith.constant 0 : i32
    return %c0_i32, %c0_i32_0 : i32, i32
  }
  func.func @transform_11(%arg0: i32) -> (i32, i32) {
    %c0_i32 = arith.constant 0 : i32
    %c0_i32_0 = arith.constant 0 : i32
    %c0_i32_1 = arith.constant 0 : i32
    return %c0_i32, %c0_i32_0 : i32, i32
  }
  func.func @transform_12(%arg0: i32) -> (i32, i32) {
    %c0_i32 = arith.constant 0 : i32
    %c0_i32_0 = arith.constant 0 : i32
    %c0_i32_1 = arith.constant 0 : i32
    return %c0_i32, %c0_i32_0 : i32, i32
  }
  func.func @transform_13(%arg0: i32) -> (i32, i32) {
    %c0_i32 = arith.constant 0 : i32
    %c0_i32_0 = arith.constant 0 : i32
    %c0_i32_1 = arith.constant 0 : i32
    return %c0_i32, %c0_i32_0 : i32, i32
  }
  func.func @transform_14(%arg0: i32) -> (i32, i32) {
    %c0_i32 = arith.constant 0 : i32
    %c0_i32_0 = arith.constant 0 : i32
    %c0_i32_1 = arith.constant 0 : i32
    return %c0_i32, %c0_i32_0 : i32, i32
  }
  func.func @transform_15(%arg0: i32) -> (i32, i32) {
    %c0_i32 = arith.constant 0 : i32
    %c0_i32_0 = arith.constant 0 : i32
    %c0_i32_1 = arith.constant 0 : i32
    return %c0_i32, %c0_i32_0 : i32, i32
  }
  func.func @transform_16(%arg0: i32) -> (i32, i32) {
    %c0_i32 = arith.constant 0 : i32
    %c0_i32_0 = arith.constant 0 : i32
    %c0_i32_1 = arith.constant 0 : i32
    return %c0_i32, %c0_i32_0 : i32, i32
  }
  func.func @transform_17(%arg0: i32) -> (i32, i32) {
    %c0_i32 = arith.constant 0 : i32
    %c0_i32_0 = arith.constant 0 : i32
    %c0_i32_1 = arith.constant 0 : i32
    return %c0_i32, %c0_i32_0 : i32, i32
  }
  func.func @transform_18(%arg0: i32) -> (i32, i32) {
    %c0_i32 = arith.constant 0 : i32
    %c0_i32_0 = arith.constant 0 : i32
    %c0_i32_1 = arith.constant 0 : i32
    return %c0_i32, %c0_i32_0 : i32, i32
  }
  func.func @transform_19(%arg0: i32) -> (i32, i32) {
    %c0_i32 = arith.constant 0 : i32
    %c0_i32_0 = arith.constant 0 : i32
    %c0_i32_1 = arith.constant 0 : i32
    return %c0_i32, %c0_i32_0 : i32, i32
  }
  func.func @transform_20(%arg0: i32) -> (i32, i32) {
    %c0_i32 = arith.constant 0 : i32
    %c0_i32_0 = arith.constant 0 : i32
    %c0_i32_1 = arith.constant 0 : i32
    return %c0_i32, %c0_i32_0 : i32, i32
  }
  func.func @transform_21(%arg0: i32) -> (i32, i32) {
    %c0_i32 = arith.constant 0 : i32
    %c0_i32_0 = arith.constant 0 : i32
    %c0_i32_1 = arith.constant 0 : i32
    return %c0_i32, %c0_i32_0 : i32, i32
  }
  func.func @transform_22(%arg0: i32) -> (i32, i32) {
    %c0_i32 = arith.constant 0 : i32
    %c0_i32_0 = arith.constant 0 : i32
    %c0_i32_1 = arith.constant 0 : i32
    return %c0_i32, %c0_i32_0 : i32, i32
  }
  func.func @transform_23(%arg0: i32) -> (i32, i32) {
    %c0_i32 = arith.constant 0 : i32
    %c0_i32_0 = arith.constant 0 : i32
    %c0_i32_1 = arith.constant 0 : i32
    return %c0_i32, %c0_i32_0 : i32, i32
  }
  func.func @transform_24(%arg0: i32) -> (i32, i32) {
    %c0_i32 = arith.constant 0 : i32
    %c0_i32_0 = arith.constant 0 : i32
    %c0_i32_1 = arith.constant 0 : i32
    return %c0_i32, %c0_i32_0 : i32, i32
  }
  func.func @transform_25(%arg0: i32) -> (i32, i32) {
    %c0_i32 = arith.constant 0 : i32
    %c0_i32_0 = arith.constant 0 : i32
    %c0_i32_1 = arith.constant 0 : i32
    return %c0_i32, %c0_i32_0 : i32, i32
  }
  func.func @transform_26(%arg0: i32) -> (i32, i32) {
    %c0_i32 = arith.constant 0 : i32
    %c0_i32_0 = arith.constant 0 : i32
    %c0_i32_1 = arith.constant 0 : i32
    return %c0_i32, %c0_i32_0 : i32, i32
  }
  func.func @transform_27(%arg0: i32) -> (i32, i32) {
    %c0_i32 = arith.constant 0 : i32
    %c0_i32_0 = arith.constant 0 : i32
    %c0_i32_1 = arith.constant 0 : i32
    return %c0_i32, %c0_i32_0 : i32, i32
  }
  func.func @transform_28(%arg0: i32) -> (i32, i32, i32) {
    %c0_i32 = arith.constant 0 : i32
    %c0_i32_0 = arith.constant 0 : i32
    %c0_i32_1 = arith.constant 0 : i32
    return %arg0, %c0_i32, %c0_i32_0 : i32, i32, i32
  }
}

</mosaic_0001>

<llo_original>
// kernel: resnet_forward.1
$region0: #{resnet_forward.1}
  #allocation0 [shape = 'u32[]', space=smem, size = 0x4, offset = 0x4, fixed_abs, tag = 'smem constant byte address 0x4 - core index']
  #allocation1 [shape = 'u32[72,128]{1,0:T(1,128)}', space=vmem, size = 0x9000, scoped, tag = 'internal scratch']
  %s0 = inlined_call_operand.vmem [shape: f32[8,128], index: 0, kind: input, shape index: {}]
  %s1 = inlined_call_operand.vmem [shape: bf16[128,98], index: 1, kind: input, shape index: {}]
  %s2 = inlined_call_operand.vmem [shape: bf16[64,98], index: 2, kind: input, shape index: {}]
  %s3 = inlined_call_operand.vmem [shape: bf16[98,64], index: 3, kind: input, shape index: {}]
  %s4 = inlined_call_operand.vmem [shape: f32[1,64], index: 4, kind: input, shape index: {}]
  %s5 = inlined_call_operand.vmem [shape: f32[144,64], index: 5, kind: input, shape index: {}]
  %s6 = inlined_call_operand.vmem [shape: f32[36,16], index: 6, kind: input, shape index: {}]
  %s7 = inlined_call_operand.vmem [shape: bf16[64,576], index: 7, kind: input, shape index: {}]
  %s8 = inlined_call_operand.vmem [shape: f32[1,64], index: 8, kind: input, shape index: {}]
  %s9 = inlined_call_operand.vmem [shape: f32[36,4], index: 9, kind: input, shape index: {}]
  %s10 = inlined_call_operand.vmem [shape: bf16[64,576], index: 10, kind: input, shape index: {}]
  %s11 = inlined_call_operand.vmem [shape: f32[1,64], index: 11, kind: input, shape index: {}]
  %s12 = inlined_call_operand.vmem [shape: f32[4,16], index: 12, kind: input, shape index: {}]
  %s13 = inlined_call_operand.vmem [shape: bf16[64,64], index: 13, kind: input, shape index: {}]
  %s14 = inlined_call_operand.vmem [shape: f32[4,4], index: 14, kind: input, shape index: {}]
  %s15 = inlined_call_operand.vmem [shape: bf16[64,1152], index: 15, kind: input, shape index: {}]
  %s16 = inlined_call_operand.vmem [shape: f32[1,128], index: 16, kind: input, shape index: {}]
  %s17 = inlined_call_operand.vmem [shape: bf16[128,1152], index: 17, kind: input, shape index: {}]
  %s18 = inlined_call_operand.vmem [shape: f32[1,128], index: 18, kind: input, shape index: {}]
  %s19 = inlined_call_operand.vmem [shape: f32[1,4], index: 19, kind: input, shape index: {}]
  %s20 = inlined_call_operand.vmem [shape: bf16[64,128], index: 20, kind: input, shape index: {}]
  %s21 = inlined_call_operand.vmem [shape: bf16[128,2304], index: 21, kind: input, shape index: {}]
  %s22 = inlined_call_operand.vmem [shape: f32[1,256], index: 22, kind: input, shape index: {}]
  %s23 = inlined_call_operand.vmem [shape: bf16[256,2304], index: 23, kind: input, shape index: {}]
  %s24 = inlined_call_operand.vmem [shape: f32[1,256], index: 24, kind: input, shape index: {}]
  %s25 = inlined_call_operand.vmem [shape: bf16[128,256], index: 25, kind: input, shape index: {}]
  %s26 = inlined_call_operand.vmem [shape: f32[256,128], index: 26, kind: input, shape index: {}]
  %s27 = inlined_call_operand.vmem [shape: f32[1,128], index: 27, kind: input, shape index: {}]
  %s28 = inlined_call_operand.vmem [shape: f32[2,8,128], index: 28, kind: output, shape index: {}]
  %s29 = sld [smem:[#allocation0]]
  $region145: #{resnet_forward.1} parent=0
    _
  %s31 = ssub.s32 1, %s29
  %s32 = scalar_select 0, %s31, %s29
  loop: start=0, step=1, limit=4
  $region2: #{resnet_forward.1} parent=0 // loop_pre_header
    _
  $region3: #{resnet_forward.1} parent=0 // loop_header
    %s34 = sphi 0, %s38
    %p35 = scmp.ge.s32.totalorder %s34, 4
    %s42 = sphi 0, %s42
    %s44 = sphi 0, %s42
    %s45 = sphi 0, %s44
    %s59 = sphi 0, %s45
    %s65 = sphi 0, %s67
    %s68 = sphi 0, %s65
    %s69 = sphi 0, %s68
    %s85 = sphi 0, %s69
    %s89 = sphi 0, %s89
    %s91 = sphi 0, %s89
    %s92 = sphi 0, %s91
    %s106 = sphi 0, %s92
    %s110 = sphi 0, %s110
    %s112 = sphi 0, %s110
    %s113 = sphi 0, %s112
    %s127 = sphi 0, %s113
    %s131 = sphi 0, %s131
    %s133 = sphi 0, %s131
    %s134 = sphi 0, %s133
    %s148 = sphi 0, %s134
    %s152 = sphi 0, %s152
    %s154 = sphi 0, %s152
    %s155 = sphi 0, %s154
    %s169 = sphi 0, %s155
    %s173 = sphi 0, %s173
    %s175 = sphi 0, %s173
    %s176 = sphi 0, %s175
    %s190 = sphi 0, %s176
    %s194 = sphi 0, %s194
    %s196 = sphi 0, %s194
    %s197 = sphi 0, %s196
    %s211 = sphi 0, %s197
    %s215 = sphi 0, %s215
    %s217 = sphi 0, %s215
    %s218 = sphi 0, %s217
    %s232 = sphi 0, %s218
    %s236 = sphi 0, %s236
    %s238 = sphi 0, %s236
    %s239 = sphi 0, %s238
    %s253 = sphi 0, %s239
    %s257 = sphi 0, %s257
    %s259 = sphi 0, %s257
    %s260 = sphi 0, %s259
    %s274 = sphi 0, %s260
    %s278 = sphi 0, %s278
    %s280 = sphi 0, %s278
    %s281 = sphi 0, %s280
    %s295 = sphi 0, %s281
    %s299 = sphi 0, %s299
    %s301 = sphi 0, %s299
    %s302 = sphi 0, %s301
    %s316 = sphi 0, %s302
    %s320 = sphi 0, %s320
    %s322 = sphi 0, %s320
    %s323 = sphi 0, %s322
    %s337 = sphi 0, %s323
    %s341 = sphi 0, %s341
    %s343 = sphi 0, %s341
    %s344 = sphi 0, %s343
    %s358 = sphi 0, %s344
    %s362 = sphi 0, %s362
    %s364 = sphi 0, %s362
    %s365 = sphi 0, %s364
    %s379 = sphi 0, %s365
    %s383 = sphi 0, %s383
    %s385 = sphi 0, %s383
    %s386 = sphi 0, %s385
    %s400 = sphi 0, %s386
    %s404 = sphi 0, %s404
    %s406 = sphi 0, %s404
    %s407 = sphi 0, %s406
    %s421 = sphi 0, %s407
    %s425 = sphi 0, %s425
    %s427 = sphi 0, %s425
    %s428 = sphi 0, %s427
    %s442 = sphi 0, %s428
    %s446 = sphi 0, %s446
    %s448 = sphi 0, %s446
    %s449 = sphi 0, %s448
    %s463 = sphi 0, %s449
    %s467 = sphi 0, %s467
    %s469 = sphi 0, %s467
    %s470 = sphi 0, %s469
    %s484 = sphi 0, %s470
    %s488 = sphi 0, %s488
    %s490 = sphi 0, %s488
    %s491 = sphi 0, %s490
    %s505 = sphi 0, %s491
    %s509 = sphi 0, %s509
    %s511 = sphi 0, %s509
    %s512 = sphi 0, %s511
    %s526 = sphi 0, %s512
    %s530 = sphi 0, %s530
    %s532 = sphi 0, %s530
    %s533 = sphi 0, %s532
    %s547 = sphi 0, %s533
    %s551 = sphi 0, %s551
    %s553 = sphi 0, %s551
    %s554 = sphi 0, %s553
    %s568 = sphi 0, %s554
    %s572 = sphi 0, %s572
    %s574 = sphi 0, %s572
    %s575 = sphi 0, %s574
    %s589 = sphi 0, %s575
    %s593 = sphi 0, %s593
    %s595 = sphi 0, %s593
    %s596 = sphi 0, %s595
    %s610 = sphi 0, %s596
    %s614 = sphi 0, %s614
    %s616 = sphi 0, %s614
    %s617 = sphi 0, %s616
    %s631 = sphi 0, %s617
    %s637 = sphi 0, %s639
    %s640 = sphi 0, %s637
    %s641 = sphi 0, %s640
    %s657 = sphi 0, %s641
  $region4: #{resnet_forward.1} parent=0 // loop_header_branch
    %37 = sbr.rel (%p35) target = $region8
  $region5: #{resnet_forward.1} parent=0 // loop_body
    %s39 = ssub.s32 %s34, 1
    %s40 = ssub.s32 %s34, 2
    %s41 = sadd.s32 %s34, 1
    %s43 = sadd.s32 %s42, 1
    %p46 = scmp.eq.s32.totalorder %s34, 1
    %p47 = scmp.ne.s32.totalorder %s42, %s44
    %p48 = scmp.eq.s32.totalorder %s34, 0
    %p49 = por %p47, %p48
    %p50 = scmp.ne.s32.totalorder %s42, %s44
    %p51 = scmp.eq.s32.totalorder %s39, 1
    %p52 = por %p50, %p51
    %p53 = scmp.ne.s32.totalorder %s44, %s45
    %p54 = scmp.eq.s32.totalorder %s39, 0
    %p55 = por %p53, %p54
    %p56 = scmp.ne.s32.totalorder %s44, %s45
    %p57 = scmp.eq.s32.totalorder %s40, 1
    %p58 = por %p56, %p57
    %p60 = scmp.ne.s32.totalorder %s45, %s59
    %p61 = scmp.eq.s32.totalorder %s40, 0
    %p62 = por %p60, %p61
    %s63 = ssub.s32 %s34, %s41
    %p64 = scmp.eq.s32.totalorder %s63, 0
    %s66 = sadd.s32 %s65, 1
    %s67 = scalar_select %p64, %s65, %s66
    %p70 = pneg %p64
    %p71 = scmp.eq.s32.totalorder %s34, 1
    %p72 = por %p70, %p71
    %p73 = scmp.ne.s32.totalorder %s65, %s68
    %p74 = scmp.eq.s32.totalorder %s34, 0
    %p75 = por %p73, %p74
    %p76 = scmp.ne.s32.totalorder %s65, %s68
    %p77 = scmp.eq.s32.totalorder %s39, 1
    %p78 = por %p76, %p77
    %p79 = scmp.ne.s32.totalorder %s68, %s69
    %p80 = scmp.eq.s32.totalorder %s39, 0
    %p81 = por %p79, %p80
    %p82 = scmp.ne.s32.totalorder %s68, %s69
    %p83 = scmp.eq.s32.totalorder %s40, 1
    %p84 = por %p82, %p83
    %p86 = scmp.ne.s32.totalorder %s69, %s85
    %p87 = scmp.eq.s32.totalorder %s40, 0
    %p88 = por %p86, %p87
    %s90 = sadd.s32 %s89, 1
    %p93 = scmp.eq.s32.totalorder %s34, 1
    %p94 = scmp.ne.s32.totalorder %s89, %s91
    %p95 = scmp.eq.s32.totalorder %s34, 0
    %p96 = por %p94, %p95
    %p97 = scmp.ne.s32.totalorder %s89, %s91
    %p98 = scmp.eq.s32.totalorder %s39, 1
    %p99 = por %p97, %p98
    %p100 = scmp.ne.s32.totalorder %s91, %s92
    %p101 = scmp.eq.s32.totalorder %s39, 0
    %p102 = por %p100, %p101
    %p103 = scmp.ne.s32.totalorder %s91, %s92
    %p104 = scmp.eq.s32.totalorder %s40, 1
    %p105 = por %p103, %p104
    %p107 = scmp.ne.s32.totalorder %s92, %s106
    %p108 = scmp.eq.s32.totalorder %s40, 0
    %p109 = por %p107, %p108
    %s111 = sadd.s32 %s110, 1
    %p114 = scmp.eq.s32.totalorder %s34, 1
    %p115 = scmp.ne.s32.totalorder %s110, %s112
    %p116 = scmp.eq.s32.totalorder %s34, 0
    %p117 = por %p115, %p116
    %p118 = scmp.ne.s32.totalorder %s110, %s112
    %p119 = scmp.eq.s32.totalorder %s39, 1
    %p120 = por %p118, %p119
    %p121 = scmp.ne.s32.totalorder %s112, %s113
    %p122 = scmp.eq.s32.totalorder %s39, 0
    %p123 = por %p121, %p122
    %p124 = scmp.ne.s32.totalorder %s112, %s113
    %p125 = scmp.eq.s32.totalorder %s40, 1
    %p126 = por %p124, %p125
    %p128 = scmp.ne.s32.totalorder %s113, %s127
    %p129 = scmp.eq.s32.totalorder %s40, 0
    %p130 = por %p128, %p129
    %s132 = sadd.s32 %s131, 1
    %p135 = scmp.eq.s32.totalorder %s34, 1
    %p136 = scmp.ne.s32.totalorder %s131, %s133
    %p137 = scmp.eq.s32.totalorder %s34, 0
    %p138 = por %p136, %p137
    %p139 = scmp.ne.s32.totalorder %s131, %s133
    %p140 = scmp.eq.s32.totalorder %s39, 1
    %p141 = por %p139, %p140
    %p142 = scmp.ne.s32.totalorder %s133, %s134
    %p143 = scmp.eq.s32.totalorder %s39, 0
    %p144 = por %p142, %p143
    %p145 = scmp.ne.s32.totalorder %s133, %s134
    %p146 = scmp.eq.s32.totalorder %s40, 1
    %p147 = por %p145, %p146
    %p149 = scmp.ne.s32.totalorder %s134, %s148
    %p150 = scmp.eq.s32.totalorder %s40, 0
    %p151 = por %p149, %p150
    %s153 = sadd.s32 %s152, 1
    %p156 = scmp.eq.s32.totalorder %s34, 1
    %p157 = scmp.ne.s32.totalorder %s152, %s154
    %p158 = scmp.eq.s32.totalorder %s34, 0
    %p159 = por %p157, %p158
    %p160 = scmp.ne.s32.totalorder %s152, %s154
    %p161 = scmp.eq.s32.totalorder %s39, 1
    %p162 = por %p160, %p161
    %p163 = scmp.ne.s32.totalorder %s154, %s155
    %p164 = scmp.eq.s32.totalorder %s39, 0
    %p165 = por %p163, %p164
    %p166 = scmp.ne.s32.totalorder %s154, %s155
    %p167 = scmp.eq.s32.totalorder %s40, 1
    %p168 = por %p166, %p167
    %p170 = scmp.ne.s32.totalorder %s155, %s169
    %p171 = scmp.eq.s32.totalorder %s40, 0
    %p172 = por %p170, %p171
    %s174 = sadd.s32 %s173, 1
    %p177 = scmp.eq.s32.totalorder %s34, 1
    %p178 = scmp.ne.s32.totalorder %s173, %s175
    %p179 = scmp.eq.s32.totalorder %s34, 0
    %p180 = por %p178, %p179
    %p181 = scmp.ne.s32.totalorder %s173, %s175
    %p182 = scmp.eq.s32.totalorder %s39, 1
    %p183 = por %p181, %p182
    %p184 = scmp.ne.s32.totalorder %s175, %s176
    %p185 = scmp.eq.s32.totalorder %s39, 0
    %p186 = por %p184, %p185
    %p187 = scmp.ne.s32.totalorder %s175, %s176
    %p188 = scmp.eq.s32.totalorder %s40, 1
    %p189 = por %p187, %p188
    %p191 = scmp.ne.s32.totalorder %s176, %s190
    %p192 = scmp.eq.s32.totalorder %s40, 0
    %p193 = por %p191, %p192
    %s195 = sadd.s32 %s194, 1
    %p198 = scmp.eq.s32.totalorder %s34, 1
    %p199 = scmp.ne.s32.totalorder %s194, %s196
    %p200 = scmp.eq.s32.totalorder %s34, 0
    %p201 = por %p199, %p200
    %p202 = scmp.ne.s32.totalorder %s194, %s196
    %p203 = scmp.eq.s32.totalorder %s39, 1
    %p204 = por %p202, %p203
    %p205 = scmp.ne.s32.totalorder %s196, %s197
    %p206 = scmp.eq.s32.totalorder %s39, 0
    %p207 = por %p205, %p206
    %p208 = scmp.ne.s32.totalorder %s196, %s197
    %p209 = scmp.eq.s32.totalorder %s40, 1
    %p210 = por %p208, %p209
    %p212 = scmp.ne.s32.totalorder %s197, %s211
    %p213 = scmp.eq.s32.totalorder %s40, 0
    %p214 = por %p212, %p213
    %s216 = sadd.s32 %s215, 1
    %p219 = scmp.eq.s32.totalorder %s34, 1
    %p220 = scmp.ne.s32.totalorder %s215, %s217
    %p221 = scmp.eq.s32.totalorder %s34, 0
    %p222 = por %p220, %p221
    %p223 = scmp.ne.s32.totalorder %s215, %s217
    %p224 = scmp.eq.s32.totalorder %s39, 1
    %p225 = por %p223, %p224
    %p226 = scmp.ne.s32.totalorder %s217, %s218
    %p227 = scmp.eq.s32.totalorder %s39, 0
    %p228 = por %p226, %p227
    %p229 = scmp.ne.s32.totalorder %s217, %s218
    %p230 = scmp.eq.s32.totalorder %s40, 1
    %p231 = por %p229, %p230
    %p233 = scmp.ne.s32.totalorder %s218, %s232
    %p234 = scmp.eq.s32.totalorder %s40, 0
    %p235 = por %p233, %p234
    %s237 = sadd.s32 %s236, 1
    %p240 = scmp.eq.s32.totalorder %s34, 1
    %p241 = scmp.ne.s32.totalorder %s236, %s238
    %p242 = scmp.eq.s32.totalorder %s34, 0
    %p243 = por %p241, %p242
    %p244 = scmp.ne.s32.totalorder %s236, %s238
    %p245 = scmp.eq.s32.totalorder %s39, 1
    %p246 = por %p244, %p245
    %p247 = scmp.ne.s32.totalorder %s238, %s239
    %p248 = scmp.eq.s32.totalorder %s39, 0
    %p249 = por %p247, %p248
    %p250 = scmp.ne.s32.totalorder %s238, %s239
    %p251 = scmp.eq.s32.totalorder %s40, 1
    %p252 = por %p250, %p251
    %p254 = scmp.ne.s32.totalorder %s239, %s253
    %p255 = scmp.eq.s32.totalorder %s40, 0
    %p256 = por %p254, %p255
    %s258 = sadd.s32 %s257, 1
    %p261 = scmp.eq.s32.totalorder %s34, 1
    %p262 = scmp.ne.s32.totalorder %s257, %s259
    %p263 = scmp.eq.s32.totalorder %s34, 0
    %p264 = por %p262, %p263
    %p265 = scmp.ne.s32.totalorder %s257, %s259
    %p266 = scmp.eq.s32.totalorder %s39, 1
    %p267 = por %p265, %p266
    %p268 = scmp.ne.s32.totalorder %s259, %s260
    %p269 = scmp.eq.s32.totalorder %s39, 0
    %p270 = por %p268, %p269
    %p271 = scmp.ne.s32.totalorder %s259, %s260
    %p272 = scmp.eq.s32.totalorder %s40, 1
    %p273 = por %p271, %p272
    %p275 = scmp.ne.s32.totalorder %s260, %s274
    %p276 = scmp.eq.s32.totalorder %s40, 0
    %p277 = por %p275, %p276
    %s279 = sadd.s32 %s278, 1
    %p282 = scmp.eq.s32.totalorder %s34, 1
    %p283 = scmp.ne.s32.totalorder %s278, %s280
    %p284 = scmp.eq.s32.totalorder %s34, 0
    %p285 = por %p283, %p284
    %p286 = scmp.ne.s32.totalorder %s278, %s280
    %p287 = scmp.eq.s32.totalorder %s39, 1
    %p288 = por %p286, %p287
    %p289 = scmp.ne.s32.totalorder %s280, %s281
    %p290 = scmp.eq.s32.totalorder %s39, 0
    %p291 = por %p289, %p290
    %p292 = scmp.ne.s32.totalorder %s280, %s281
    %p293 = scmp.eq.s32.totalorder %s40, 1
    %p294 = por %p292, %p293
    %p296 = scmp.ne.s32.totalorder %s281, %s295
    %p297 = scmp.eq.s32.totalorder %s40, 0
    %p298 = por %p296, %p297
    %s300 = sadd.s32 %s299, 1
    %p303 = scmp.eq.s32.totalorder %s34, 1
    %p304 = scmp.ne.s32.totalorder %s299, %s301
    %p305 = scmp.eq.s32.totalorder %s34, 0
    %p306 = por %p304, %p305
    %p307 = scmp.ne.s32.totalorder %s299, %s301
    %p308 = scmp.eq.s32.totalorder %s39, 1
    %p309 = por %p307, %p308
    %p310 = scmp.ne.s32.totalorder %s301, %s302
    %p311 = scmp.eq.s32.totalorder %s39, 0
    %p312 = por %p310, %p311
    %p313 = scmp.ne.s32.totalorder %s301, %s302
    %p314 = scmp.eq.s32.totalorder %s40, 1
    %p315 = por %p313, %p314
    %p317 = scmp.ne.s32.totalorder %s302, %s316
    %p318 = scmp.eq.s32.totalorder %s40, 0
    %p319 = por %p317, %p318
    %s321 = sadd.s32 %s320, 1
    %p324 = scmp.eq.s32.totalorder %s34, 1
    %p325 = scmp.ne.s32.totalorder %s320, %s322
    %p326 = scmp.eq.s32.totalorder %s34, 0
    %p327 = por %p325, %p326
    %p328 = scmp.ne.s32.totalorder %s320, %s322
    %p329 = scmp.eq.s32.totalorder %s39, 1
    %p330 = por %p328, %p329
    %p331 = scmp.ne.s32.totalorder %s322, %s323
    %p332 = scmp.eq.s32.totalorder %s39, 0
    %p333 = por %p331, %p332
    %p334 = scmp.ne.s32.totalorder %s322, %s323
    %p335 = scmp.eq.s32.totalorder %s40, 1
    %p336 = por %p334, %p335
    %p338 = scmp.ne.s32.totalorder %s323, %s337
    %p339 = scmp.eq.s32.totalorder %s40, 0
    %p340 = por %p338, %p339
    %s342 = sadd.s32 %s341, 1
    %p345 = scmp.eq.s32.totalorder %s34, 1
    %p346 = scmp.ne.s32.totalorder %s341, %s343
    %p347 = scmp.eq.s32.totalorder %s34, 0
    %p348 = por %p346, %p347
    %p349 = scmp.ne.s32.totalorder %s341, %s343
    %p350 = scmp.eq.s32.totalorder %s39, 1
    %p351 = por %p349, %p350
    %p352 = scmp.ne.s32.totalorder %s343, %s344
    %p353 = scmp.eq.s32.totalorder %s39, 0
    %p354 = por %p352, %p353
    %p355 = scmp.ne.s32.totalorder %s343, %s344
    %p356 = scmp.eq.s32.totalorder %s40, 1
    %p357 = por %p355, %p356
    %p359 = scmp.ne.s32.totalorder %s344, %s358
    %p360 = scmp.eq.s32.totalorder %s40, 0
    %p361 = por %p359, %p360
    %s363 = sadd.s32 %s362, 1
    %p366 = scmp.eq.s32.totalorder %s34, 1
    %p367 = scmp.ne.s32.totalorder %s362, %s364
    %p368 = scmp.eq.s32.totalorder %s34, 0
    %p369 = por %p367, %p368
    %p370 = scmp.ne.s32.totalorder %s362, %s364
    %p371 = scmp.eq.s32.totalorder %s39, 1
    %p372 = por %p370, %p371
    %p373 = scmp.ne.s32.totalorder %s364, %s365
    %p374 = scmp.eq.s32.totalorder %s39, 0
    %p375 = por %p373, %p374
    %p376 = scmp.ne.s32.totalorder %s364, %s365
    %p377 = scmp.eq.s32.totalorder %s40, 1
    %p378 = por %p376, %p377
    %p380 = scmp.ne.s32.totalorder %s365, %s379
    %p381 = scmp.eq.s32.totalorder %s40, 0
    %p382 = por %p380, %p381
    %s384 = sadd.s32 %s383, 1
    %p387 = scmp.eq.s32.totalorder %s34, 1
    %p388 = scmp.ne.s32.totalorder %s383, %s385
    %p389 = scmp.eq.s32.totalorder %s34, 0
    %p390 = por %p388, %p389
    %p391 = scmp.ne.s32.totalorder %s383, %s385
    %p392 = scmp.eq.s32.totalorder %s39, 1
    %p393 = por %p391, %p392
    %p394 = scmp.ne.s32.totalorder %s385, %s386
    %p395 = scmp.eq.s32.totalorder %s39, 0
    %p396 = por %p394, %p395
    %p397 = scmp.ne.s32.totalorder %s385, %s386
    %p398 = scmp.eq.s32.totalorder %s40, 1
    %p399 = por %p397, %p398
    %p401 = scmp.ne.s32.totalorder %s386, %s400
    %p402 = scmp.eq.s32.totalorder %s40, 0
    %p403 = por %p401, %p402
    %s405 = sadd.s32 %s404, 1
    %p408 = scmp.eq.s32.totalorder %s34, 1
    %p409 = scmp.ne.s32.totalorder %s404, %s406
    %p410 = scmp.eq.s32.totalorder %s34, 0
    %p411 = por %p409, %p410
    %p412 = scmp.ne.s32.totalorder %s404, %s406
    %p413 = scmp.eq.s32.totalorder %s39, 1
    %p414 = por %p412, %p413
    %p415 = scmp.ne.s32.totalorder %s406, %s407
    %p416 = scmp.eq.s32.totalorder %s39, 0
    %p417 = por %p415, %p416
    %p418 = scmp.ne.s32.totalorder %s406, %s407
    %p419 = scmp.eq.s32.totalorder %s40, 1
    %p420 = por %p418, %p419
    %p422 = scmp.ne.s32.totalorder %s407, %s421
    %p423 = scmp.eq.s32.totalorder %s40, 0
    %p424 = por %p422, %p423
    %s426 = sadd.s32 %s425, 1
    %p429 = scmp.eq.s32.totalorder %s34, 1
    %p430 = scmp.ne.s32.totalorder %s425, %s427
    %p431 = scmp.eq.s32.totalorder %s34, 0
    %p432 = por %p430, %p431
    %p433 = scmp.ne.s32.totalorder %s425, %s427
    %p434 = scmp.eq.s32.totalorder %s39, 1
    %p435 = por %p433, %p434
    %p436 = scmp.ne.s32.totalorder %s427, %s428
    %p437 = scmp.eq.s32.totalorder %s39, 0
    %p438 = por %p436, %p437
    %p439 = scmp.ne.s32.totalorder %s427, %s428
    %p440 = scmp.eq.s32.totalorder %s40, 1
    %p441 = por %p439, %p440
    %p443 = scmp.ne.s32.totalorder %s428, %s442
    %p444 = scmp.eq.s32.totalorder %s40, 0
    %p445 = por %p443, %p444
    %s447 = sadd.s32 %s446, 1
    %p450 = scmp.eq.s32.totalorder %s34, 1
    %p451 = scmp.ne.s32.totalorder %s446, %s448
    %p452 = scmp.eq.s32.totalorder %s34, 0
    %p453 = por %p451, %p452
    %p454 = scmp.ne.s32.totalorder %s446, %s448
    %p455 = scmp.eq.s32.totalorder %s39, 1
    %p456 = por %p454, %p455
    %p457 = scmp.ne.s32.totalorder %s448, %s449
    %p458 = scmp.eq.s32.totalorder %s39, 0
    %p459 = por %p457, %p458
    %p460 = scmp.ne.s32.totalorder %s448, %s449
    %p461 = scmp.eq.s32.totalorder %s40, 1
    %p462 = por %p460, %p461
    %p464 = scmp.ne.s32.totalorder %s449, %s463
    %p465 = scmp.eq.s32.totalorder %s40, 0
    %p466 = por %p464, %p465
    %s468 = sadd.s32 %s467, 1
    %p471 = scmp.eq.s32.totalorder %s34, 1
    %p472 = scmp.ne.s32.totalorder %s467, %s469
    %p473 = scmp.eq.s32.totalorder %s34, 0
    %p474 = por %p472, %p473
    %p475 = scmp.ne.s32.totalorder %s467, %s469
    %p476 = scmp.eq.s32.totalorder %s39, 1
    %p477 = por %p475, %p476
    %p478 = scmp.ne.s32.totalorder %s469, %s470
    %p479 = scmp.eq.s32.totalorder %s39, 0
    %p480 = por %p478, %p479
    %p481 = scmp.ne.s32.totalorder %s469, %s470
    %p482 = scmp.eq.s32.totalorder %s40, 1
    %p483 = por %p481, %p482
    %p485 = scmp.ne.s32.totalorder %s470, %s484
    %p486 = scmp.eq.s32.totalorder %s40, 0
    %p487 = por %p485, %p486
    %s489 = sadd.s32 %s488, 1
    %p492 = scmp.eq.s32.totalorder %s34, 1
    %p493 = scmp.ne.s32.totalorder %s488, %s490
    %p494 = scmp.eq.s32.totalorder %s34, 0
    %p495 = por %p493, %p494
    %p496 = scmp.ne.s32.totalorder %s488, %s490
    %p497 = scmp.eq.s32.totalorder %s39, 1
    %p498 = por %p496, %p497
    %p499 = scmp.ne.s32.totalorder %s490, %s491
    %p500 = scmp.eq.s32.totalorder %s39, 0
    %p501 = por %p499, %p500
    %p502 = scmp.ne.s32.totalorder %s490, %s491
    %p503 = scmp.eq.s32.totalorder %s40, 1
    %p504 = por %p502, %p503
    %p506 = scmp.ne.s32.totalorder %s491, %s505
    %p507 = scmp.eq.s32.totalorder %s40, 0
    %p508 = por %p506, %p507
    %s510 = sadd.s32 %s509, 1
    %p513 = scmp.eq.s32.totalorder %s34, 1
    %p514 = scmp.ne.s32.totalorder %s509, %s511
    %p515 = scmp.eq.s32.totalorder %s34, 0
    %p516 = por %p514, %p515
    %p517 = scmp.ne.s32.totalorder %s509, %s511
    %p518 = scmp.eq.s32.totalorder %s39, 1
    %p519 = por %p517, %p518
    %p520 = scmp.ne.s32.totalorder %s511, %s512
    %p521 = scmp.eq.s32.totalorder %s39, 0
    %p522 = por %p520, %p521
    %p523 = scmp.ne.s32.totalorder %s511, %s512
    %p524 = scmp.eq.s32.totalorder %s40, 1
    %p525 = por %p523, %p524
    %p527 = scmp.ne.s32.totalorder %s512, %s526
    %p528 = scmp.eq.s32.totalorder %s40, 0
    %p529 = por %p527, %p528
    %s531 = sadd.s32 %s530, 1
    %p534 = scmp.eq.s32.totalorder %s34, 1
    %p535 = scmp.ne.s32.totalorder %s530, %s532
    %p536 = scmp.eq.s32.totalorder %s34, 0
    %p537 = por %p535, %p536
    %p538 = scmp.ne.s32.totalorder %s530, %s532
    %p539 = scmp.eq.s32.totalorder %s39, 1
    %p540 = por %p538, %p539
    %p541 = scmp.ne.s32.totalorder %s532, %s533
    %p542 = scmp.eq.s32.totalorder %s39, 0
    %p543 = por %p541, %p542
    %p544 = scmp.ne.s32.totalorder %s532, %s533
    %p545 = scmp.eq.s32.totalorder %s40, 1
    %p546 = por %p544, %p545
    %p548 = scmp.ne.s32.totalorder %s533, %s547
    %p549 = scmp.eq.s32.totalorder %s40, 0
    %p550 = por %p548, %p549
    %s552 = sadd.s32 %s551, 1
    %p555 = scmp.eq.s32.totalorder %s34, 1
    %p556 = scmp.ne.s32.totalorder %s551, %s553
    %p557 = scmp.eq.s32.totalorder %s34, 0
    %p558 = por %p556, %p557
    %p559 = scmp.ne.s32.totalorder %s551, %s553
    %p560 = scmp.eq.s32.totalorder %s39, 1
    %p561 = por %p559, %p560
    %p562 = scmp.ne.s32.totalorder %s553, %s554
    %p563 = scmp.eq.s32.totalorder %s39, 0
    %p564 = por %p562, %p563
    %p565 = scmp.ne.s32.totalorder %s553, %s554
    %p566 = scmp.eq.s32.totalorder %s40, 1
    %p567 = por %p565, %p566
    %p569 = scmp.ne.s32.totalorder %s554, %s568
    %p570 = scmp.eq.s32.totalorder %s40, 0
    %p571 = por %p569, %p570
    %s573 = sadd.s32 %s572, 1
    %p576 = scmp.eq.s32.totalorder %s34, 1
    %p577 = scmp.ne.s32.totalorder %s572, %s574
    %p578 = scmp.eq.s32.totalorder %s34, 0
    %p579 = por %p577, %p578
    %p580 = scmp.ne.s32.totalorder %s572, %s574
    %p581 = scmp.eq.s32.totalorder %s39, 1
    %p582 = por %p580, %p581
    %p583 = scmp.ne.s32.totalorder %s574, %s575
    %p584 = scmp.eq.s32.totalorder %s39, 0
    %p585 = por %p583, %p584
    %p586 = scmp.ne.s32.totalorder %s574, %s575
    %p587 = scmp.eq.s32.totalorder %s40, 1
    %p588 = por %p586, %p587
    %p590 = scmp.ne.s32.totalorder %s575, %s589
    %p591 = scmp.eq.s32.totalorder %s40, 0
    %p592 = por %p590, %p591
    %s594 = sadd.s32 %s593, 1
    %p597 = scmp.eq.s32.totalorder %s34, 1
    %p598 = scmp.ne.s32.totalorder %s593, %s595
    %p599 = scmp.eq.s32.totalorder %s34, 0
    %p600 = por %p598, %p599
    %p601 = scmp.ne.s32.totalorder %s593, %s595
    %p602 = scmp.eq.s32.totalorder %s39, 1
    %p603 = por %p601, %p602
    %p604 = scmp.ne.s32.totalorder %s595, %s596
    %p605 = scmp.eq.s32.totalorder %s39, 0
    %p606 = por %p604, %p605
    %p607 = scmp.ne.s32.totalorder %s595, %s596
    %p608 = scmp.eq.s32.totalorder %s40, 1
    %p609 = por %p607, %p608
    %p611 = scmp.ne.s32.totalorder %s596, %s610
    %p612 = scmp.eq.s32.totalorder %s40, 0
    %p613 = por %p611, %p612
    %s615 = sadd.s32 %s614, 1
    %p618 = scmp.eq.s32.totalorder %s34, 1
    %p619 = scmp.ne.s32.totalorder %s614, %s616
    %p620 = scmp.eq.s32.totalorder %s34, 0
    %p621 = por %p619, %p620
    %p622 = scmp.ne.s32.totalorder %s614, %s616
    %p623 = scmp.eq.s32.totalorder %s39, 1
    %p624 = por %p622, %p623
    %p625 = scmp.ne.s32.totalorder %s616, %s617
    %p626 = scmp.eq.s32.totalorder %s39, 0
    %p627 = por %p625, %p626
    %p628 = scmp.ne.s32.totalorder %s616, %s617
    %p629 = scmp.eq.s32.totalorder %s40, 1
    %p630 = por %p628, %p629
    %p632 = scmp.ne.s32.totalorder %s617, %s631
    %p633 = scmp.eq.s32.totalorder %s40, 0
    %p634 = por %p632, %p633
    %s635 = ssub.s32 %s34, %s41
    %p636 = scmp.eq.s32.totalorder %s635, 0
    %s638 = sadd.s32 %s637, 1
    %s639 = scalar_select %p636, %s637, %s638
    %p642 = pneg %p636
    %p643 = scmp.eq.s32.totalorder %s34, 1
    %p644 = por %p642, %p643
    %p645 = scmp.ne.s32.totalorder %s637, %s640
    %p646 = scmp.eq.s32.totalorder %s34, 0
    %p647 = por %p645, %p646
    %p648 = scmp.ne.s32.totalorder %s637, %s640
    %p649 = scmp.eq.s32.totalorder %s39, 1
    %p650 = por %p648, %p649
    %p651 = scmp.ne.s32.totalorder %s640, %s641
    %p652 = scmp.eq.s32.totalorder %s39, 0
    %p653 = por %p651, %p652
    %p654 = scmp.ne.s32.totalorder %s640, %s641
    %p655 = scmp.eq.s32.totalorder %s40, 1
    %p656 = por %p654, %p655
    %p658 = scmp.ne.s32.totalorder %s641, %s657
    %p659 = scmp.eq.s32.totalorder %s40, 0
    %p660 = por %p658, %p659
    %p661 = scmp.le.s32.totalorder 1, %s34
    %p662 = scmp.lt.s32.totalorder %s34, 3
    %p663 = pnand %p661, %p662
    %p664 = pneg %p663
    // Predicated region
    $region9: #{resnet_forward.1} parent=5 // pred_check
      _
    $region10: #{resnet_forward.1} parent=5 // pred_check_branch
      %666 = sbr.rel (%p663) target = $region12
    $region11: #{resnet_forward.1} parent=5 // pred_region
      %s667 = ssub.s32 %s34, 1
      // Predicated region
      $region13: #{resnet_forward.1} parent=11 // pred_check
        %p668 = pneg %p55
      $region14: #{resnet_forward.1} parent=11 // pred_check_branch
        %670 = sbr.rel (%p668) target = $region16
      $region15: #{resnet_forward.1} parent=11 // pred_region
        _
      $region16: #{resnet_forward.1} parent=11 // pred_fallthru
        _
      // Predicated region
      $region17: #{resnet_forward.1} parent=11 // pred_check
        %p671 = pneg %p102
      $region18: #{resnet_forward.1} parent=11 // pred_check_branch
        %673 = sbr.rel (%p671) target = $region20
      $region19: #{resnet_forward.1} parent=11 // pred_region
        _
      $region20: #{resnet_forward.1} parent=11 // pred_fallthru
        _
      // Predicated region
      $region21: #{resnet_forward.1} parent=11 // pred_check
        %p674 = pneg %p123
      $region22: #{resnet_forward.1} parent=11 // pred_check_branch
        %676 = sbr.rel (%p674) target = $region24
      $region23: #{resnet_forward.1} parent=11 // pred_region
        _
      $region24: #{resnet_forward.1} parent=11 // pred_fallthru
        _
      // Predicated region
      $region25: #{resnet_forward.1} parent=11 // pred_check
        %p677 = pneg %p144
      $region26: #{resnet_forward.1} parent=11 // pred_check_branch
        %679 = sbr.rel (%p677) target = $region28
      $region27: #{resnet_forward.1} parent=11 // pred_region
        _
      $region28: #{resnet_forward.1} parent=11 // pred_fallthru
        _
      // Predicated region
      $region29: #{resnet_forward.1} parent=11 // pred_check
        %p680 = pneg %p165
      $region30: #{resnet_forward.1} parent=11 // pred_check_branch
        %682 = sbr.rel (%p680) target = $region32
      $region31: #{resnet_forward.1} parent=11 // pred_region
        _
      $region32: #{resnet_forward.1} parent=11 // pred_fallthru
        _
      // Predicated region
      $region33: #{resnet_forward.1} parent=11 // pred_check
        %p683 = pneg %p186
      $region34: #{resnet_forward.1} parent=11 // pred_check_branch
        %685 = sbr.rel (%p683) target = $region36
      $region35: #{resnet_forward.1} parent=11 // pred_region
        _
      $region36: #{resnet_forward.1} parent=11 // pred_fallthru
        _
      // Predicated region
      $region37: #{resnet_forward.1} parent=11 // pred_check
        %p686 = pneg %p207
      $region38: #{resnet_forward.1} parent=11 // pred_check_branch
        %688 = sbr.rel (%p686) target = $region40
      $region39: #{resnet_forward.1} parent=11 // pred_region
        _
      $region40: #{resnet_forward.1} parent=11 // pred_fallthru
        _
      // Predicated region
      $region41: #{resnet_forward.1} parent=11 // pred_check
        %p689 = pneg %p228
      $region42: #{resnet_forward.1} parent=11 // pred_check_branch
        %691 = sbr.rel (%p689) target = $region44
      $region43: #{resnet_forward.1} parent=11 // pred_region
        _
      $region44: #{resnet_forward.1} parent=11 // pred_fallthru
        _
      // Predicated region
      $region45: #{resnet_forward.1} parent=11 // pred_check
        %p692 = pneg %p249
      $region46: #{resnet_forward.1} parent=11 // pred_check_branch
        %694 = sbr.rel (%p692) target = $region48
      $region47: #{resnet_forward.1} parent=11 // pred_region
        _
      $region48: #{resnet_forward.1} parent=11 // pred_fallthru
        _
      // Predicated region
      $region49: #{resnet_forward.1} parent=11 // pred_check
        %p695 = pneg %p270
      $region50: #{resnet_forward.1} parent=11 // pred_check_branch
        %697 = sbr.rel (%p695) target = $region52
      $region51: #{resnet_forward.1} parent=11 // pred_region
        _
      $region52: #{resnet_forward.1} parent=11 // pred_fallthru
        _
      // Predicated region
      $region53: #{resnet_forward.1} parent=11 // pred_check
        %p698 = pneg %p291
      $region54: #{resnet_forward.1} parent=11 // pred_check_branch
        %700 = sbr.rel (%p698) target = $region56
      $region55: #{resnet_forward.1} parent=11 // pred_region
        _
      $region56: #{resnet_forward.1} parent=11 // pred_fallthru
        _
      // Predicated region
      $region57: #{resnet_forward.1} parent=11 // pred_check
        %p701 = pneg %p312
      $region58: #{resnet_forward.1} parent=11 // pred_check_branch
        %703 = sbr.rel (%p701) target = $region60
      $region59: #{resnet_forward.1} parent=11 // pred_region
        _
      $region60: #{resnet_forward.1} parent=11 // pred_fallthru
        _
      // Predicated region
      $region61: #{resnet_forward.1} parent=11 // pred_check
        %p704 = pneg %p333
      $region62: #{resnet_forward.1} parent=11 // pred_check_branch
        %706 = sbr.rel (%p704) target = $region64
      $region63: #{resnet_forward.1} parent=11 // pred_region
        _
      $region64: #{resnet_forward.1} parent=11 // pred_fallthru
        _
      // Predicated region
      $region65: #{resnet_forward.1} parent=11 // pred_check
        %p707 = pneg %p354
      $region66: #{resnet_forward.1} parent=11 // pred_check_branch
        %709 = sbr.rel (%p707) target = $region68
      $region67: #{resnet_forward.1} parent=11 // pred_region
        _
      $region68: #{resnet_forward.1} parent=11 // pred_fallthru
        _
      // Predicated region
      $region69: #{resnet_forward.1} parent=11 // pred_check
        %p710 = pneg %p375
      $region70: #{resnet_forward.1} parent=11 // pred_check_branch
        %712 = sbr.rel (%p710) target = $region72
      $region71: #{resnet_forward.1} parent=11 // pred_region
        _
      $region72: #{resnet_forward.1} parent=11 // pred_fallthru
        _
      // Predicated region
      $region73: #{resnet_forward.1} parent=11 // pred_check
        %p713 = pneg %p396
      $region74: #{resnet_forward.1} parent=11 // pred_check_branch
        %715 = sbr.rel (%p713) target = $region76
      $region75: #{resnet_forward.1} parent=11 // pred_region
        _
      $region76: #{resnet_forward.1} parent=11 // pred_fallthru
        _
      // Predicated region
      $region77: #{resnet_forward.1} parent=11 // pred_check
        %p716 = pneg %p417
      $region78: #{resnet_forward.1} parent=11 // pred_check_branch
        %718 = sbr.rel (%p716) target = $region80
      $region79: #{resnet_forward.1} parent=11 // pred_region
        _
      $region80: #{resnet_forward.1} parent=11 // pred_fallthru
        _
      // Predicated region
      $region81: #{resnet_forward.1} parent=11 // pred_check
        %p719 = pneg %p438
      $region82: #{resnet_forward.1} parent=11 // pred_check_branch
        %721 = sbr.rel (%p719) target = $region84
      $region83: #{resnet_forward.1} parent=11 // pred_region
        _
      $region84: #{resnet_forward.1} parent=11 // pred_fallthru
        _
      // Predicated region
      $region85: #{resnet_forward.1} parent=11 // pred_check
        %p722 = pneg %p459
      $region86: #{resnet_forward.1} parent=11 // pred_check_branch
        %724 = sbr.rel (%p722) target = $region88
      $region87: #{resnet_forward.1} parent=11 // pred_region
        _
      $region88: #{resnet_forward.1} parent=11 // pred_fallthru
        _
      // Predicated region
      $region89: #{resnet_forward.1} parent=11 // pred_check
        %p725 = pneg %p480
      $region90: #{resnet_forward.1} parent=11 // pred_check_branch
        %727 = sbr.rel (%p725) target = $region92
      $region91: #{resnet_forward.1} parent=11 // pred_region
        _
      $region92: #{resnet_forward.1} parent=11 // pred_fallthru
        _
      // Predicated region
      $region93: #{resnet_forward.1} parent=11 // pred_check
        %p728 = pneg %p501
      $region94: #{resnet_forward.1} parent=11 // pred_check_branch
        %730 = sbr.rel (%p728) target = $region96
      $region95: #{resnet_forward.1} parent=11 // pred_region
        _
      $region96: #{resnet_forward.1} parent=11 // pred_fallthru
        _
      // Predicated region
      $region97: #{resnet_forward.1} parent=11 // pred_check
        %p731 = pneg %p522
      $region98: #{resnet_forward.1} parent=11 // pred_check_branch
        %733 = sbr.rel (%p731) target = $region100
      $region99: #{resnet_forward.1} parent=11 // pred_region
        _
      $region100: #{resnet_forward.1} parent=11 // pred_fallthru
        _
      // Predicated region
      $region101: #{resnet_forward.1} parent=11 // pred_check
        %p734 = pneg %p543
      $region102: #{resnet_forward.1} parent=11 // pred_check_branch
        %736 = sbr.rel (%p734) target = $region104
      $region103: #{resnet_forward.1} parent=11 // pred_region
        _
      $region104: #{resnet_forward.1} parent=11 // pred_fallthru
        _
      // Predicated region
      $region105: #{resnet_forward.1} parent=11 // pred_check
        %p737 = pneg %p564
      $region106: #{resnet_forward.1} parent=11 // pred_check_branch
        %739 = sbr.rel (%p737) target = $region108
      $region107: #{resnet_forward.1} parent=11 // pred_region
        _
      $region108: #{resnet_forward.1} parent=11 // pred_fallthru
        _
      // Predicated region
      $region109: #{resnet_forward.1} parent=11 // pred_check
        %p740 = pneg %p585
      $region110: #{resnet_forward.1} parent=11 // pred_check_branch
        %742 = sbr.rel (%p740) target = $region112
      $region111: #{resnet_forward.1} parent=11 // pred_region
        _
      $region112: #{resnet_forward.1} parent=11 // pred_fallthru
        _
      // Predicated region
      $region113: #{resnet_forward.1} parent=11 // pred_check
        %p743 = pneg %p606
      $region114: #{resnet_forward.1} parent=11 // pred_check_branch
        %745 = sbr.rel (%p743) target = $region116
      $region115: #{resnet_forward.1} parent=11 // pred_region
        _
      $region116: #{resnet_forward.1} parent=11 // pred_fallthru
        _
      // Predicated region
      $region117: #{resnet_forward.1} parent=11 // pred_check
        %p746 = pneg %p627
      $region118: #{resnet_forward.1} parent=11 // pred_check_branch
        %748 = sbr.rel (%p746) target = $region120
      $region119: #{resnet_forward.1} parent=11 // pred_region
        _
      $region120: #{resnet_forward.1} parent=11 // pred_fallthru
        _
    $region12: #{resnet_forward.1} parent=5 // pred_fallthru
      _
    %p749 = scmp.lt.s32.totalorder %s34, 2
    // Predicated region
    $region121: #{resnet_forward.1} parent=5 // pred_check
      %p750 = pneg %p749
    $region122: #{resnet_forward.1} parent=5 // pred_check_branch
      %752 = sbr.rel (%p750) target = $region124
    $region123: #{resnet_forward.1} parent=5 // pred_region
      // Predicated region
      $region125: #{resnet_forward.1} parent=123 // pred_check
        %p753 = pneg %p75
      $region126: #{resnet_forward.1} parent=123 // pred_check_branch
        %755 = sbr.rel (%p753) target = $region128
      $region127: #{resnet_forward.1} parent=123 // pred_region
        %s756 = smul.u32 8, %s34
        %p757 = scmp.lt.s32.totalorder %s756, 15
        %s758 = scalar_select %p757, %s756, 15
        %s759 = smul.addr %s758, 4
        %s760 = scalar_lea.vmem %s1, %s759
        %s761 = smul.u32 8, %s34
      $region128: #{resnet_forward.1} parent=123 // pred_fallthru
        _
    $region124: #{resnet_forward.1} parent=5 // pred_fallthru
      _
    %p762 = scmp.le.s32.totalorder 1, %s34
    %p763 = scmp.lt.s32.totalorder %s34, 3
    %p764 = pnand %p762, %p763
    %p765 = pneg %p764
    // Predicated region
    $region129: #{resnet_forward.1} parent=5 // pred_check
      _
    $region130: #{resnet_forward.1} parent=5 // pred_check_branch
      %767 = sbr.rel (%p764) target = $region132
    $region131: #{resnet_forward.1} parent=5 // pred_region
      %s768 = ssub.s32 %s34, 1
      %p769 = pneg %p55
      %p770 = pneg %p52
      %s771 = smul.u32 8, %s39
      %p772 = scmp.lt.s32.totalorder %s771, 15
      %s773 = scalar_select %p772, %s771, 15
      %s774 = smul.addr %s773, 4
      %s775 = scalar_lea.vmem %s1, %s774
      %p776 = pneg %p81
      %p777 = pneg %p78
      %p778 = pneg %p102
      %p779 = pneg %p99
      %p780 = pneg %p123
      %p781 = pneg %p120
      %p782 = pneg %p144
      %p783 = pneg %p141
      %p784 = pneg %p165
      %p785 = pneg %p162
      %p786 = pneg %p186
      %p787 = pneg %p183
      %p788 = pneg %p207
      %p789 = pneg %p204
      %p790 = pneg %p228
      %p791 = pneg %p225
      %p792 = pneg %p249
      %p793 = pneg %p246
      %p794 = pneg %p270
      %p795 = pneg %p267
      %p796 = pneg %p291
      %p797 = pneg %p288
      %p798 = pneg %p312
      %p799 = pneg %p309
      %p800 = pneg %p333
      %p801 = pneg %p330
      %p802 = pneg %p354
      %p803 = pneg %p351
      %p804 = pneg %p375
      %p805 = pneg %p372
      %p806 = pneg %p396
      %p807 = pneg %p393
      %p808 = pneg %p417
      %p809 = pneg %p414
      %p810 = pneg %p438
      %p811 = pneg %p435
      %p812 = pneg %p459
      %p813 = pneg %p456
      %p814 = pneg %p480
      %p815 = pneg %p477
      %p816 = pneg %p501
      %p817 = pneg %p498
      %p818 = pneg %p522
      %p819 = pneg %p519
      %p820 = pneg %p543
      %p821 = pneg %p540
      %p822 = pneg %p564
      %p823 = pneg %p561
      %p824 = pneg %p585
      %p825 = pneg %p582
      %p826 = pneg %p606
      %p827 = pneg %p603
      %p828 = pneg %p627
      %p829 = pneg %p624
      %p830 = pneg %p653
      %p831 = pneg %p650
      %p832 = scmp.lt.s32.totalorder %s39, 1
      %s833 = scalar_select %p832, %s39, 1
      %s834 = smul.addr %s833, 8
      %s835 = scalar_lea.vmem %s28, %s834
      %s836 = smul.u32 8, %s39
      %p837 = scmp.lt.s32.totalorder %s836, 15
      %s838 = scalar_select %p837, %s836, 15
      %s839 = smul.addr %s838, 4
      %s840 = scalar_lea.vmem %s1, %s839
      %s841 = smul.u32 8, %s39
      %p842 = scmp.lt.s32.totalorder %s39, 1
      %s843 = scalar_select %p842, %s39, 1
      %s844 = smul.addr %s843, 8
      %s845 = scalar_lea.vmem %s28, %s844
      %v847 = vld [vmem:[%s0] sm:$0xff]
      %848 = vmin.xlane.f32.xlu0 %v847
      %v849 = vpop.xlane.xlu0 %848
      %v850 = vrot.slane %v849, 4
      %v851 = vmin.f32 %v849, %v850
      %v852 = vrot.slane %v851, 2
      %v853 = vmin.f32 %v851, %v852
      %v854 = vrot.slane %v853, 1
      %v855 = vmin.f32 %v853, %v854
      %s856 = vtos %v855
      %v857 = vstv %s856
      %858 = vmax.xlane.f32.xlu0 %v847
      %v859 = vpop.xlane.xlu0 %858
      %v860 = vrot.slane %v859, 4
      %v861 = vmax.f32 %v859, %v860
      %v862 = vrot.slane %v861, 2
      %v863 = vmax.f32 %v861, %v862
      %v864 = vrot.slane %v863, 1
      %v865 = vmax.f32 %v863, %v864
      %s866 = vtos %v865
      %v867 = vstv %s866
      %v868 = vsub.f32 %v867, %v857
      %v869 = vmax.f32 %v868, 1e-30
      %v870 = vrcp.pop %v869
      %v871 = vmul.f32 %v869, %v870
      %v872 = vsub.f32 1.0, %v871
      %v873 = vmul.f32 %v870, %v872
      %v874 = vadd.f32 %v870, %v873
      %vm875 = vweird.f32 %v869
      %vm876 = vweird.f32 %v870
      %vm877 = vmor %vm875, %vm876
      %v878 = vsel %vm877, %v870, %v874
      %v879 = vand.u32 2147483647, %v869
      %vm880 = vcmp.eq.f32.partialorder %v879, 8.507059e+37
      %v881 = vand.u32 %v869, 2147483648
      %v882 = vor.u32 1.1754944e-38, %v881
      %v883 = vsel %vm880, %v882, %v878
      %v884 = vmul.f32 1.0, %v883
      %v885 = vld [vmem:[%s840] sm:$0xf]
      %v886 = vld [vmem:[%s840 + $0x4] sm:$0xf]
      %v887 = vld [vmem:[%s840 + $0x8] sm:$0xf]
      %v888 = vld [vmem:[%s840 + $0xc] sm:$0xf]
      %v889 = vld [vmem:[%s840 + $0x10] sm:$0xf]
      %v890 = vld [vmem:[%s840 + $0x14] sm:$0xf]
      %v891 = vld [vmem:[%s840 + $0x18] sm:$0xf]
      %v892 = vld [vmem:[%s840 + $0x1c] sm:$0xf]
      %v893 = vld [vmem:[%s3] sm:$0xf]
      %v894 = vld [vmem:[%s3 + $0x4] sm:$0xf]
      %v895 = vld [vmem:[%s3 + $0x8] sm:$0xf]
      %v896 = vld [vmem:[%s3 + $0xc] sm:$0xf]
      %v897 = vld [vmem:[%s3 + $0x10] sm:$0xf]
      %v898 = vld [vmem:[%s3 + $0x14] sm:$0xf]
      %v899 = vld [vmem:[%s3 + $0x18] sm:$0xf]
      %v900 = vld [vmem:[%s3 + $0x1c] sm:$0xf]
      %v901 = vld [vmem:[%s3 + $0x20] sm:$0xf]
      %v902 = vld [vmem:[%s3 + $0x24] sm:$0xf]
      %v903 = vld [vmem:[%s3 + $0x28] sm:$0xf]
      %v904 = vld [vmem:[%s3 + $0x2c] sm:$0xf]
      %v905 = vld [vmem:[%s3 + $0x30] sm:$0x1]
      %v914 = vunpack.c.l.b16 %v885
      %v915 = vunpack.c.l.b16 %v886
      %v916 = vunpack.c.l.b16 %v887
      %v917 = vunpack.c.l.b16 %v888
      %v918 = vunpack.c.l.b16 %v889
      %v919 = vunpack.c.l.b16 %v890
      %v920 = vunpack.c.l.b16 %v891
      %v921 = vunpack.c.l.b16 %v892
      %v922 = vpack.c.b16 %v915, %v914
      %v923 = vpack.c.b16 %v917, %v916
      %v924 = vpack.c.b16 %v919, %v918
      %v925 = vpack.c.b16 %v921, %v920
      %v939 = vunpack.c.l.b16 %v893
      %v940 = vunpack.c.l.b16 %v894
      %v941 = vunpack.c.l.b16 %v895
      %v942 = vunpack.c.l.b16 %v896
      %v943 = vunpack.c.l.b16 %v897
      %v944 = vunpack.c.l.b16 %v898
      %v945 = vunpack.c.l.b16 %v899
      %v946 = vunpack.c.l.b16 %v900
      %v947 = vunpack.c.l.b16 %v901
      %v948 = vunpack.c.l.b16 %v902
      %v949 = vunpack.c.l.b16 %v903
      %v950 = vunpack.c.l.b16 %v904
      %v951 = vunpack.c.l.b16 %v905
      %v952 = vpack.c.b16 %v940, %v939
      %v953 = vpack.c.b16 %v942, %v941
      %v954 = vpack.c.b16 %v944, %v943
      %v955 = vpack.c.b16 %v946, %v945
      %v956 = vpack.c.b16 %v948, %v947
      %v957 = vpack.c.b16 %v950, %v949
      %v958 = vpack.c.b16 %v951, %v951
      %vm965 = vcmask 801792
      %v967 = vsel %vm965, %v922, 0
      %v970 = vsel %vm965, %v923, 0
      %v973 = vsel %vm965, %v924, 0
      %v976 = vsel %vm965, %v925, 0
      %vm978 = vcmask 1040384
      %v980 = vsel %vm978, %v958, 0
      %982 = vmatpush.bf16.msra.mxu0 0
      %983 = vmatpush.bf16.msra.mxu0 %v980
      %984 = vmatpush.bf16.msra.mxu0 %v957
      %985 = vmatpush.bf16.msra.mxu0 %v956
      %986 = vmatpush.bf16.msra.mxu0 %v955
      %987 = vmatpush.bf16.msra.mxu0 %v954
      %988 = vmatpush.bf16.msra.mxu0 %v953
      %989 = vmatpush.bf16.msra.mxu0 %v952
      %990 = vmatmul.bf16.gmra.mxu0 %v967
      %v991 = vpop.f32.mrf.mxu0
      %v992 = vadd.f32 0.0, %v991
      %v993 = vpop.f32.mrf.mxu0
      %v994 = vadd.f32 0.0, %v993
      %995 = vmatmul.bf16.gmra.mxu0 %v970
      %v996 = vpop.f32.mrf.mxu0
      %v997 = vadd.f32 0.0, %v996
      %v998 = vpop.f32.mrf.mxu0
      %v999 = vadd.f32 0.0, %v998
      %1000 = vmatmul.bf16.gmra.mxu0 %v973
      %v1001 = vpop.f32.mrf.mxu0
      %v1002 = vadd.f32 0.0, %v1001
      %v1003 = vpop.f32.mrf.mxu0
      %v1004 = vadd.f32 0.0, %v1003
      %1005 = vmatmul.bf16.gmra.mxu0 %v976
      %v1006 = vpop.f32.mrf.mxu0
      %v1007 = vadd.f32 0.0, %v1006
      %v1008 = vpop.f32.mrf.mxu0
      %v1009 = vadd.f32 0.0, %v1008
      %1010 = vdwg.mxu0
      %v1011 = vld [vmem:[%s2] sm:$0xf]
      %v1012 = vld [vmem:[%s2 + $0x4] sm:$0xf]
      %v1013 = vld [vmem:[%s2 + $0x8] sm:$0xf]
      %v1014 = vld [vmem:[%s2 + $0xc] sm:$0xf]
      %v1015 = vld [vmem:[%s2 + $0x10] sm:$0xf]
      %v1016 = vld [vmem:[%s2 + $0x14] sm:$0xf]
      %v1017 = vld [vmem:[%s2 + $0x18] sm:$0xf]
      %v1018 = vld [vmem:[%s2 + $0x1c] sm:$0xf]
      %v1027 = vunpack.c.l.b16 %v1011
      %v1028 = vunpack.c.l.b16 %v1012
      %v1029 = vunpack.c.l.b16 %v1013
      %v1030 = vunpack.c.l.b16 %v1014
      %v1031 = vunpack.c.l.b16 %v1015
      %v1032 = vunpack.c.l.b16 %v1016
      %v1033 = vunpack.c.l.b16 %v1017
      %v1034 = vunpack.c.l.b16 %v1018
      %v1035 = vpack.c.b16 %v1028, %v1027
      %v1036 = vpack.c.b16 %v1030, %v1029
      %v1037 = vpack.c.b16 %v1032, %v1031
      %v1038 = vpack.c.b16 %v1034, %v1033
      %v1040 = vsel %vm965, %v1035, 0
      %v1043 = vsel %vm965, %v1036, 0
      %v1046 = vsel %vm965, %v1037, 0
      %v1049 = vsel %vm965, %v1038, 0
      %1051 = vmatpush.bf16.msra.mxu0 0
      %1052 = vmatpush.bf16.msra.mxu0 %v980
      %1053 = vmatpush.bf16.msra.mxu0 %v957
      %1054 = vmatpush.bf16.msra.mxu0 %v956
      %1055 = vmatpush.bf16.msra.mxu0 %v955
      %1056 = vmatpush.bf16.msra.mxu0 %v954
      %1057 = vmatpush.bf16.msra.mxu0 %v953
      %1058 = vmatpush.bf16.msra.mxu0 %v952
      %1059 = vmatmul.bf16.gmra.mxu0 %v1040
      %v1060 = vpop.f32.mrf.mxu0
      %v1061 = vadd.f32 0.0, %v1060
      %v1062 = vpop.f32.mrf.mxu0
      %v1063 = vadd.f32 0.0, %v1062
      %1064 = vmatmul.bf16.gmra.mxu0 %v1043
      %v1065 = vpop.f32.mrf.mxu0
      %v1066 = vadd.f32 0.0, %v1065
      %v1067 = vpop.f32.mrf.mxu0
      %v1068 = vadd.f32 0.0, %v1067
      %1069 = vmatmul.bf16.gmra.mxu0 %v1046
      %v1070 = vpop.f32.mrf.mxu0
      %v1071 = vadd.f32 0.0, %v1070
      %v1072 = vpop.f32.mrf.mxu0
      %v1073 = vadd.f32 0.0, %v1072
      %1074 = vmatmul.bf16.gmra.mxu0 %v1049
      %v1075 = vpop.f32.mrf.mxu0
      %v1076 = vadd.f32 0.0, %v1075
      %v1077 = vpop.f32.mrf.mxu0
      %v1078 = vadd.f32 0.0, %v1077
      %1079 = vdwg.mxu0
      %v1080 = vmul.f32 %v884, %v992
      %v1081 = vmul.f32 %v884, %v994
      %v1082 = vmul.f32 %v884, %v997
      %v1083 = vmul.f32 %v884, %v999
      %v1084 = vmul.f32 %v884, %v1002
      %v1085 = vmul.f32 %v884, %v1004
      %v1086 = vmul.f32 %v884, %v1007
      %v1087 = vmul.f32 %v884, %v1009
      %v1088 = vmul.f32 %v857, %v884
      %v1089 = vmul.f32 %v1088, %v1061
      %v1090 = vmul.f32 %v1088, %v1063
      %v1091 = vmul.f32 %v1088, %v1066
      %v1092 = vmul.f32 %v1088, %v1068
      %v1093 = vmul.f32 %v1088, %v1071
      %v1094 = vmul.f32 %v1088, %v1073
      %v1095 = vmul.f32 %v1088, %v1076
      %v1096 = vmul.f32 %v1088, %v1078
      %v1097 = vsub.f32 %v1080, %v1089
      %v1098 = vsub.f32 %v1081, %v1090
      %v1099 = vsub.f32 %v1082, %v1091
      %v1100 = vsub.f32 %v1083, %v1092
      %v1101 = vsub.f32 %v1084, %v1093
      %v1102 = vsub.f32 %v1085, %v1094
      %v1103 = vsub.f32 %v1086, %v1095
      %v1104 = vsub.f32 %v1087, %v1096
      %v1105 = vld [vmem:[%s4] sm:$0x1]
      %v1107 = vperm.slane %v1105, 0
      %v1109 = vadd.f32 %v1097, %v1107
      %v1110 = vadd.f32 %v1098, %v1107
      %v1111 = vadd.f32 %v1099, %v1107
      %v1112 = vadd.f32 %v1100, %v1107
      %v1113 = vadd.f32 %v1101, %v1107
      %v1114 = vadd.f32 %v1102, %v1107
      %v1115 = vadd.f32 %v1103, %v1107
      %v1116 = vadd.f32 %v1104, %v1107
      %v1117 = vmax.f32 %v1109, 0.0
      %v1118 = vmax.f32 %v1110, 0.0
      %v1119 = vmax.f32 %v1111, 0.0
      %v1120 = vmax.f32 %v1112, 0.0
      %v1121 = vmax.f32 %v1113, 0.0
      %v1122 = vmax.f32 %v1114, 0.0
      %v1123 = vmax.f32 %v1115, 0.0
      %v1124 = vmax.f32 %v1116, 0.0
      %v1125 = vld [vmem:[%s5] sm:$0xff]
      %v1126 = vld [vmem:[%s5 + $0x8] sm:$0xff]
      %v1127 = vld [vmem:[%s5 + $0x10] sm:$0xff]
      %v1128 = vld [vmem:[%s5 + $0x18] sm:$0xff]
      %v1129 = vld [vmem:[%s5 + $0x20] sm:$0xff]
      %v1130 = vld [vmem:[%s5 + $0x28] sm:$0xff]
      %v1131 = vld [vmem:[%s5 + $0x30] sm:$0xff]
      %v1132 = vld [vmem:[%s5 + $0x38] sm:$0xff]
      %v1133 = vld [vmem:[%s5 + $0x40] sm:$0xff]
      %v1134 = vld [vmem:[%s5 + $0x48] sm:$0xff]
      %v1135 = vld [vmem:[%s5 + $0x50] sm:$0xff]
      %v1136 = vld [vmem:[%s5 + $0x58] sm:$0xff]
      %v1137 = vld [vmem:[%s5 + $0x60] sm:$0xff]
      %v1138 = vld [vmem:[%s5 + $0x68] sm:$0xff]
      %v1139 = vld [vmem:[%s5 + $0x70] sm:$0xff]
      %v1140 = vld [vmem:[%s5 + $0x78] sm:$0xff]
      %v1141 = vld [vmem:[%s5 + $0x80] sm:$0xff]
      %v1142 = vld [vmem:[%s5 + $0x88] sm:$0xff]
      %vm1143 = vcmask 523264
      %v1145 = vsel %vm1143, %v1125, 0
      %v1148 = vsel %vm1143, %v1126, 0
      %1150 = vmatpush.msra.mxu0 0.0
      %1151 = vmatpush.msra.mxu0 0.0
      %1152 = vmatpush.msra.mxu0 0.0
      %1153 = vmatpush.msra.mxu0 0.0
      %1154 = vmatpush.msra.mxu0 0.0
      %1155 = vmatpush.msra.mxu0 0.0
      %1156 = vmatpush.msra.mxu0 0.0
      %1157 = vmatpush.msra.mxu0 0.0
      %1158 = vmatpush.msra.mxu0 %v1124
      %1159 = vmatpush.msra.mxu0 %v1123
      %1160 = vmatpush.msra.mxu0 %v1122
      %1161 = vmatpush.msra.mxu0 %v1121
      %1162 = vmatpush.msra.mxu0 %v1120
      %1163 = vmatpush.msra.mxu0 %v1119
      %1164 = vmatpush.msra.mxu0 %v1118
      %1165 = vmatpush.msra.mxu0 %v1117
      %1166 = vmatmul.f32.gmra.mxu0 %v1145
      %v1167 = vpop.f32.mrf.mxu0
      %v1168 = vadd.f32 0.0, %v1167
      %1169 = vmatmul.f32.gmra.mxu0 %v1148
      %v1170 = vpop.f32.mrf.mxu0
      %v1171 = vadd.f32 0.0, %v1170
      %1172 = vdwg.mxu0
      %v1174 = vsel %vm1143, %v1127, 0
      %v1177 = vsel %vm1143, %v1128, 0
      %1179 = vmatpush.msra.mxu0 0.0
      %1180 = vmatpush.msra.mxu0 0.0
      %1181 = vmatpush.msra.mxu0 0.0
      %1182 = vmatpush.msra.mxu0 0.0
      %1183 = vmatpush.msra.mxu0 0.0
      %1184 = vmatpush.msra.mxu0 0.0
      %1185 = vmatpush.msra.mxu0 0.0
      %1186 = vmatpush.msra.mxu0 0.0
      %1187 = vmatpush.msra.mxu0 %v1124
      %1188 = vmatpush.msra.mxu0 %v1123
      %1189 = vmatpush.msra.mxu0 %v1122
      %1190 = vmatpush.msra.mxu0 %v1121
      %1191 = vmatpush.msra.mxu0 %v1120
      %1192 = vmatpush.msra.mxu0 %v1119
      %1193 = vmatpush.msra.mxu0 %v1118
      %1194 = vmatpush.msra.mxu0 %v1117
      %1195 = vmatmul.f32.gmra.mxu0 %v1174
      %v1196 = vpop.f32.mrf.mxu0
      %v1197 = vadd.f32 0.0, %v1196
      %1198 = vmatmul.f32.gmra.mxu0 %v1177
      %v1199 = vpop.f32.mrf.mxu0
      %v1200 = vadd.f32 0.0, %v1199
      %1201 = vdwg.mxu0
      %v1202 = vmax.f32 %v1168, %v1197
      %v1203 = vmax.f32 %v1171, %v1200
      %v1205 = vsel %vm1143, %v1129, 0
      %v1208 = vsel %vm1143, %v1130, 0
      %1210 = vmatpush.msra.mxu0 0.0
      %1211 = vmatpush.msra.mxu0 0.0
      %1212 = vmatpush.msra.mxu0 0.0
      %1213 = vmatpush.msra.mxu0 0.0
      %1214 = vmatpush.msra.mxu0 0.0
      %1215 = vmatpush.msra.mxu0 0.0
      %1216 = vmatpush.msra.mxu0 0.0
      %1217 = vmatpush.msra.mxu0 0.0
      %1218 = vmatpush.msra.mxu0 %v1124
      %1219 = vmatpush.msra.mxu0 %v1123
      %1220 = vmatpush.msra.mxu0 %v1122
      %1221 = vmatpush.msra.mxu0 %v1121
      %1222 = vmatpush.msra.mxu0 %v1120
      %1223 = vmatpush.msra.mxu0 %v1119
      %1224 = vmatpush.msra.mxu0 %v1118
      %1225 = vmatpush.msra.mxu0 %v1117
      %1226 = vmatmul.f32.gmra.mxu0 %v1205
      %v1227 = vpop.f32.mrf.mxu0
      %v1228 = vadd.f32 0.0, %v1227
      %1229 = vmatmul.f32.gmra.mxu0 %v1208
      %v1230 = vpop.f32.mrf.mxu0
      %v1231 = vadd.f32 0.0, %v1230
      %1232 = vdwg.mxu0
      %v1233 = vmax.f32 %v1202, %v1228
      %v1234 = vmax.f32 %v1203, %v1231
      %v1236 = vsel %vm1143, %v1131, 0
      %v1239 = vsel %vm1143, %v1132, 0
      %1241 = vmatpush.msra.mxu0 0.0
      %1242 = vmatpush.msra.mxu0 0.0
      %1243 = vmatpush.msra.mxu0 0.0
      %1244 = vmatpush.msra.mxu0 0.0
      %1245 = vmatpush.msra.mxu0 0.0
      %1246 = vmatpush.msra.mxu0 0.0
      %1247 = vmatpush.msra.mxu0 0.0
      %1248 = vmatpush.msra.mxu0 0.0
      %1249 = vmatpush.msra.mxu0 %v1124
      %1250 = vmatpush.msra.mxu0 %v1123
      %1251 = vmatpush.msra.mxu0 %v1122
      %1252 = vmatpush.msra.mxu0 %v1121
      %1253 = vmatpush.msra.mxu0 %v1120
      %1254 = vmatpush.msra.mxu0 %v1119
      %1255 = vmatpush.msra.mxu0 %v1118
      %1256 = vmatpush.msra.mxu0 %v1117
      %1257 = vmatmul.f32.gmra.mxu0 %v1236
      %v1258 = vpop.f32.mrf.mxu0
      %v1259 = vadd.f32 0.0, %v1258
      %1260 = vmatmul.f32.gmra.mxu0 %v1239
      %v1261 = vpop.f32.mrf.mxu0
      %v1262 = vadd.f32 0.0, %v1261
      %1263 = vdwg.mxu0
      %v1264 = vmax.f32 %v1233, %v1259
      %v1265 = vmax.f32 %v1234, %v1262
      %v1267 = vsel %vm1143, %v1133, 0
      %v1270 = vsel %vm1143, %v1134, 0
      %1272 = vmatpush.msra.mxu0 0.0
      %1273 = vmatpush.msra.mxu0 0.0
      %1274 = vmatpush.msra.mxu0 0.0
      %1275 = vmatpush.msra.mxu0 0.0
      %1276 = vmatpush.msra.mxu0 0.0
      %1277 = vmatpush.msra.mxu0 0.0
      %1278 = vmatpush.msra.mxu0 0.0
      %1279 = vmatpush.msra.mxu0 0.0
      %1280 = vmatpush.msra.mxu0 %v1124
      %1281 = vmatpush.msra.mxu0 %v1123
      %1282 = vmatpush.msra.mxu0 %v1122
      %1283 = vmatpush.msra.mxu0 %v1121
      %1284 = vmatpush.msra.mxu0 %v1120
      %1285 = vmatpush.msra.mxu0 %v1119
      %1286 = vmatpush.msra.mxu0 %v1118
      %1287 = vmatpush.msra.mxu0 %v1117
      %1288 = vmatmul.f32.gmra.mxu0 %v1267
      %v1289 = vpop.f32.mrf.mxu0
      %v1290 = vadd.f32 0.0, %v1289
      %1291 = vmatmul.f32.gmra.mxu0 %v1270
      %v1292 = vpop.f32.mrf.mxu0
      %v1293 = vadd.f32 0.0, %v1292
      %1294 = vdwg.mxu0
      %v1295 = vmax.f32 %v1264, %v1290
      %v1296 = vmax.f32 %v1265, %v1293
      %v1298 = vsel %vm1143, %v1135, 0
      %v1301 = vsel %vm1143, %v1136, 0
      %1303 = vmatpush.msra.mxu0 0.0
      %1304 = vmatpush.msra.mxu0 0.0
      %1305 = vmatpush.msra.mxu0 0.0
      %1306 = vmatpush.msra.mxu0 0.0
      %1307 = vmatpush.msra.mxu0 0.0
      %1308 = vmatpush.msra.mxu0 0.0
      %1309 = vmatpush.msra.mxu0 0.0
      %1310 = vmatpush.msra.mxu0 0.0
      %1311 = vmatpush.msra.mxu0 %v1124
      %1312 = vmatpush.msra.mxu0 %v1123
      %1313 = vmatpush.msra.mxu0 %v1122
      %1314 = vmatpush.msra.mxu0 %v1121
      %1315 = vmatpush.msra.mxu0 %v1120
      %1316 = vmatpush.msra.mxu0 %v1119
      %1317 = vmatpush.msra.mxu0 %v1118
      %1318 = vmatpush.msra.mxu0 %v1117
      %1319 = vmatmul.f32.gmra.mxu0 %v1298
      %v1320 = vpop.f32.mrf.mxu0
      %v1321 = vadd.f32 0.0, %v1320
      %1322 = vmatmul.f32.gmra.mxu0 %v1301
      %v1323 = vpop.f32.mrf.mxu0
      %v1324 = vadd.f32 0.0, %v1323
      %1325 = vdwg.mxu0
      %v1326 = vmax.f32 %v1295, %v1321
      %v1327 = vmax.f32 %v1296, %v1324
      %v1329 = vsel %vm1143, %v1137, 0
      %v1332 = vsel %vm1143, %v1138, 0
      %1334 = vmatpush.msra.mxu0 0.0
      %1335 = vmatpush.msra.mxu0 0.0
      %1336 = vmatpush.msra.mxu0 0.0
      %1337 = vmatpush.msra.mxu0 0.0
      %1338 = vmatpush.msra.mxu0 0.0
      %1339 = vmatpush.msra.mxu0 0.0
      %1340 = vmatpush.msra.mxu0 0.0
      %1341 = vmatpush.msra.mxu0 0.0
      %1342 = vmatpush.msra.mxu0 %v1124
      %1343 = vmatpush.msra.mxu0 %v1123
      %1344 = vmatpush.msra.mxu0 %v1122
      %1345 = vmatpush.msra.mxu0 %v1121
      %1346 = vmatpush.msra.mxu0 %v1120
      %1347 = vmatpush.msra.mxu0 %v1119
      %1348 = vmatpush.msra.mxu0 %v1118
      %1349 = vmatpush.msra.mxu0 %v1117
      %1350 = vmatmul.f32.gmra.mxu0 %v1329
      %v1351 = vpop.f32.mrf.mxu0
      %v1352 = vadd.f32 0.0, %v1351
      %1353 = vmatmul.f32.gmra.mxu0 %v1332
      %v1354 = vpop.f32.mrf.mxu0
      %v1355 = vadd.f32 0.0, %v1354
      %1356 = vdwg.mxu0
      %v1357 = vmax.f32 %v1326, %v1352
      %v1358 = vmax.f32 %v1327, %v1355
      %v1360 = vsel %vm1143, %v1139, 0
      %v1363 = vsel %vm1143, %v1140, 0
      %1365 = vmatpush.msra.mxu0 0.0
      %1366 = vmatpush.msra.mxu0 0.0
      %1367 = vmatpush.msra.mxu0 0.0
      %1368 = vmatpush.msra.mxu0 0.0
      %1369 = vmatpush.msra.mxu0 0.0
      %1370 = vmatpush.msra.mxu0 0.0
      %1371 = vmatpush.msra.mxu0 0.0
      %1372 = vmatpush.msra.mxu0 0.0
      %1373 = vmatpush.msra.mxu0 %v1124
      %1374 = vmatpush.msra.mxu0 %v1123
      %1375 = vmatpush.msra.mxu0 %v1122
      %1376 = vmatpush.msra.mxu0 %v1121
      %1377 = vmatpush.msra.mxu0 %v1120
      %1378 = vmatpush.msra.mxu0 %v1119
      %1379 = vmatpush.msra.mxu0 %v1118
      %1380 = vmatpush.msra.mxu0 %v1117
      %1381 = vmatmul.f32.gmra.mxu0 %v1360
      %v1382 = vpop.f32.mrf.mxu0
      %v1383 = vadd.f32 0.0, %v1382
      %1384 = vmatmul.f32.gmra.mxu0 %v1363
      %v1385 = vpop.f32.mrf.mxu0
      %v1386 = vadd.f32 0.0, %v1385
      %1387 = vdwg.mxu0
      %v1388 = vmax.f32 %v1357, %v1383
      %v1389 = vmax.f32 %v1358, %v1386
      %v1391 = vsel %vm1143, %v1141, 0
      %v1394 = vsel %vm1143, %v1142, 0
      %1396 = vmatpush.msra.mxu0 0.0
      %1397 = vmatpush.msra.mxu0 0.0
      %1398 = vmatpush.msra.mxu0 0.0
      %1399 = vmatpush.msra.mxu0 0.0
      %1400 = vmatpush.msra.mxu0 0.0
      %1401 = vmatpush.msra.mxu0 0.0
      %1402 = vmatpush.msra.mxu0 0.0
      %1403 = vmatpush.msra.mxu0 0.0
      %1404 = vmatpush.msra.mxu0 %v1124
      %1405 = vmatpush.msra.mxu0 %v1123
      %1406 = vmatpush.msra.mxu0 %v1122
      %1407 = vmatpush.msra.mxu0 %v1121
      %1408 = vmatpush.msra.mxu0 %v1120
      %1409 = vmatpush.msra.mxu0 %v1119
      %1410 = vmatpush.msra.mxu0 %v1118
      %1411 = vmatpush.msra.mxu0 %v1117
      %1412 = vmatmul.f32.gmra.mxu0 %v1391
      %v1413 = vpop.f32.mrf.mxu0
      %v1414 = vadd.f32 0.0, %v1413
      %1415 = vmatmul.f32.gmra.mxu0 %v1394
      %v1416 = vpop.f32.mrf.mxu0
      %v1417 = vadd.f32 0.0, %v1416
      %1418 = vdwg.mxu0
      %v1419 = vmax.f32 %v1388, %v1414
      %v1420 = vmax.f32 %v1389, %v1417
      %v1421 = vld [vmem:[%s8] sm:$0x1]
      %v1422 = vpack.c.bf16 %v1420, %v1419
      %v1423 = vld [vmem:[%s7] sm:$0xff]
      %v1424 = vld [vmem:[%s7 + $0x8] sm:$0xff]
      %v1425 = vld [vmem:[%s7 + $0x10] sm:$0xf]
      %v1426 = vld [vmem:[%s7 + $0x14] sm:$0xff]
      %v1427 = vld [vmem:[%s7 + $0x1c] sm:$0xff]
      %v1428 = vld [vmem:[%s7 + $0x24] sm:$0xf]
      %v1429 = vld [vmem:[%s7 + $0x28] sm:$0xff]
      %v1430 = vld [vmem:[%s7 + $0x30] sm:$0xff]
      %v1431 = vld [vmem:[%s7 + $0x38] sm:$0xf]
      %v1432 = vld [vmem:[%s7 + $0x3c] sm:$0xff]
      %v1433 = vld [vmem:[%s7 + $0x44] sm:$0xff]
      %v1434 = vld [vmem:[%s7 + $0x4c] sm:$0xf]
      %v1435 = vld [vmem:[%s7 + $0x50] sm:$0xff]
      %v1436 = vld [vmem:[%s7 + $0x58] sm:$0xff]
      %v1437 = vld [vmem:[%s7 + $0x60] sm:$0xf]
      %v1438 = vld [vmem:[%s7 + $0x64] sm:$0xff]
      %v1439 = vld [vmem:[%s7 + $0x6c] sm:$0xff]
      %v1440 = vld [vmem:[%s7 + $0x74] sm:$0xf]
      %v1441 = vld [vmem:[%s7 + $0x78] sm:$0xff]
      %v1442 = vld [vmem:[%s7 + $0x80] sm:$0xff]
      %v1443 = vld [vmem:[%s7 + $0x88] sm:$0xf]
      %v1444 = vld [vmem:[%s7 + $0x8c] sm:$0xff]
      %v1445 = vld [vmem:[%s7 + $0x94] sm:$0xff]
      %v1446 = vld [vmem:[%s7 + $0x9c] sm:$0xf]
      %v1471 = vunpack.c.l.b16 %v1423
      %v1472 = vunpack.c.h.b16 %v1423
      %v1473 = vunpack.c.l.b16 %v1424
      %v1474 = vunpack.c.h.b16 %v1424
      %v1475 = vunpack.c.l.b16 %v1425
      %v1476 = vunpack.c.l.b16 %v1426
      %v1477 = vunpack.c.h.b16 %v1426
      %v1478 = vunpack.c.l.b16 %v1427
      %v1479 = vunpack.c.h.b16 %v1427
      %v1480 = vunpack.c.l.b16 %v1428
      %v1481 = vunpack.c.l.b16 %v1429
      %v1482 = vunpack.c.h.b16 %v1429
      %v1483 = vunpack.c.l.b16 %v1430
      %v1484 = vunpack.c.h.b16 %v1430
      %v1485 = vunpack.c.l.b16 %v1431
      %v1486 = vunpack.c.l.b16 %v1432
      %v1487 = vunpack.c.h.b16 %v1432
      %v1488 = vunpack.c.l.b16 %v1433
      %v1489 = vunpack.c.h.b16 %v1433
      %v1490 = vunpack.c.l.b16 %v1434
      %v1491 = vunpack.c.l.b16 %v1435
      %v1492 = vunpack.c.h.b16 %v1435
      %v1493 = vunpack.c.l.b16 %v1436
      %v1494 = vunpack.c.h.b16 %v1436
      %v1495 = vunpack.c.l.b16 %v1437
      %v1496 = vunpack.c.l.b16 %v1438
      %v1497 = vunpack.c.h.b16 %v1438
      %v1498 = vunpack.c.l.b16 %v1439
      %v1499 = vunpack.c.h.b16 %v1439
      %v1500 = vunpack.c.l.b16 %v1440
      %v1501 = vunpack.c.l.b16 %v1441
      %v1502 = vunpack.c.h.b16 %v1441
      %v1503 = vunpack.c.l.b16 %v1442
      %v1504 = vunpack.c.h.b16 %v1442
      %v1505 = vunpack.c.l.b16 %v1443
      %v1506 = vunpack.c.l.b16 %v1444
      %v1507 = vunpack.c.h.b16 %v1444
      %v1508 = vunpack.c.l.b16 %v1445
      %v1509 = vunpack.c.h.b16 %v1445
      %v1510 = vunpack.c.l.b16 %v1446
      %v1511 = vpack.c.b16 %v1476, %v1471
      %v1512 = vpack.c.b16 %v1477, %v1472
      %v1513 = vpack.c.b16 %v1478, %v1473
      %v1514 = vpack.c.b16 %v1479, %v1474
      %v1515 = vpack.c.b16 %v1480, %v1475
      %v1516 = vpack.c.b16 %v1486, %v1481
      %v1517 = vpack.c.b16 %v1487, %v1482
      %v1518 = vpack.c.b16 %v1488, %v1483
      %v1519 = vpack.c.b16 %v1489, %v1484
      %v1520 = vpack.c.b16 %v1490, %v1485
      %v1521 = vpack.c.b16 %v1496, %v1491
      %v1522 = vpack.c.b16 %v1497, %v1492
      %v1523 = vpack.c.b16 %v1498, %v1493
      %v1524 = vpack.c.b16 %v1499, %v1494
      %v1525 = vpack.c.b16 %v1500, %v1495
      %v1526 = vpack.c.b16 %v1506, %v1501
      %v1527 = vpack.c.b16 %v1507, %v1502
      %v1528 = vpack.c.b16 %v1508, %v1503
      %v1529 = vpack.c.b16 %v1509, %v1504
      %v1530 = vpack.c.b16 %v1510, %v1505
      %v1552 = vsel %vm1143, %v1422, 0
      %1554 = vmatpush.bf16.msra.mxu0 0
      %1555 = vmatpush.bf16.msra.mxu0 0
      %1556 = vmatpush.bf16.msra.mxu0 0
      %1557 = vmatpush.bf16.msra.mxu0 0
      %1558 = vmatpush.bf16.msra.mxu0 %v1526
      %1559 = vmatpush.bf16.msra.mxu0 %v1521
      %1560 = vmatpush.bf16.msra.mxu0 %v1516
      %1561 = vmatpush.bf16.msra.mxu0 %v1511
      %1562 = vmatmul.bf16.gmra.mxu0 %v1552
      %v1563 = vpop.f32.mrf.mxu0
      %v1564 = vadd.f32 0.0, %v1563
      %v1565 = vpop.f32.mrf.mxu0
      %v1566 = vadd.f32 0.0, %v1565
      %1567 = vdwg.mxu0
      %1568 = vmatpush.bf16.msra.mxu0 0
      %1569 = vmatpush.bf16.msra.mxu0 0
      %1570 = vmatpush.bf16.msra.mxu0 0
      %1571 = vmatpush.bf16.msra.mxu0 0
      %1572 = vmatpush.bf16.msra.mxu0 %v1527
      %1573 = vmatpush.bf16.msra.mxu0 %v1522
      %1574 = vmatpush.bf16.msra.mxu0 %v1517
      %1575 = vmatpush.bf16.msra.mxu0 %v1512
      %1576 = vmatmul.bf16.gmra.mxu0 %v1552
      %v1577 = vpop.f32.mrf.mxu0
      %v1578 = vadd.f32 0.0, %v1577
      %v1579 = vpop.f32.mrf.mxu0
      %v1580 = vadd.f32 0.0, %v1579
      %1581 = vdwg.mxu0
      %1582 = vmatpush.bf16.msra.mxu0 0
      %1583 = vmatpush.bf16.msra.mxu0 0
      %1584 = vmatpush.bf16.msra.mxu0 0
      %1585 = vmatpush.bf16.msra.mxu0 0
      %1586 = vmatpush.bf16.msra.mxu0 %v1528
      %1587 = vmatpush.bf16.msra.mxu0 %v1523
      %1588 = vmatpush.bf16.msra.mxu0 %v1518
      %1589 = vmatpush.bf16.msra.mxu0 %v1513
      %1590 = vmatmul.bf16.gmra.mxu0 %v1552
      %v1591 = vpop.f32.mrf.mxu0
      %v1592 = vadd.f32 0.0, %v1591
      %v1593 = vpop.f32.mrf.mxu0
      %v1594 = vadd.f32 0.0, %v1593
      %1595 = vdwg.mxu0
      %1596 = vmatpush.bf16.msra.mxu0 0
      %1597 = vmatpush.bf16.msra.mxu0 0
      %1598 = vmatpush.bf16.msra.mxu0 0
      %1599 = vmatpush.bf16.msra.mxu0 0
      %1600 = vmatpush.bf16.msra.mxu0 %v1529
      %1601 = vmatpush.bf16.msra.mxu0 %v1524
      %1602 = vmatpush.bf16.msra.mxu0 %v1519
      %1603 = vmatpush.bf16.msra.mxu0 %v1514
      %1604 = vmatmul.bf16.gmra.mxu0 %v1552
      %v1605 = vpop.f32.mrf.mxu0
      %v1606 = vadd.f32 0.0, %v1605
      %v1607 = vpop.f32.mrf.mxu0
      %v1608 = vadd.f32 0.0, %v1607
      %1609 = vdwg.mxu0
      %1610 = vmatpush.bf16.msra.mxu0 0
      %1611 = vmatpush.bf16.msra.mxu0 0
      %1612 = vmatpush.bf16.msra.mxu0 0
      %1613 = vmatpush.bf16.msra.mxu0 0
      %1614 = vmatpush.bf16.msra.mxu0 %v1530
      %1615 = vmatpush.bf16.msra.mxu0 %v1525
      %1616 = vmatpush.bf16.msra.mxu0 %v1520
      %1617 = vmatpush.bf16.msra.mxu0 %v1515
      %1618 = vmatmul.bf16.gmra.mxu0 %v1552
      %v1619 = vpop.f32.mrf.mxu0
      %v1620 = vadd.f32 0.0, %v1619
      %v1621 = vpop.f32.mrf.mxu0
      %v1622 = vadd.f32 0.0, %v1621
      %1623 = vdwg.mxu0
      %v1624 = vld [vmem:[%s6] sm:$0xff]
      %v1625 = vld [vmem:[%s6 + $0x8] sm:$0xff]
      %v1626 = vld [vmem:[%s6 + $0x10] sm:$0xff]
      %v1627 = vld [vmem:[%s6 + $0x18] sm:$0xff]
      %v1628 = vld [vmem:[%s6 + $0x20] sm:$0xf]
      %v1630 = vrot.slane %v1624, 4
      %1633 = vrot.lane.b32.xlu0 %v1564, 64
      %v1634 = vpop.permute.xlu0 %1633
      %1635 = vrot.lane.b32.xlu0 %v1566, 64
      %v1636 = vpop.permute.xlu0 %1635
      %vm1639 = vcmask 130048
      %v1640 = vsel %vm1639, %v1630, 0
      %1642 = vmatpush.msra.mxu0 0.0
      %1643 = vmatpush.msra.mxu0 0.0
      %1644 = vmatpush.msra.mxu0 0.0
      %1645 = vmatpush.msra.mxu0 0.0
      %1646 = vmatpush.msra.mxu0 0.0
      %1647 = vmatpush.msra.mxu0 0.0
      %1648 = vmatpush.msra.mxu0 0.0
      %1649 = vmatpush.msra.mxu0 0.0
      %1650 = vmatpush.msra.mxu0 0.0
      %1651 = vmatpush.msra.mxu0 0.0
      %1652 = vmatpush.msra.mxu0 0.0
      %1653 = vmatpush.msra.mxu0 0.0
      %1654 = vmatpush.msra.mxu0 0.0
      %1655 = vmatpush.msra.mxu0 0.0
      %1656 = vmatpush.msra.mxu0 %v1636
      %1657 = vmatpush.msra.mxu0 %v1634
      %1658 = vmatmul.f32.gmra.mxu0 %v1640
      %v1659 = vpop.f32.mrf.mxu0
      %v1660 = vadd.f32 0.0, %v1659
      %1661 = vdwg.mxu0
      %v1662 = vsel %vm1639, %v1624, 0
      %1664 = vmatpush.msra.mxu0 0.0
      %1665 = vmatpush.msra.mxu0 0.0
      %1666 = vmatpush.msra.mxu0 0.0
      %1667 = vmatpush.msra.mxu0 0.0
      %1668 = vmatpush.msra.mxu0 0.0
      %1669 = vmatpush.msra.mxu0 0.0
      %1670 = vmatpush.msra.mxu0 0.0
      %1671 = vmatpush.msra.mxu0 0.0
      %1672 = vmatpush.msra.mxu0 0.0
      %1673 = vmatpush.msra.mxu0 0.0
      %1674 = vmatpush.msra.mxu0 0.0
      %1675 = vmatpush.msra.mxu0 0.0
      %1676 = vmatpush.msra.mxu0 0.0
      %1677 = vmatpush.msra.mxu0 0.0
      %1678 = vmatpush.msra.mxu0 %v1566
      %1679 = vmatpush.msra.mxu0 %v1564
      %1680 = vmatmul.f32.gmra.mxu0 %v1662
      %v1681 = vpop.f32.mrf.mxu0
      %v1682 = vadd.f32 %v1660, %v1681
      %1683 = vdwg.mxu0
      %v1685 = vsel %vm1639, %v1625, 0
      %1687 = vmatpush.msra.mxu0 0.0
      %1688 = vmatpush.msra.mxu0 0.0
      %1689 = vmatpush.msra.mxu0 0.0
      %1690 = vmatpush.msra.mxu0 0.0
      %1691 = vmatpush.msra.mxu0 0.0
      %1692 = vmatpush.msra.mxu0 0.0
      %1693 = vmatpush.msra.mxu0 0.0
      %1694 = vmatpush.msra.mxu0 0.0
      %1695 = vmatpush.msra.mxu0 0.0
      %1696 = vmatpush.msra.mxu0 0.0
      %1697 = vmatpush.msra.mxu0 0.0
      %1698 = vmatpush.msra.mxu0 0.0
      %1699 = vmatpush.msra.mxu0 0.0
      %1700 = vmatpush.msra.mxu0 0.0
      %1701 = vmatpush.msra.mxu0 %v1580
      %1702 = vmatpush.msra.mxu0 %v1578
      %1703 = vmatmul.f32.gmra.mxu0 %v1685
      %v1704 = vpop.f32.mrf.mxu0
      %v1705 = vadd.f32 0.0, %v1704
      %1706 = vdwg.mxu0
      %v1707 = vadd.f32 %v1682, %v1705
      %v1708 = vrot.slane %v1625, 4
      %1711 = vrot.lane.b32.xlu0 %v1578, 64
      %v1712 = vpop.permute.xlu0 %1711
      %1713 = vrot.lane.b32.xlu0 %v1580, 64
      %v1714 = vpop.permute.xlu0 %1713
      %v1717 = vsel %vm1639, %v1708, 0
      %1719 = vmatpush.msra.mxu0 0.0
      %1720 = vmatpush.msra.mxu0 0.0
      %1721 = vmatpush.msra.mxu0 0.0
      %1722 = vmatpush.msra.mxu0 0.0
      %1723 = vmatpush.msra.mxu0 0.0
      %1724 = vmatpush.msra.mxu0 0.0
      %1725 = vmatpush.msra.mxu0 0.0
      %1726 = vmatpush.msra.mxu0 0.0
      %1727 = vmatpush.msra.mxu0 0.0
      %1728 = vmatpush.msra.mxu0 0.0
      %1729 = vmatpush.msra.mxu0 0.0
      %1730 = vmatpush.msra.mxu0 0.0
      %1731 = vmatpush.msra.mxu0 0.0
      %1732 = vmatpush.msra.mxu0 0.0
      %1733 = vmatpush.msra.mxu0 %v1714
      %1734 = vmatpush.msra.mxu0 %v1712
      %1735 = vmatmul.f32.gmra.mxu0 %v1717
      %v1736 = vpop.f32.mrf.mxu0
      %v1737 = vadd.f32 0.0, %v1736
      %1738 = vdwg.mxu0
      %v1739 = vadd.f32 %v1707, %v1737
      %v1741 = vsel %vm1639, %v1626, 0
      %1743 = vmatpush.msra.mxu0 0.0
      %1744 = vmatpush.msra.mxu0 0.0
      %1745 = vmatpush.msra.mxu0 0.0
      %1746 = vmatpush.msra.mxu0 0.0
      %1747 = vmatpush.msra.mxu0 0.0
      %1748 = vmatpush.msra.mxu0 0.0
      %1749 = vmatpush.msra.mxu0 0.0
      %1750 = vmatpush.msra.mxu0 0.0
      %1751 = vmatpush.msra.mxu0 0.0
      %1752 = vmatpush.msra.mxu0 0.0
      %1753 = vmatpush.msra.mxu0 0.0
      %1754 = vmatpush.msra.mxu0 0.0
      %1755 = vmatpush.msra.mxu0 0.0
      %1756 = vmatpush.msra.mxu0 0.0
      %1757 = vmatpush.msra.mxu0 %v1594
      %1758 = vmatpush.msra.mxu0 %v1592
      %1759 = vmatmul.f32.gmra.mxu0 %v1741
      %v1760 = vpop.f32.mrf.mxu0
      %v1761 = vadd.f32 0.0, %v1760
      %1762 = vdwg.mxu0
      %v1763 = vadd.f32 %v1739, %v1761
      %v1764 = vrot.slane %v1626, 4
      %1767 = vrot.lane.b32.xlu0 %v1592, 64
      %v1768 = vpop.permute.xlu0 %1767
      %1769 = vrot.lane.b32.xlu0 %v1594, 64
      %v1770 = vpop.permute.xlu0 %1769
      %v1773 = vsel %vm1639, %v1764, 0
      %1775 = vmatpush.msra.mxu0 0.0
      %1776 = vmatpush.msra.mxu0 0.0
      %1777 = vmatpush.msra.mxu0 0.0
      %1778 = vmatpush.msra.mxu0 0.0
      %1779 = vmatpush.msra.mxu0 0.0
      %1780 = vmatpush.msra.mxu0 0.0
      %1781 = vmatpush.msra.mxu0 0.0
      %1782 = vmatpush.msra.mxu0 0.0
      %1783 = vmatpush.msra.mxu0 0.0
      %1784 = vmatpush.msra.mxu0 0.0
      %1785 = vmatpush.msra.mxu0 0.0
      %1786 = vmatpush.msra.mxu0 0.0
      %1787 = vmatpush.msra.mxu0 0.0
      %1788 = vmatpush.msra.mxu0 0.0
      %1789 = vmatpush.msra.mxu0 %v1770
      %1790 = vmatpush.msra.mxu0 %v1768
      %1791 = vmatmul.f32.gmra.mxu0 %v1773
      %v1792 = vpop.f32.mrf.mxu0
      %v1793 = vadd.f32 0.0, %v1792
      %1794 = vdwg.mxu0
      %v1795 = vadd.f32 %v1763, %v1793
      %v1797 = vsel %vm1639, %v1627, 0
      %1799 = vmatpush.msra.mxu0 0.0
      %1800 = vmatpush.msra.mxu0 0.0
      %1801 = vmatpush.msra.mxu0 0.0
      %1802 = vmatpush.msra.mxu0 0.0
      %1803 = vmatpush.msra.mxu0 0.0
      %1804 = vmatpush.msra.mxu0 0.0
      %1805 = vmatpush.msra.mxu0 0.0
      %1806 = vmatpush.msra.mxu0 0.0
      %1807 = vmatpush.msra.mxu0 0.0
      %1808 = vmatpush.msra.mxu0 0.0
      %1809 = vmatpush.msra.mxu0 0.0
      %1810 = vmatpush.msra.mxu0 0.0
      %1811 = vmatpush.msra.mxu0 0.0
      %1812 = vmatpush.msra.mxu0 0.0
      %1813 = vmatpush.msra.mxu0 %v1608
      %1814 = vmatpush.msra.mxu0 %v1606
      %1815 = vmatmul.f32.gmra.mxu0 %v1797
      %v1816 = vpop.f32.mrf.mxu0
      %v1817 = vadd.f32 0.0, %v1816
      %1818 = vdwg.mxu0
      %v1819 = vadd.f32 %v1795, %v1817
      %v1820 = vrot.slane %v1627, 4
      %1823 = vrot.lane.b32.xlu0 %v1606, 64
      %v1824 = vpop.permute.xlu0 %1823
      %1825 = vrot.lane.b32.xlu0 %v1608, 64
      %v1826 = vpop.permute.xlu0 %1825
      %v1829 = vsel %vm1639, %v1820, 0
      %1831 = vmatpush.msra.mxu0 0.0
      %1832 = vmatpush.msra.mxu0 0.0
      %1833 = vmatpush.msra.mxu0 0.0
      %1834 = vmatpush.msra.mxu0 0.0
      %1835 = vmatpush.msra.mxu0 0.0
      %1836 = vmatpush.msra.mxu0 0.0
      %1837 = vmatpush.msra.mxu0 0.0
      %1838 = vmatpush.msra.mxu0 0.0
      %1839 = vmatpush.msra.mxu0 0.0
      %1840 = vmatpush.msra.mxu0 0.0
      %1841 = vmatpush.msra.mxu0 0.0
      %1842 = vmatpush.msra.mxu0 0.0
      %1843 = vmatpush.msra.mxu0 0.0
      %1844 = vmatpush.msra.mxu0 0.0
      %1845 = vmatpush.msra.mxu0 %v1826
      %1846 = vmatpush.msra.mxu0 %v1824
      %1847 = vmatmul.f32.gmra.mxu0 %v1829
      %v1848 = vpop.f32.mrf.mxu0
      %v1849 = vadd.f32 0.0, %v1848
      %1850 = vdwg.mxu0
      %v1851 = vadd.f32 %v1819, %v1849
      %v1853 = vsel %vm1639, %v1628, 0
      %1855 = vmatpush.msra.mxu0 0.0
      %1856 = vmatpush.msra.mxu0 0.0
      %1857 = vmatpush.msra.mxu0 0.0
      %1858 = vmatpush.msra.mxu0 0.0
      %1859 = vmatpush.msra.mxu0 0.0
      %1860 = vmatpush.msra.mxu0 0.0
      %1861 = vmatpush.msra.mxu0 0.0
      %1862 = vmatpush.msra.mxu0 0.0
      %1863 = vmatpush.msra.mxu0 0.0
      %1864 = vmatpush.msra.mxu0 0.0
      %1865 = vmatpush.msra.mxu0 0.0
      %1866 = vmatpush.msra.mxu0 0.0
      %1867 = vmatpush.msra.mxu0 0.0
      %1868 = vmatpush.msra.mxu0 0.0
      %1869 = vmatpush.msra.mxu0 %v1622
      %1870 = vmatpush.msra.mxu0 %v1620
      %1871 = vmatmul.f32.gmra.mxu0 %v1853
      %v1872 = vpop.f32.mrf.mxu0
      %v1873 = vadd.f32 0.0, %v1872
      %1874 = vdwg.mxu0
      %v1875 = vadd.f32 %v1851, %v1873
      %v1877 = vperm.slane %v1421, 0
      %v1879 = vadd.f32 %v1875, %v1877
      %v1880 = vmax.f32 %v1879, 0.0
      %v1881 = vld [vmem:[%s11] sm:$0x1]
      %v1882 = vpack.c.bf16 %v1880, %v1880
      %v1883 = vld [vmem:[%s10] sm:$0xff]
      %v1884 = vld [vmem:[%s10 + $0x8] sm:$0xff]
      %v1885 = vld [vmem:[%s10 + $0x10] sm:$0xf]
      %v1886 = vld [vmem:[%s10 + $0x14] sm:$0xff]
      %v1887 = vld [vmem:[%s10 + $0x1c] sm:$0xff]
      %v1888 = vld [vmem:[%s10 + $0x24] sm:$0xf]
      %v1889 = vld [vmem:[%s10 + $0x28] sm:$0xff]
      %v1890 = vld [vmem:[%s10 + $0x30] sm:$0xff]
      %v1891 = vld [vmem:[%s10 + $0x38] sm:$0xf]
      %v1892 = vld [vmem:[%s10 + $0x3c] sm:$0xff]
      %v1893 = vld [vmem:[%s10 + $0x44] sm:$0xff]
      %v1894 = vld [vmem:[%s10 + $0x4c] sm:$0xf]
      %v1895 = vld [vmem:[%s10 + $0x50] sm:$0xff]
      %v1896 = vld [vmem:[%s10 + $0x58] sm:$0xff]
      %v1897 = vld [vmem:[%s10 + $0x60] sm:$0xf]
      %v1898 = vld [vmem:[%s10 + $0x64] sm:$0xff]
      %v1899 = vld [vmem:[%s10 + $0x6c] sm:$0xff]
      %v1900 = vld [vmem:[%s10 + $0x74] sm:$0xf]
      %v1901 = vld [vmem:[%s10 + $0x78] sm:$0xff]
      %v1902 = vld [vmem:[%s10 + $0x80] sm:$0xff]
      %v1903 = vld [vmem:[%s10 + $0x88] sm:$0xf]
      %v1904 = vld [vmem:[%s10 + $0x8c] sm:$0xff]
      %v1905 = vld [vmem:[%s10 + $0x94] sm:$0xff]
      %v1906 = vld [vmem:[%s10 + $0x9c] sm:$0xf]
      %v1931 = vunpack.c.l.b16 %v1883
      %v1932 = vunpack.c.h.b16 %v1883
      %v1933 = vunpack.c.l.b16 %v1884
      %v1934 = vunpack.c.h.b16 %v1884
      %v1935 = vunpack.c.l.b16 %v1885
      %v1936 = vunpack.c.l.b16 %v1886
      %v1937 = vunpack.c.h.b16 %v1886
      %v1938 = vunpack.c.l.b16 %v1887
      %v1939 = vunpack.c.h.b16 %v1887
      %v1940 = vunpack.c.l.b16 %v1888
      %v1941 = vunpack.c.l.b16 %v1889
      %v1942 = vunpack.c.h.b16 %v1889
      %v1943 = vunpack.c.l.b16 %v1890
      %v1944 = vunpack.c.h.b16 %v1890
      %v1945 = vunpack.c.l.b16 %v1891
      %v1946 = vunpack.c.l.b16 %v1892
      %v1947 = vunpack.c.h.b16 %v1892
      %v1948 = vunpack.c.l.b16 %v1893
      %v1949 = vunpack.c.h.b16 %v1893
      %v1950 = vunpack.c.l.b16 %v1894
      %v1951 = vunpack.c.l.b16 %v1895
      %v1952 = vunpack.c.h.b16 %v1895
      %v1953 = vunpack.c.l.b16 %v1896
      %v1954 = vunpack.c.h.b16 %v1896
      %v1955 = vunpack.c.l.b16 %v1897
      %v1956 = vunpack.c.l.b16 %v1898
      %v1957 = vunpack.c.h.b16 %v1898
      %v1958 = vunpack.c.l.b16 %v1899
      %v1959 = vunpack.c.h.b16 %v1899
      %v1960 = vunpack.c.l.b16 %v1900
      %v1961 = vunpack.c.l.b16 %v1901
      %v1962 = vunpack.c.h.b16 %v1901
      %v1963 = vunpack.c.l.b16 %v1902
      %v1964 = vunpack.c.h.b16 %v1902
      %v1965 = vunpack.c.l.b16 %v1903
      %v1966 = vunpack.c.l.b16 %v1904
      %v1967 = vunpack.c.h.b16 %v1904
      %v1968 = vunpack.c.l.b16 %v1905
      %v1969 = vunpack.c.h.b16 %v1905
      %v1970 = vunpack.c.l.b16 %v1906
      %v1971 = vpack.c.b16 %v1936, %v1931
      %v1972 = vpack.c.b16 %v1937, %v1932
      %v1973 = vpack.c.b16 %v1938, %v1933
      %v1974 = vpack.c.b16 %v1939, %v1934
      %v1975 = vpack.c.b16 %v1940, %v1935
      %v1976 = vpack.c.b16 %v1946, %v1941
      %v1977 = vpack.c.b16 %v1947, %v1942
      %v1978 = vpack.c.b16 %v1948, %v1943
      %v1979 = vpack.c.b16 %v1949, %v1944
      %v1980 = vpack.c.b16 %v1950, %v1945
      %v1981 = vpack.c.b16 %v1956, %v1951
      %v1982 = vpack.c.b16 %v1957, %v1952
      %v1983 = vpack.c.b16 %v1958, %v1953
      %v1984 = vpack.c.b16 %v1959, %v1954
      %v1985 = vpack.c.b16 %v1960, %v1955
      %v1986 = vpack.c.b16 %v1966, %v1961
      %v1987 = vpack.c.b16 %v1967, %v1962
      %v1988 = vpack.c.b16 %v1968, %v1963
      %v1989 = vpack.c.b16 %v1969, %v1964
      %v1990 = vpack.c.b16 %v1970, %v1965
      %v2012 = vsel %vm1143, %v1882, 0
      %2014 = vmatpush.bf16.msra.mxu0 0
      %2015 = vmatpush.bf16.msra.mxu0 0
      %2016 = vmatpush.bf16.msra.mxu0 0
      %2017 = vmatpush.bf16.msra.mxu0 0
      %2018 = vmatpush.bf16.msra.mxu0 %v1986
      %2019 = vmatpush.bf16.msra.mxu0 %v1981
      %2020 = vmatpush.bf16.msra.mxu0 %v1976
      %2021 = vmatpush.bf16.msra.mxu0 %v1971
      %2022 = vmatmul.bf16.gmra.mxu0 %v2012
      %v2023 = vpop.f32.mrf.mxu0
      %v2024 = vadd.f32 0.0, %v2023
      %v2025 = vpop.f32.mrf.mxu0
      %2026 = vdwg.mxu0
      %2027 = vmatpush.bf16.msra.mxu0 0
      %2028 = vmatpush.bf16.msra.mxu0 0
      %2029 = vmatpush.bf16.msra.mxu0 0
      %2030 = vmatpush.bf16.msra.mxu0 0
      %2031 = vmatpush.bf16.msra.mxu0 %v1987
      %2032 = vmatpush.bf16.msra.mxu0 %v1982
      %2033 = vmatpush.bf16.msra.mxu0 %v1977
      %2034 = vmatpush.bf16.msra.mxu0 %v1972
      %2035 = vmatmul.bf16.gmra.mxu0 %v2012
      %v2036 = vpop.f32.mrf.mxu0
      %v2037 = vadd.f32 0.0, %v2036
      %v2038 = vpop.f32.mrf.mxu0
      %2039 = vdwg.mxu0
      %2040 = vmatpush.bf16.msra.mxu0 0
      %2041 = vmatpush.bf16.msra.mxu0 0
      %2042 = vmatpush.bf16.msra.mxu0 0
      %2043 = vmatpush.bf16.msra.mxu0 0
      %2044 = vmatpush.bf16.msra.mxu0 %v1988
      %2045 = vmatpush.bf16.msra.mxu0 %v1983
      %2046 = vmatpush.bf16.msra.mxu0 %v1978
      %2047 = vmatpush.bf16.msra.mxu0 %v1973
      %2048 = vmatmul.bf16.gmra.mxu0 %v2012
      %v2049 = vpop.f32.mrf.mxu0
      %v2050 = vadd.f32 0.0, %v2049
      %v2051 = vpop.f32.mrf.mxu0
      %2052 = vdwg.mxu0
      %2053 = vmatpush.bf16.msra.mxu0 0
      %2054 = vmatpush.bf16.msra.mxu0 0
      %2055 = vmatpush.bf16.msra.mxu0 0
      %2056 = vmatpush.bf16.msra.mxu0 0
      %2057 = vmatpush.bf16.msra.mxu0 %v1989
      %2058 = vmatpush.bf16.msra.mxu0 %v1984
      %2059 = vmatpush.bf16.msra.mxu0 %v1979
      %2060 = vmatpush.bf16.msra.mxu0 %v1974
      %2061 = vmatmul.bf16.gmra.mxu0 %v2012
      %v2062 = vpop.f32.mrf.mxu0
      %v2063 = vadd.f32 0.0, %v2062
      %v2064 = vpop.f32.mrf.mxu0
      %2065 = vdwg.mxu0
      %2066 = vmatpush.bf16.msra.mxu0 0
      %2067 = vmatpush.bf16.msra.mxu0 0
      %2068 = vmatpush.bf16.msra.mxu0 0
      %2069 = vmatpush.bf16.msra.mxu0 0
      %2070 = vmatpush.bf16.msra.mxu0 %v1990
      %2071 = vmatpush.bf16.msra.mxu0 %v1985
      %2072 = vmatpush.bf16.msra.mxu0 %v1980
      %2073 = vmatpush.bf16.msra.mxu0 %v1975
      %2074 = vmatmul.bf16.gmra.mxu0 %v2012
      %v2075 = vpop.f32.mrf.mxu0
      %v2076 = vadd.f32 0.0, %v2075
      %v2077 = vpop.f32.mrf.mxu0
      %2078 = vdwg.mxu0
      %v2079 = vld [vmem:[%s9] sm:$0xff]
      %v2080 = vld [vmem:[%s9 + $0x8] sm:$0xff]
      %v2081 = vld [vmem:[%s9 + $0x10] sm:$0xff]
      %v2082 = vld [vmem:[%s9 + $0x18] sm:$0xff]
      %v2083 = vld [vmem:[%s9 + $0x20] sm:$0xf]
      %v2085 = vrot.slane %v2079, 4
      %2087 = vrot.lane.b32.xlu0 %v2024, 64
      %v2088 = vpop.permute.xlu0 %2087
      %vm2089 = vcmask 31744
      %v2090 = vsel %vm2089, %v2085, 0
      %vm2092 = vcmask 1043456
      %v2093 = vsel %vm2092, %v2088, 0
      %2095 = vmatpush.msra.mxu0 0.0
      %2096 = vmatpush.msra.mxu0 0.0
      %2097 = vmatpush.msra.mxu0 0.0
      %2098 = vmatpush.msra.mxu0 0.0
      %2099 = vmatpush.msra.mxu0 0.0
      %2100 = vmatpush.msra.mxu0 0.0
      %2101 = vmatpush.msra.mxu0 0.0
      %2102 = vmatpush.msra.mxu0 0.0
      %2103 = vmatpush.msra.mxu0 0.0
      %2104 = vmatpush.msra.mxu0 0.0
      %2105 = vmatpush.msra.mxu0 0.0
      %2106 = vmatpush.msra.mxu0 0.0
      %2107 = vmatpush.msra.mxu0 0.0
      %2108 = vmatpush.msra.mxu0 0.0
      %2109 = vmatpush.msra.mxu0 0.0
      %2110 = vmatpush.msra.mxu0 %v2093
      %2111 = vmatmul.f32.gmra.mxu0 %v2090
      %v2112 = vpop.f32.mrf.mxu0
      %v2113 = vadd.f32 0.0, %v2112
      %2114 = vdwg.mxu0
      %v2115 = vsel %vm2089, %v2079, 0
      %v2117 = vsel %vm2092, %v2024, 0
      %2119 = vmatpush.msra.mxu0 0.0
      %2120 = vmatpush.msra.mxu0 0.0
      %2121 = vmatpush.msra.mxu0 0.0
      %2122 = vmatpush.msra.mxu0 0.0
      %2123 = vmatpush.msra.mxu0 0.0
      %2124 = vmatpush.msra.mxu0 0.0
      %2125 = vmatpush.msra.mxu0 0.0
      %2126 = vmatpush.msra.mxu0 0.0
      %2127 = vmatpush.msra.mxu0 0.0
      %2128 = vmatpush.msra.mxu0 0.0
      %2129 = vmatpush.msra.mxu0 0.0
      %2130 = vmatpush.msra.mxu0 0.0
      %2131 = vmatpush.msra.mxu0 0.0
      %2132 = vmatpush.msra.mxu0 0.0
      %2133 = vmatpush.msra.mxu0 0.0
      %2134 = vmatpush.msra.mxu0 %v2117
      %2135 = vmatmul.f32.gmra.mxu0 %v2115
      %v2136 = vpop.f32.mrf.mxu0
      %v2137 = vadd.f32 %v2113, %v2136
      %2138 = vdwg.mxu0
      %v2140 = vsel %vm2089, %v2080, 0
      %v2143 = vsel %vm2092, %v2037, 0
      %2145 = vmatpush.msra.mxu0 0.0
      %2146 = vmatpush.msra.mxu0 0.0
      %2147 = vmatpush.msra.mxu0 0.0
      %2148 = vmatpush.msra.mxu0 0.0
      %2149 = vmatpush.msra.mxu0 0.0
      %2150 = vmatpush.msra.mxu0 0.0
      %2151 = vmatpush.msra.mxu0 0.0
      %2152 = vmatpush.msra.mxu0 0.0
      %2153 = vmatpush.msra.mxu0 0.0
      %2154 = vmatpush.msra.mxu0 0.0
      %2155 = vmatpush.msra.mxu0 0.0
      %2156 = vmatpush.msra.mxu0 0.0
      %2157 = vmatpush.msra.mxu0 0.0
      %2158 = vmatpush.msra.mxu0 0.0
      %2159 = vmatpush.msra.mxu0 0.0
      %2160 = vmatpush.msra.mxu0 %v2143
      %2161 = vmatmul.f32.gmra.mxu0 %v2140
      %v2162 = vpop.f32.mrf.mxu0
      %v2163 = vadd.f32 0.0, %v2162
      %2164 = vdwg.mxu0
      %v2165 = vadd.f32 %v2137, %v2163
      %v2166 = vrot.slane %v2080, 4
      %2167 = vrot.lane.b32.xlu0 %v2037, 64
      %v2168 = vpop.permute.xlu0 %2167
      %v2169 = vsel %vm2089, %v2166, 0
      %v2171 = vsel %vm2092, %v2168, 0
      %2173 = vmatpush.msra.mxu0 0.0
      %2174 = vmatpush.msra.mxu0 0.0
      %2175 = vmatpush.msra.mxu0 0.0
      %2176 = vmatpush.msra.mxu0 0.0
      %2177 = vmatpush.msra.mxu0 0.0
      %2178 = vmatpush.msra.mxu0 0.0
      %2179 = vmatpush.msra.mxu0 0.0
      %2180 = vmatpush.msra.mxu0 0.0
      %2181 = vmatpush.msra.mxu0 0.0
      %2182 = vmatpush.msra.mxu0 0.0
      %2183 = vmatpush.msra.mxu0 0.0
      %2184 = vmatpush.msra.mxu0 0.0
      %2185 = vmatpush.msra.mxu0 0.0
      %2186 = vmatpush.msra.mxu0 0.0
      %2187 = vmatpush.msra.mxu0 0.0
      %2188 = vmatpush.msra.mxu0 %v2171
      %2189 = vmatmul.f32.gmra.mxu0 %v2169
      %v2190 = vpop.f32.mrf.mxu0
      %v2191 = vadd.f32 0.0, %v2190
      %2192 = vdwg.mxu0
      %v2193 = vadd.f32 %v2165, %v2191
      %v2195 = vsel %vm2089, %v2081, 0
      %v2198 = vsel %vm2092, %v2050, 0
      %2200 = vmatpush.msra.mxu0 0.0
      %2201 = vmatpush.msra.mxu0 0.0
      %2202 = vmatpush.msra.mxu0 0.0
      %2203 = vmatpush.msra.mxu0 0.0
      %2204 = vmatpush.msra.mxu0 0.0
      %2205 = vmatpush.msra.mxu0 0.0
      %2206 = vmatpush.msra.mxu0 0.0
      %2207 = vmatpush.msra.mxu0 0.0
      %2208 = vmatpush.msra.mxu0 0.0
      %2209 = vmatpush.msra.mxu0 0.0
      %2210 = vmatpush.msra.mxu0 0.0
      %2211 = vmatpush.msra.mxu0 0.0
      %2212 = vmatpush.msra.mxu0 0.0
      %2213 = vmatpush.msra.mxu0 0.0
      %2214 = vmatpush.msra.mxu0 0.0
      %2215 = vmatpush.msra.mxu0 %v2198
      %2216 = vmatmul.f32.gmra.mxu0 %v2195
      %v2217 = vpop.f32.mrf.mxu0
      %v2218 = vadd.f32 0.0, %v2217
      %2219 = vdwg.mxu0
      %v2220 = vadd.f32 %v2193, %v2218
      %v2221 = vrot.slane %v2081, 4
      %2222 = vrot.lane.b32.xlu0 %v2050, 64
      %v2223 = vpop.permute.xlu0 %2222
      %v2224 = vsel %vm2089, %v2221, 0
      %v2226 = vsel %vm2092, %v2223, 0
      %2228 = vmatpush.msra.mxu0 0.0
      %2229 = vmatpush.msra.mxu0 0.0
      %2230 = vmatpush.msra.mxu0 0.0
      %2231 = vmatpush.msra.mxu0 0.0
      %2232 = vmatpush.msra.mxu0 0.0
      %2233 = vmatpush.msra.mxu0 0.0
      %2234 = vmatpush.msra.mxu0 0.0
      %2235 = vmatpush.msra.mxu0 0.0
      %2236 = vmatpush.msra.mxu0 0.0
      %2237 = vmatpush.msra.mxu0 0.0
      %2238 = vmatpush.msra.mxu0 0.0
      %2239 = vmatpush.msra.mxu0 0.0
      %2240 = vmatpush.msra.mxu0 0.0
      %2241 = vmatpush.msra.mxu0 0.0
      %2242 = vmatpush.msra.mxu0 0.0
      %2243 = vmatpush.msra.mxu0 %v2226
      %2244 = vmatmul.f32.gmra.mxu0 %v2224
      %v2245 = vpop.f32.mrf.mxu0
      %v2246 = vadd.f32 0.0, %v2245
      %2247 = vdwg.mxu0
      %v2248 = vadd.f32 %v2220, %v2246
      %v2250 = vsel %vm2089, %v2082, 0
      %v2253 = vsel %vm2092, %v2063, 0
      %2255 = vmatpush.msra.mxu0 0.0
      %2256 = vmatpush.msra.mxu0 0.0
      %2257 = vmatpush.msra.mxu0 0.0
      %2258 = vmatpush.msra.mxu0 0.0
      %2259 = vmatpush.msra.mxu0 0.0
      %2260 = vmatpush.msra.mxu0 0.0
      %2261 = vmatpush.msra.mxu0 0.0
      %2262 = vmatpush.msra.mxu0 0.0
      %2263 = vmatpush.msra.mxu0 0.0
      %2264 = vmatpush.msra.mxu0 0.0
      %2265 = vmatpush.msra.mxu0 0.0
      %2266 = vmatpush.msra.mxu0 0.0
      %2267 = vmatpush.msra.mxu0 0.0
      %2268 = vmatpush.msra.mxu0 0.0
      %2269 = vmatpush.msra.mxu0 0.0
      %2270 = vmatpush.msra.mxu0 %v2253
      %2271 = vmatmul.f32.gmra.mxu0 %v2250
      %v2272 = vpop.f32.mrf.mxu0
      %v2273 = vadd.f32 0.0, %v2272
      %2274 = vdwg.mxu0
      %v2275 = vadd.f32 %v2248, %v2273
      %v2276 = vrot.slane %v2082, 4
      %2277 = vrot.lane.b32.xlu0 %v2063, 64
      %v2278 = vpop.permute.xlu0 %2277
      %v2279 = vsel %vm2089, %v2276, 0
      %v2281 = vsel %vm2092, %v2278, 0
      %2283 = vmatpush.msra.mxu0 0.0
      %2284 = vmatpush.msra.mxu0 0.0
      %2285 = vmatpush.msra.mxu0 0.0
      %2286 = vmatpush.msra.mxu0 0.0
      %2287 = vmatpush.msra.mxu0 0.0
      %2288 = vmatpush.msra.mxu0 0.0
      %2289 = vmatpush.msra.mxu0 0.0
      %2290 = vmatpush.msra.mxu0 0.0
      %2291 = vmatpush.msra.mxu0 0.0
      %2292 = vmatpush.msra.mxu0 0.0
      %2293 = vmatpush.msra.mxu0 0.0
      %2294 = vmatpush.msra.mxu0 0.0
      %2295 = vmatpush.msra.mxu0 0.0
      %2296 = vmatpush.msra.mxu0 0.0
      %2297 = vmatpush.msra.mxu0 0.0
      %2298 = vmatpush.msra.mxu0 %v2281
      %2299 = vmatmul.f32.gmra.mxu0 %v2279
      %v2300 = vpop.f32.mrf.mxu0
      %v2301 = vadd.f32 0.0, %v2300
      %2302 = vdwg.mxu0
      %v2303 = vadd.f32 %v2275, %v2301
      %v2305 = vsel %vm2089, %v2083, 0
      %v2308 = vsel %vm2092, %v2076, 0
      %2310 = vmatpush.msra.mxu0 0.0
      %2311 = vmatpush.msra.mxu0 0.0
      %2312 = vmatpush.msra.mxu0 0.0
      %2313 = vmatpush.msra.mxu0 0.0
      %2314 = vmatpush.msra.mxu0 0.0
      %2315 = vmatpush.msra.mxu0 0.0
      %2316 = vmatpush.msra.mxu0 0.0
      %2317 = vmatpush.msra.mxu0 0.0
      %2318 = vmatpush.msra.mxu0 0.0
      %2319 = vmatpush.msra.mxu0 0.0
      %2320 = vmatpush.msra.mxu0 0.0
      %2321 = vmatpush.msra.mxu0 0.0
      %2322 = vmatpush.msra.mxu0 0.0
      %2323 = vmatpush.msra.mxu0 0.0
      %2324 = vmatpush.msra.mxu0 0.0
      %2325 = vmatpush.msra.mxu0 %v2308
      %2326 = vmatmul.f32.gmra.mxu0 %v2305
      %v2327 = vpop.f32.mrf.mxu0
      %v2328 = vadd.f32 0.0, %v2327
      %2329 = vdwg.mxu0
      %v2330 = vadd.f32 %v2303, %v2328
      %v2332 = vperm.slane %v1881, 0
      %v2334 = vadd.f32 %v2330, %v2332
      %v2335 = vld [vmem:[%s12] sm:$0xf]
      %v2337 = vsel %vm1639, %v2335, 0
      %2339 = vmatpush.msra.mxu0 0.0
      %2340 = vmatpush.msra.mxu0 0.0
      %2341 = vmatpush.msra.mxu0 0.0
      %2342 = vmatpush.msra.mxu0 0.0
      %2343 = vmatpush.msra.mxu0 0.0
      %2344 = vmatpush.msra.mxu0 0.0
      %2345 = vmatpush.msra.mxu0 0.0
      %2346 = vmatpush.msra.mxu0 0.0
      %2347 = vmatpush.msra.mxu0 0.0
      %2348 = vmatpush.msra.mxu0 0.0
      %2349 = vmatpush.msra.mxu0 0.0
      %2350 = vmatpush.msra.mxu0 0.0
      %2351 = vmatpush.msra.mxu0 0.0
      %2352 = vmatpush.msra.mxu0 0.0
      %2353 = vmatpush.msra.mxu0 %v1420
      %2354 = vmatpush.msra.mxu0 %v1419
      %2355 = vmatmul.f32.gmra.mxu0 %v2337
      %v2356 = vpop.f32.mrf.mxu0
      %v2357 = vadd.f32 0.0, %v2356
      %2358 = vdwg.mxu0
      %v2359 = vpack.c.bf16 %v2357, %v2357
      %v2360 = vld [vmem:[%s13] sm:$0xf]
      %v2361 = vld [vmem:[%s13 + $0x4] sm:$0xf]
      %v2362 = vld [vmem:[%s13 + $0x8] sm:$0xf]
      %v2363 = vld [vmem:[%s13 + $0xc] sm:$0xf]
      %v2364 = vld [vmem:[%s13 + $0x10] sm:$0xf]
      %v2365 = vld [vmem:[%s13 + $0x14] sm:$0xf]
      %v2366 = vld [vmem:[%s13 + $0x18] sm:$0xf]
      %v2367 = vld [vmem:[%s13 + $0x1c] sm:$0xf]
      %v2376 = vunpack.c.l.b16 %v2360
      %v2377 = vunpack.c.l.b16 %v2361
      %v2378 = vunpack.c.l.b16 %v2362
      %v2379 = vunpack.c.l.b16 %v2363
      %v2380 = vunpack.c.l.b16 %v2364
      %v2381 = vunpack.c.l.b16 %v2365
      %v2382 = vunpack.c.l.b16 %v2366
      %v2383 = vunpack.c.l.b16 %v2367
      %v2384 = vpack.c.b16 %v2377, %v2376
      %v2385 = vpack.c.b16 %v2379, %v2378
      %v2386 = vpack.c.b16 %v2381, %v2380
      %v2387 = vpack.c.b16 %v2383, %v2382
      %v2393 = vsel %vm1143, %v2359, 0
      %2395 = vmatpush.bf16.msra.mxu0 0
      %2396 = vmatpush.bf16.msra.mxu0 0
      %2397 = vmatpush.bf16.msra.mxu0 0
      %2398 = vmatpush.bf16.msra.mxu0 0
      %2399 = vmatpush.bf16.msra.mxu0 %v2387
      %2400 = vmatpush.bf16.msra.mxu0 %v2386
      %2401 = vmatpush.bf16.msra.mxu0 %v2385
      %2402 = vmatpush.bf16.msra.mxu0 %v2384
      %2403 = vmatmul.bf16.gmra.mxu0 %v2393
      %v2404 = vpop.f32.mrf.mxu0
      %v2405 = vadd.f32 0.0, %v2404
      %v2406 = vpop.f32.mrf.mxu0
      %2407 = vdwg.mxu0
      %v2408 = vadd.f32 %v2334, %v2405
      %v2409 = vmax.f32 %v2408, 0.0
      %v2410 = vld [vmem:[%s16] sm:$0x1]
      %v2411 = vpack.c.bf16 %v2409, %v2409
      %v2412 = vld [vmem:[%s15 + $0x10] sm:$0xff]
      %v2413 = vld [vmem:[%s15 + $0x18] sm:$0xff]
      %v2414 = vld [vmem:[%s15 + $0x20] sm:$0xf]
      %v2415 = vld [vmem:[%s15 + $0x34] sm:$0xff]
      %v2416 = vld [vmem:[%s15 + $0x3c] sm:$0xff]
      %v2417 = vld [vmem:[%s15 + $0x44] sm:$0xf]
      %v2418 = vld [vmem:[%s15 + $0x58] sm:$0xff]
      %v2419 = vld [vmem:[%s15 + $0x60] sm:$0xff]
      %v2420 = vld [vmem:[%s15 + $0x68] sm:$0xf]
      %v2421 = vld [vmem:[%s15 + $0x7c] sm:$0xff]
      %v2422 = vld [vmem:[%s15 + $0x84] sm:$0xff]
      %v2423 = vld [vmem:[%s15 + $0x8c] sm:$0xf]
      %v2424 = vld [vmem:[%s15 + $0xa0] sm:$0xff]
      %v2425 = vld [vmem:[%s15 + $0xa8] sm:$0xff]
      %v2426 = vld [vmem:[%s15 + $0xb0] sm:$0xf]
      %v2427 = vld [vmem:[%s15 + $0xc4] sm:$0xff]
      %v2428 = vld [vmem:[%s15 + $0xcc] sm:$0xff]
      %v2429 = vld [vmem:[%s15 + $0xd4] sm:$0xf]
      %v2430 = vld [vmem:[%s15 + $0xe8] sm:$0xff]
      %v2431 = vld [vmem:[%s15 + $0xf0] sm:$0xff]
      %v2432 = vld [vmem:[%s15 + $0xf8] sm:$0xf]
      %v2433 = vld [vmem:[%s15 + $0x10c] sm:$0xff]
      %v2434 = vld [vmem:[%s15 + $0x114] sm:$0xff]
      %v2435 = vld [vmem:[%s15 + $0x11c] sm:$0xf]
      %v2460 = vunpack.c.l.b16 %v2412
      %v2461 = vunpack.c.h.b16 %v2412
      %v2462 = vunpack.c.h.b16 %v2413
      %v2463 = vunpack.c.l.b16 %v2414
      %v2464 = vunpack.c.l.b16 %v2415
      %v2465 = vunpack.c.h.b16 %v2415
      %v2466 = vunpack.c.h.b16 %v2416
      %v2467 = vunpack.c.l.b16 %v2417
      %v2468 = vunpack.c.l.b16 %v2418
      %v2469 = vunpack.c.h.b16 %v2418
      %v2470 = vunpack.c.h.b16 %v2419
      %v2471 = vunpack.c.l.b16 %v2420
      %v2472 = vunpack.c.l.b16 %v2421
      %v2473 = vunpack.c.h.b16 %v2421
      %v2474 = vunpack.c.h.b16 %v2422
      %v2475 = vunpack.c.l.b16 %v2423
      %v2476 = vunpack.c.l.b16 %v2424
      %v2477 = vunpack.c.h.b16 %v2424
      %v2478 = vunpack.c.h.b16 %v2425
      %v2479 = vunpack.c.l.b16 %v2426
      %v2480 = vunpack.c.l.b16 %v2427
      %v2481 = vunpack.c.h.b16 %v2427
      %v2482 = vunpack.c.h.b16 %v2428
      %v2483 = vunpack.c.l.b16 %v2429
      %v2484 = vunpack.c.l.b16 %v2430
      %v2485 = vunpack.c.h.b16 %v2430
      %v2486 = vunpack.c.h.b16 %v2431
      %v2487 = vunpack.c.l.b16 %v2432
      %v2488 = vunpack.c.l.b16 %v2433
      %v2489 = vunpack.c.h.b16 %v2433
      %v2490 = vunpack.c.h.b16 %v2434
      %v2491 = vunpack.c.l.b16 %v2435
      %v2492 = vpack.c.b16 %v2464, %v2460
      %v2493 = vpack.c.b16 %v2465, %v2461
      %v2494 = vpack.c.b16 %v2466, %v2462
      %v2495 = vpack.c.b16 %v2467, %v2463
      %v2496 = vpack.c.b16 %v2472, %v2468
      %v2497 = vpack.c.b16 %v2473, %v2469
      %v2498 = vpack.c.b16 %v2474, %v2470
      %v2499 = vpack.c.b16 %v2475, %v2471
      %v2500 = vpack.c.b16 %v2480, %v2476
      %v2501 = vpack.c.b16 %v2481, %v2477
      %v2502 = vpack.c.b16 %v2482, %v2478
      %v2503 = vpack.c.b16 %v2483, %v2479
      %v2504 = vpack.c.b16 %v2488, %v2484
      %v2505 = vpack.c.b16 %v2489, %v2485
      %v2506 = vpack.c.b16 %v2490, %v2486
      %v2507 = vpack.c.b16 %v2491, %v2487
      %v2525 = vsel %vm1143, %v2411, 0
      %2527 = vmatpush.bf16.msra.mxu0 0
      %2528 = vmatpush.bf16.msra.mxu0 0
      %2529 = vmatpush.bf16.msra.mxu0 0
      %2530 = vmatpush.bf16.msra.mxu0 0
      %2531 = vmatpush.bf16.msra.mxu0 %v2504
      %2532 = vmatpush.bf16.msra.mxu0 %v2500
      %2533 = vmatpush.bf16.msra.mxu0 %v2496
      %2534 = vmatpush.bf16.msra.mxu0 %v2492
      %2535 = vmatmul.bf16.gmra.mxu0 %v2525
      %v2536 = vpop.f32.mrf.mxu0
      %v2537 = vadd.f32 0.0, %v2536
      %v2538 = vpop.f32.mrf.mxu0
      %2539 = vdwg.mxu0
      %2540 = vmatpush.bf16.msra.mxu0 0
      %2541 = vmatpush.bf16.msra.mxu0 0
      %2542 = vmatpush.bf16.msra.mxu0 0
      %2543 = vmatpush.bf16.msra.mxu0 0
      %2544 = vmatpush.bf16.msra.mxu0 %v2505
      %2545 = vmatpush.bf16.msra.mxu0 %v2501
      %2546 = vmatpush.bf16.msra.mxu0 %v2497
      %2547 = vmatpush.bf16.msra.mxu0 %v2493
      %2548 = vmatmul.bf16.gmra.mxu0 %v2525
      %v2549 = vpop.f32.mrf.mxu0
      %v2550 = vadd.f32 0.0, %v2549
      %v2551 = vpop.f32.mrf.mxu0
      %2552 = vdwg.mxu0
      %2553 = vmatpush.bf16.msra.mxu0 0
      %2554 = vmatpush.bf16.msra.mxu0 0
      %2555 = vmatpush.bf16.msra.mxu0 0
      %2556 = vmatpush.bf16.msra.mxu0 0
      %2557 = vmatpush.bf16.msra.mxu0 %v2506
      %2558 = vmatpush.bf16.msra.mxu0 %v2502
      %2559 = vmatpush.bf16.msra.mxu0 %v2498
      %2560 = vmatpush.bf16.msra.mxu0 %v2494
      %2561 = vmatmul.bf16.gmra.mxu0 %v2525
      %v2562 = vpop.f32.mrf.mxu0
      %v2563 = vadd.f32 0.0, %v2562
      %v2564 = vpop.f32.mrf.mxu0
      %2565 = vdwg.mxu0
      %2566 = vmatpush.bf16.msra.mxu0 0
      %2567 = vmatpush.bf16.msra.mxu0 0
      %2568 = vmatpush.bf16.msra.mxu0 0
      %2569 = vmatpush.bf16.msra.mxu0 0
      %2570 = vmatpush.bf16.msra.mxu0 %v2507
      %2571 = vmatpush.bf16.msra.mxu0 %v2503
      %2572 = vmatpush.bf16.msra.mxu0 %v2499
      %2573 = vmatpush.bf16.msra.mxu0 %v2495
      %2574 = vmatmul.bf16.gmra.mxu0 %v2525
      %v2575 = vpop.f32.mrf.mxu0
      %v2576 = vadd.f32 0.0, %v2575
      %v2577 = vpop.f32.mrf.mxu0
      %2578 = vdwg.mxu0
      %v2579 = vld [vmem:[%s14] sm:$0xf]
      %v2581 = vrot.slane %v2579, 1
      %v2582 = vsel %vm2089, %v2581, 0
      %v2585 = vsel %vm2092, %v2550, 0
      %2587 = vmatpush.msra.mxu0 0.0
      %2588 = vmatpush.msra.mxu0 0.0
      %2589 = vmatpush.msra.mxu0 0.0
      %2590 = vmatpush.msra.mxu0 0.0
      %2591 = vmatpush.msra.mxu0 0.0
      %2592 = vmatpush.msra.mxu0 0.0
      %2593 = vmatpush.msra.mxu0 0.0
      %2594 = vmatpush.msra.mxu0 0.0
      %2595 = vmatpush.msra.mxu0 0.0
      %2596 = vmatpush.msra.mxu0 0.0
      %2597 = vmatpush.msra.mxu0 0.0
      %2598 = vmatpush.msra.mxu0 0.0
      %2599 = vmatpush.msra.mxu0 0.0
      %2600 = vmatpush.msra.mxu0 0.0
      %2601 = vmatpush.msra.mxu0 0.0
      %2602 = vmatpush.msra.mxu0 %v2585
      %2603 = vmatmul.f32.gmra.mxu0 %v2582
      %v2604 = vpop.f32.mrf.mxu0
      %v2605 = vadd.f32 0.0, %v2604
      %2606 = vdwg.mxu0
      %v2607 = vsel %vm2089, %v2579, 0
      %v2610 = vsel %vm2092, %v2537, 0
      %2612 = vmatpush.msra.mxu0 0.0
      %2613 = vmatpush.msra.mxu0 0.0
      %2614 = vmatpush.msra.mxu0 0.0
      %2615 = vmatpush.msra.mxu0 0.0
      %2616 = vmatpush.msra.mxu0 0.0
      %2617 = vmatpush.msra.mxu0 0.0
      %2618 = vmatpush.msra.mxu0 0.0
      %2619 = vmatpush.msra.mxu0 0.0
      %2620 = vmatpush.msra.mxu0 0.0
      %2621 = vmatpush.msra.mxu0 0.0
      %2622 = vmatpush.msra.mxu0 0.0
      %2623 = vmatpush.msra.mxu0 0.0
      %2624 = vmatpush.msra.mxu0 0.0
      %2625 = vmatpush.msra.mxu0 0.0
      %2626 = vmatpush.msra.mxu0 0.0
      %2627 = vmatpush.msra.mxu0 %v2610
      %2628 = vmatmul.f32.gmra.mxu0 %v2607
      %v2629 = vpop.f32.mrf.mxu0
      %v2630 = vadd.f32 %v2605, %v2629
      %2631 = vdwg.mxu0
      %v2632 = vrot.slane %v2579, 2
      %v2633 = vsel %vm2089, %v2632, 0
      %v2636 = vsel %vm2092, %v2563, 0
      %2638 = vmatpush.msra.mxu0 0.0
      %2639 = vmatpush.msra.mxu0 0.0
      %2640 = vmatpush.msra.mxu0 0.0
      %2641 = vmatpush.msra.mxu0 0.0
      %2642 = vmatpush.msra.mxu0 0.0
      %2643 = vmatpush.msra.mxu0 0.0
      %2644 = vmatpush.msra.mxu0 0.0
      %2645 = vmatpush.msra.mxu0 0.0
      %2646 = vmatpush.msra.mxu0 0.0
      %2647 = vmatpush.msra.mxu0 0.0
      %2648 = vmatpush.msra.mxu0 0.0
      %2649 = vmatpush.msra.mxu0 0.0
      %2650 = vmatpush.msra.mxu0 0.0
      %2651 = vmatpush.msra.mxu0 0.0
      %2652 = vmatpush.msra.mxu0 0.0
      %2653 = vmatpush.msra.mxu0 %v2636
      %2654 = vmatmul.f32.gmra.mxu0 %v2633
      %v2655 = vpop.f32.mrf.mxu0
      %v2656 = vadd.f32 0.0, %v2655
      %2657 = vdwg.mxu0
      %v2658 = vadd.f32 %v2630, %v2656
      %v2659 = vrot.slane %v2579, 3
      %v2660 = vsel %vm2089, %v2659, 0
      %v2663 = vsel %vm2092, %v2576, 0
      %2665 = vmatpush.msra.mxu0 0.0
      %2666 = vmatpush.msra.mxu0 0.0
      %2667 = vmatpush.msra.mxu0 0.0
      %2668 = vmatpush.msra.mxu0 0.0
      %2669 = vmatpush.msra.mxu0 0.0
      %2670 = vmatpush.msra.mxu0 0.0
      %2671 = vmatpush.msra.mxu0 0.0
      %2672 = vmatpush.msra.mxu0 0.0
      %2673 = vmatpush.msra.mxu0 0.0
      %2674 = vmatpush.msra.mxu0 0.0
      %2675 = vmatpush.msra.mxu0 0.0
      %2676 = vmatpush.msra.mxu0 0.0
      %2677 = vmatpush.msra.mxu0 0.0
      %2678 = vmatpush.msra.mxu0 0.0
      %2679 = vmatpush.msra.mxu0 0.0
      %2680 = vmatpush.msra.mxu0 %v2663
      %2681 = vmatmul.f32.gmra.mxu0 %v2660
      %v2682 = vpop.f32.mrf.mxu0
      %v2683 = vadd.f32 0.0, %v2682
      %2684 = vdwg.mxu0
      %v2685 = vadd.f32 %v2658, %v2683
      %v2686 = vadd.f32 %v2685, %v2410
      %v2687 = vmax.f32 %v2686, 0.0
      %v2688 = vld [vmem:[%s18] sm:$0x1]
      %v2689 = vpack.c.bf16 %v2687, %v2687
      %v2690 = vld [vmem:[%s17 + $0x10] sm:$0xff]
      %v2691 = vld [vmem:[%s17 + $0x34] sm:$0xff]
      %v2692 = vld [vmem:[%s17 + $0x58] sm:$0xff]
      %v2693 = vld [vmem:[%s17 + $0x7c] sm:$0xff]
      %v2694 = vld [vmem:[%s17 + $0xa0] sm:$0xff]
      %v2695 = vld [vmem:[%s17 + $0xc4] sm:$0xff]
      %v2696 = vld [vmem:[%s17 + $0xe8] sm:$0xff]
      %v2697 = vld [vmem:[%s17 + $0x10c] sm:$0xff]
      %v2698 = vld [vmem:[%s17 + $0x130] sm:$0xff]
      %v2699 = vld [vmem:[%s17 + $0x154] sm:$0xff]
      %v2700 = vld [vmem:[%s17 + $0x178] sm:$0xff]
      %v2701 = vld [vmem:[%s17 + $0x19c] sm:$0xff]
      %v2702 = vld [vmem:[%s17 + $0x1c0] sm:$0xff]
      %v2703 = vld [vmem:[%s17 + $0x1e4] sm:$0xff]
      %v2704 = vld [vmem:[%s17 + $0x208] sm:$0xff]
      %v2705 = vld [vmem:[%s17 + $0x22c] sm:$0xff]
      %v2722 = vunpack.c.l.b16 %v2690
      %v2723 = vunpack.c.l.b16 %v2691
      %v2724 = vunpack.c.l.b16 %v2692
      %v2725 = vunpack.c.l.b16 %v2693
      %v2726 = vunpack.c.l.b16 %v2694
      %v2727 = vunpack.c.l.b16 %v2695
      %v2728 = vunpack.c.l.b16 %v2696
      %v2729 = vunpack.c.l.b16 %v2697
      %v2730 = vunpack.c.l.b16 %v2698
      %v2731 = vunpack.c.l.b16 %v2699
      %v2732 = vunpack.c.l.b16 %v2700
      %v2733 = vunpack.c.l.b16 %v2701
      %v2734 = vunpack.c.l.b16 %v2702
      %v2735 = vunpack.c.l.b16 %v2703
      %v2736 = vunpack.c.l.b16 %v2704
      %v2737 = vunpack.c.l.b16 %v2705
      %v2738 = vpack.c.b16 %v2723, %v2722
      %v2739 = vpack.c.b16 %v2725, %v2724
      %v2740 = vpack.c.b16 %v2727, %v2726
      %v2741 = vpack.c.b16 %v2729, %v2728
      %v2742 = vpack.c.b16 %v2731, %v2730
      %v2743 = vpack.c.b16 %v2733, %v2732
      %v2744 = vpack.c.b16 %v2735, %v2734
      %v2745 = vpack.c.b16 %v2737, %v2736
      %2754 = vmatpush.bf16.msra.mxu0 %v2745
      %2755 = vmatpush.bf16.msra.mxu0 %v2744
      %2756 = vmatpush.bf16.msra.mxu0 %v2743
      %2757 = vmatpush.bf16.msra.mxu0 %v2742
      %2758 = vmatpush.bf16.msra.mxu0 %v2741
      %2759 = vmatpush.bf16.msra.mxu0 %v2740
      %2760 = vmatpush.bf16.msra.mxu0 %v2739
      %2761 = vmatpush.bf16.msra.mxu0 %v2738
      %2762 = vmatmul.bf16.gmra.mxu0 %v2689
      %v2763 = vpop.f32.mrf.mxu0
      %v2764 = vadd.f32 0.0, %v2763
      %v2765 = vpop.f32.mrf.mxu0
      %2766 = vdwg.mxu0
      %v2767 = vadd.f32 %v2764, %v2688
      %v2768 = vld [vmem:[%s19] sm:$0x1]
      %v2770 = vsel %vm2089, %v2768, 0
      %v2773 = vsel %vm2092, %v2409, 0
      %2775 = vmatpush.msra.mxu0 0.0
      %2776 = vmatpush.msra.mxu0 0.0
      %2777 = vmatpush.msra.mxu0 0.0
      %2778 = vmatpush.msra.mxu0 0.0
      %2779 = vmatpush.msra.mxu0 0.0
      %2780 = vmatpush.msra.mxu0 0.0
      %2781 = vmatpush.msra.mxu0 0.0
      %2782 = vmatpush.msra.mxu0 0.0
      %2783 = vmatpush.msra.mxu0 0.0
      %2784 = vmatpush.msra.mxu0 0.0
      %2785 = vmatpush.msra.mxu0 0.0
      %2786 = vmatpush.msra.mxu0 0.0
      %2787 = vmatpush.msra.mxu0 0.0
      %2788 = vmatpush.msra.mxu0 0.0
      %2789 = vmatpush.msra.mxu0 0.0
      %2790 = vmatpush.msra.mxu0 %v2773
      %2791 = vmatmul.f32.gmra.mxu0 %v2770
      %v2792 = vpop.f32.mrf.mxu0
      %v2793 = vadd.f32 0.0, %v2792
      %2794 = vdwg.mxu0
      %v2795 = vpack.c.bf16 %v2793, %v2793
      %v2796 = vld [vmem:[%s20] sm:$0xf]
      %v2797 = vld [vmem:[%s20 + $0x4] sm:$0xf]
      %v2798 = vld [vmem:[%s20 + $0x8] sm:$0xf]
      %v2799 = vld [vmem:[%s20 + $0xc] sm:$0xf]
      %v2800 = vld [vmem:[%s20 + $0x10] sm:$0xf]
      %v2801 = vld [vmem:[%s20 + $0x14] sm:$0xf]
      %v2802 = vld [vmem:[%s20 + $0x18] sm:$0xf]
      %v2803 = vld [vmem:[%s20 + $0x1c] sm:$0xf]
      %v2812 = vunpack.c.l.b16 %v2796
      %v2813 = vunpack.c.l.b16 %v2797
      %v2814 = vunpack.c.l.b16 %v2798
      %v2815 = vunpack.c.l.b16 %v2799
      %v2816 = vunpack.c.l.b16 %v2800
      %v2817 = vunpack.c.l.b16 %v2801
      %v2818 = vunpack.c.l.b16 %v2802
      %v2819 = vunpack.c.l.b16 %v2803
      %v2820 = vpack.c.b16 %v2813, %v2812
      %v2821 = vpack.c.b16 %v2815, %v2814
      %v2822 = vpack.c.b16 %v2817, %v2816
      %v2823 = vpack.c.b16 %v2819, %v2818
      %v2829 = vsel %vm1143, %v2795, 0
      %2831 = vmatpush.bf16.msra.mxu0 0
      %2832 = vmatpush.bf16.msra.mxu0 0
      %2833 = vmatpush.bf16.msra.mxu0 0
      %2834 = vmatpush.bf16.msra.mxu0 0
      %2835 = vmatpush.bf16.msra.mxu0 %v2823
      %2836 = vmatpush.bf16.msra.mxu0 %v2822
      %2837 = vmatpush.bf16.msra.mxu0 %v2821
      %2838 = vmatpush.bf16.msra.mxu0 %v2820
      %2839 = vmatmul.bf16.gmra.mxu0 %v2829
      %v2840 = vpop.f32.mrf.mxu0
      %v2841 = vadd.f32 0.0, %v2840
      %v2842 = vpop.f32.mrf.mxu0
      %2843 = vdwg.mxu0
      %v2844 = vadd.f32 %v2767, %v2841
      %v2845 = vmax.f32 %v2844, 0.0
      %v2846 = vld [vmem:[%s22] sm:$0x3]
      %v2847 = vpack.c.bf16 %v2845, %v2845
      %v2848 = vld [vmem:[%s21 + $0x20] sm:$0xff]
      %v2849 = vld [vmem:[%s21 + $0x68] sm:$0xff]
      %v2850 = vld [vmem:[%s21 + $0xb0] sm:$0xff]
      %v2851 = vld [vmem:[%s21 + $0xf8] sm:$0xff]
      %v2852 = vld [vmem:[%s21 + $0x140] sm:$0xff]
      %v2853 = vld [vmem:[%s21 + $0x188] sm:$0xff]
      %v2854 = vld [vmem:[%s21 + $0x1d0] sm:$0xff]
      %v2855 = vld [vmem:[%s21 + $0x218] sm:$0xff]
      %v2856 = vld [vmem:[%s21 + $0x260] sm:$0xff]
      %v2857 = vld [vmem:[%s21 + $0x2a8] sm:$0xff]
      %v2858 = vld [vmem:[%s21 + $0x2f0] sm:$0xff]
      %v2859 = vld [vmem:[%s21 + $0x338] sm:$0xff]
      %v2860 = vld [vmem:[%s21 + $0x380] sm:$0xff]
      %v2861 = vld [vmem:[%s21 + $0x3c8] sm:$0xff]
      %v2862 = vld [vmem:[%s21 + $0x410] sm:$0xff]
      %v2863 = vld [vmem:[%s21 + $0x458] sm:$0xff]
      %v2880 = vunpack.c.l.b16 %v2848
      %v2881 = vunpack.c.h.b16 %v2848
      %v2882 = vunpack.c.l.b16 %v2849
      %v2883 = vunpack.c.h.b16 %v2849
      %v2884 = vunpack.c.l.b16 %v2850
      %v2885 = vunpack.c.h.b16 %v2850
      %v2886 = vunpack.c.l.b16 %v2851
      %v2887 = vunpack.c.h.b16 %v2851
      %v2888 = vunpack.c.l.b16 %v2852
      %v2889 = vunpack.c.h.b16 %v2852
      %v2890 = vunpack.c.l.b16 %v2853
      %v2891 = vunpack.c.h.b16 %v2853
      %v2892 = vunpack.c.l.b16 %v2854
      %v2893 = vunpack.c.h.b16 %v2854
      %v2894 = vunpack.c.l.b16 %v2855
      %v2895 = vunpack.c.h.b16 %v2855
      %v2896 = vunpack.c.l.b16 %v2856
      %v2897 = vunpack.c.h.b16 %v2856
      %v2898 = vunpack.c.l.b16 %v2857
      %v2899 = vunpack.c.h.b16 %v2857
      %v2900 = vunpack.c.l.b16 %v2858
      %v2901 = vunpack.c.h.b16 %v2858
      %v2902 = vunpack.c.l.b16 %v2859
      %v2903 = vunpack.c.h.b16 %v2859
      %v2904 = vunpack.c.l.b16 %v2860
      %v2905 = vunpack.c.h.b16 %v2860
      %v2906 = vunpack.c.l.b16 %v2861
      %v2907 = vunpack.c.h.b16 %v2861
      %v2908 = vunpack.c.l.b16 %v2862
      %v2909 = vunpack.c.h.b16 %v2862
      %v2910 = vunpack.c.l.b16 %v2863
      %v2911 = vunpack.c.h.b16 %v2863
      %v2912 = vpack.c.b16 %v2882, %v2880
      %v2913 = vpack.c.b16 %v2883, %v2881
      %v2914 = vpack.c.b16 %v2886, %v2884
      %v2915 = vpack.c.b16 %v2887, %v2885
      %v2916 = vpack.c.b16 %v2890, %v2888
      %v2917 = vpack.c.b16 %v2891, %v2889
      %v2918 = vpack.c.b16 %v2894, %v2892
      %v2919 = vpack.c.b16 %v2895, %v2893
      %v2920 = vpack.c.b16 %v2898, %v2896
      %v2921 = vpack.c.b16 %v2899, %v2897
      %v2922 = vpack.c.b16 %v2902, %v2900
      %v2923 = vpack.c.b16 %v2903, %v2901
      %v2924 = vpack.c.b16 %v2906, %v2904
      %v2925 = vpack.c.b16 %v2907, %v2905
      %v2926 = vpack.c.b16 %v2910, %v2908
      %v2927 = vpack.c.b16 %v2911, %v2909
      %2944 = vmatpush.bf16.msra.mxu0 %v2926
      %2945 = vmatpush.bf16.msra.mxu0 %v2924
      %2946 = vmatpush.bf16.msra.mxu0 %v2922
      %2947 = vmatpush.bf16.msra.mxu0 %v2920
      %2948 = vmatpush.bf16.msra.mxu0 %v2918
      %2949 = vmatpush.bf16.msra.mxu0 %v2916
      %2950 = vmatpush.bf16.msra.mxu0 %v2914
      %2951 = vmatpush.bf16.msra.mxu0 %v2912
      %2952 = vmatmul.bf16.gmra.mxu0 %v2847
      %v2953 = vpop.f32.mrf.mxu0
      %v2954 = vadd.f32 0.0, %v2953
      %v2955 = vpop.f32.mrf.mxu0
      %2956 = vdwg.mxu0
      %2957 = vmatpush.bf16.msra.mxu0 %v2927
      %2958 = vmatpush.bf16.msra.mxu0 %v2925
      %2959 = vmatpush.bf16.msra.mxu0 %v2923
      %2960 = vmatpush.bf16.msra.mxu0 %v2921
      %2961 = vmatpush.bf16.msra.mxu0 %v2919
      %2962 = vmatpush.bf16.msra.mxu0 %v2917
      %2963 = vmatpush.bf16.msra.mxu0 %v2915
      %2964 = vmatpush.bf16.msra.mxu0 %v2913
      %2965 = vmatmul.bf16.gmra.mxu0 %v2847
      %v2966 = vpop.f32.mrf.mxu0
      %v2967 = vadd.f32 0.0, %v2966
      %v2968 = vpop.f32.mrf.mxu0
      %2969 = vdwg.mxu0
      %v2971 = vperm.slane %v2846, 0
      %v2972 = vperm.slane %v2846, 1
      %v2975 = vadd.f32 %v2954, %v2971
      %v2976 = vadd.f32 %v2967, %v2972
      %v2977 = vmax.f32 %v2975, 0.0
      %v2978 = vmax.f32 %v2976, 0.0
      %v2979 = vld [vmem:[%s24] sm:$0x3]
      %v2980 = vpack.c.bf16 %v2977, %v2977
      %v2981 = vpack.c.bf16 %v2978, %v2978
      %v2982 = vld [vmem:[%s23 + $0x20] sm:$0xff]
      %v2983 = vld [vmem:[%s23 + $0x68] sm:$0xff]
      %v2984 = vld [vmem:[%s23 + $0xb0] sm:$0xff]
      %v2985 = vld [vmem:[%s23 + $0xf8] sm:$0xff]
      %v2986 = vld [vmem:[%s23 + $0x140] sm:$0xff]
      %v2987 = vld [vmem:[%s23 + $0x188] sm:$0xff]
      %v2988 = vld [vmem:[%s23 + $0x1d0] sm:$0xff]
      %v2989 = vld [vmem:[%s23 + $0x218] sm:$0xff]
      %v2990 = vld [vmem:[%s23 + $0x260] sm:$0xff]
      %v2991 = vld [vmem:[%s23 + $0x2a8] sm:$0xff]
      %v2992 = vld [vmem:[%s23 + $0x2f0] sm:$0xff]
      %v2993 = vld [vmem:[%s23 + $0x338] sm:$0xff]
      %v2994 = vld [vmem:[%s23 + $0x380] sm:$0xff]
      %v2995 = vld [vmem:[%s23 + $0x3c8] sm:$0xff]
      %v2996 = vld [vmem:[%s23 + $0x410] sm:$0xff]
      %v2997 = vld [vmem:[%s23 + $0x458] sm:$0xff]
      %v2998 = vld [vmem:[%s23 + $0x4a0] sm:$0xff]
      %v2999 = vld [vmem:[%s23 + $0x4e8] sm:$0xff]
      %v3000 = vld [vmem:[%s23 + $0x530] sm:$0xff]
      %v3001 = vld [vmem:[%s23 + $0x578] sm:$0xff]
      %v3002 = vld [vmem:[%s23 + $0x5c0] sm:$0xff]
      %v3003 = vld [vmem:[%s23 + $0x608] sm:$0xff]
      %v3004 = vld [vmem:[%s23 + $0x650] sm:$0xff]
      %v3005 = vld [vmem:[%s23 + $0x698] sm:$0xff]
      %v3006 = vld [vmem:[%s23 + $0x6e0] sm:$0xff]
      %v3007 = vld [vmem:[%s23 + $0x728] sm:$0xff]
      %v3008 = vld [vmem:[%s23 + $0x770] sm:$0xff]
      %v3009 = vld [vmem:[%s23 + $0x7b8] sm:$0xff]
      %v3010 = vld [vmem:[%s23 + $0x800] sm:$0xff]
      %v3011 = vld [vmem:[%s23 + $0x848] sm:$0xff]
      %v3012 = vld [vmem:[%s23 + $0x890] sm:$0xff]
      %v3013 = vld [vmem:[%s23 + $0x8d8] sm:$0xff]
      %v3046 = vunpack.c.l.b16 %v2982
      %v3047 = vunpack.c.h.b16 %v2982
      %v3048 = vunpack.c.l.b16 %v2983
      %v3049 = vunpack.c.h.b16 %v2983
      %v3050 = vunpack.c.l.b16 %v2984
      %v3051 = vunpack.c.h.b16 %v2984
      %v3052 = vunpack.c.l.b16 %v2985
      %v3053 = vunpack.c.h.b16 %v2985
      %v3054 = vunpack.c.l.b16 %v2986
      %v3055 = vunpack.c.h.b16 %v2986
      %v3056 = vunpack.c.l.b16 %v2987
      %v3057 = vunpack.c.h.b16 %v2987
      %v3058 = vunpack.c.l.b16 %v2988
      %v3059 = vunpack.c.h.b16 %v2988
      %v3060 = vunpack.c.l.b16 %v2989
      %v3061 = vunpack.c.h.b16 %v2989
      %v3062 = vunpack.c.l.b16 %v2990
      %v3063 = vunpack.c.h.b16 %v2990
      %v3064 = vunpack.c.l.b16 %v2991
      %v3065 = vunpack.c.h.b16 %v2991
      %v3066 = vunpack.c.l.b16 %v2992
      %v3067 = vunpack.c.h.b16 %v2992
      %v3068 = vunpack.c.l.b16 %v2993
      %v3069 = vunpack.c.h.b16 %v2993
      %v3070 = vunpack.c.l.b16 %v2994
      %v3071 = vunpack.c.h.b16 %v2994
      %v3072 = vunpack.c.l.b16 %v2995
      %v3073 = vunpack.c.h.b16 %v2995
      %v3074 = vunpack.c.l.b16 %v2996
      %v3075 = vunpack.c.h.b16 %v2996
      %v3076 = vunpack.c.l.b16 %v2997
      %v3077 = vunpack.c.h.b16 %v2997
      %v3078 = vunpack.c.l.b16 %v2998
      %v3079 = vunpack.c.h.b16 %v2998
      %v3080 = vunpack.c.l.b16 %v2999
      %v3081 = vunpack.c.h.b16 %v2999
      %v3082 = vunpack.c.l.b16 %v3000
      %v3083 = vunpack.c.h.b16 %v3000
      %v3084 = vunpack.c.l.b16 %v3001
      %v3085 = vunpack.c.h.b16 %v3001
      %v3086 = vunpack.c.l.b16 %v3002
      %v3087 = vunpack.c.h.b16 %v3002
      %v3088 = vunpack.c.l.b16 %v3003
      %v3089 = vunpack.c.h.b16 %v3003
      %v3090 = vunpack.c.l.b16 %v3004
      %v3091 = vunpack.c.h.b16 %v3004
      %v3092 = vunpack.c.l.b16 %v3005
      %v3093 = vunpack.c.h.b16 %v3005
      %v3094 = vunpack.c.l.b16 %v3006
      %v3095 = vunpack.c.h.b16 %v3006
      %v3096 = vunpack.c.l.b16 %v3007
      %v3097 = vunpack.c.h.b16 %v3007
      %v3098 = vunpack.c.l.b16 %v3008
      %v3099 = vunpack.c.h.b16 %v3008
      %v3100 = vunpack.c.l.b16 %v3009
      %v3101 = vunpack.c.h.b16 %v3009
      %v3102 = vunpack.c.l.b16 %v3010
      %v3103 = vunpack.c.h.b16 %v3010
      %v3104 = vunpack.c.l.b16 %v3011
      %v3105 = vunpack.c.h.b16 %v3011
      %v3106 = vunpack.c.l.b16 %v3012
      %v3107 = vunpack.c.h.b16 %v3012
      %v3108 = vunpack.c.l.b16 %v3013
      %v3109 = vunpack.c.h.b16 %v3013
      %v3110 = vpack.c.b16 %v3048, %v3046
      %v3111 = vpack.c.b16 %v3049, %v3047
      %v3112 = vpack.c.b16 %v3052, %v3050
      %v3113 = vpack.c.b16 %v3053, %v3051
      %v3114 = vpack.c.b16 %v3056, %v3054
      %v3115 = vpack.c.b16 %v3057, %v3055
      %v3116 = vpack.c.b16 %v3060, %v3058
      %v3117 = vpack.c.b16 %v3061, %v3059
      %v3118 = vpack.c.b16 %v3064, %v3062
      %v3119 = vpack.c.b16 %v3065, %v3063
      %v3120 = vpack.c.b16 %v3068, %v3066
      %v3121 = vpack.c.b16 %v3069, %v3067
      %v3122 = vpack.c.b16 %v3072, %v3070
      %v3123 = vpack.c.b16 %v3073, %v3071
      %v3124 = vpack.c.b16 %v3076, %v3074
      %v3125 = vpack.c.b16 %v3077, %v3075
      %v3126 = vpack.c.b16 %v3080, %v3078
      %v3127 = vpack.c.b16 %v3081, %v3079
      %v3128 = vpack.c.b16 %v3084, %v3082
      %v3129 = vpack.c.b16 %v3085, %v3083
      %v3130 = vpack.c.b16 %v3088, %v3086
      %v3131 = vpack.c.b16 %v3089, %v3087
      %v3132 = vpack.c.b16 %v3092, %v3090
      %v3133 = vpack.c.b16 %v3093, %v3091
      %v3134 = vpack.c.b16 %v3096, %v3094
      %v3135 = vpack.c.b16 %v3097, %v3095
      %v3136 = vpack.c.b16 %v3100, %v3098
      %v3137 = vpack.c.b16 %v3101, %v3099
      %v3138 = vpack.c.b16 %v3104, %v3102
      %v3139 = vpack.c.b16 %v3105, %v3103
      %v3140 = vpack.c.b16 %v3108, %v3106
      %v3141 = vpack.c.b16 %v3109, %v3107
      %3174 = vmatpush.bf16.msra.mxu0 %v3124
      %3175 = vmatpush.bf16.msra.mxu0 %v3122
      %3176 = vmatpush.bf16.msra.mxu0 %v3120
      %3177 = vmatpush.bf16.msra.mxu0 %v3118
      %3178 = vmatpush.bf16.msra.mxu0 %v3116
      %3179 = vmatpush.bf16.msra.mxu0 %v3114
      %3180 = vmatpush.bf16.msra.mxu0 %v3112
      %3181 = vmatpush.bf16.msra.mxu0 %v3110
      %3182 = vmatmul.bf16.gmra.mxu0 %v2980
      %v3183 = vpop.f32.mrf.mxu0
      %v3184 = vadd.f32 0.0, %v3183
      %v3185 = vpop.f32.mrf.mxu0
      %3186 = vdwg.mxu0
      %3187 = vmatpush.bf16.msra.mxu0 %v3140
      %3188 = vmatpush.bf16.msra.mxu0 %v3138
      %3189 = vmatpush.bf16.msra.mxu0 %v3136
      %3190 = vmatpush.bf16.msra.mxu0 %v3134
      %3191 = vmatpush.bf16.msra.mxu0 %v3132
      %3192 = vmatpush.bf16.msra.mxu0 %v3130
      %3193 = vmatpush.bf16.msra.mxu0 %v3128
      %3194 = vmatpush.bf16.msra.mxu0 %v3126
      %3195 = vmatmul.bf16.gmra.mxu0 %v2981
      %v3196 = vpop.f32.mrf.mxu0
      %v3197 = vadd.f32 %v3184, %v3196
      %v3198 = vpop.f32.mrf.mxu0
      %3199 = vdwg.mxu0
      %3200 = vmatpush.bf16.msra.mxu0 %v3125
      %3201 = vmatpush.bf16.msra.mxu0 %v3123
      %3202 = vmatpush.bf16.msra.mxu0 %v3121
      %3203 = vmatpush.bf16.msra.mxu0 %v3119
      %3204 = vmatpush.bf16.msra.mxu0 %v3117
      %3205 = vmatpush.bf16.msra.mxu0 %v3115
      %3206 = vmatpush.bf16.msra.mxu0 %v3113
      %3207 = vmatpush.bf16.msra.mxu0 %v3111
      %3208 = vmatmul.bf16.gmra.mxu0 %v2980
      %v3209 = vpop.f32.mrf.mxu0
      %v3210 = vadd.f32 0.0, %v3209
      %v3211 = vpop.f32.mrf.mxu0
      %3212 = vdwg.mxu0
      %3213 = vmatpush.bf16.msra.mxu0 %v3141
      %3214 = vmatpush.bf16.msra.mxu0 %v3139
      %3215 = vmatpush.bf16.msra.mxu0 %v3137
      %3216 = vmatpush.bf16.msra.mxu0 %v3135
      %3217 = vmatpush.bf16.msra.mxu0 %v3133
      %3218 = vmatpush.bf16.msra.mxu0 %v3131
      %3219 = vmatpush.bf16.msra.mxu0 %v3129
      %3220 = vmatpush.bf16.msra.mxu0 %v3127
      %3221 = vmatmul.bf16.gmra.mxu0 %v2981
      %v3222 = vpop.f32.mrf.mxu0
      %v3223 = vadd.f32 %v3210, %v3222
      %v3224 = vpop.f32.mrf.mxu0
      %3225 = vdwg.mxu0
      %v3227 = vperm.slane %v2979, 0
      %v3228 = vperm.slane %v2979, 1
      %v3231 = vadd.f32 %v3197, %v3227
      %v3232 = vadd.f32 %v3223, %v3228
      %v3233 = vld [vmem:[%s25] sm:$0xff]
      %v3234 = vld [vmem:[%s25 + $0x8] sm:$0xff]
      %v3235 = vld [vmem:[%s25 + $0x10] sm:$0xff]
      %v3236 = vld [vmem:[%s25 + $0x18] sm:$0xff]
      %v3237 = vld [vmem:[%s25 + $0x20] sm:$0xff]
      %v3238 = vld [vmem:[%s25 + $0x28] sm:$0xff]
      %v3239 = vld [vmem:[%s25 + $0x30] sm:$0xff]
      %v3240 = vld [vmem:[%s25 + $0x38] sm:$0xff]
      %v3241 = vld [vmem:[%s25 + $0x40] sm:$0xff]
      %v3242 = vld [vmem:[%s25 + $0x48] sm:$0xff]
      %v3243 = vld [vmem:[%s25 + $0x50] sm:$0xff]
      %v3244 = vld [vmem:[%s25 + $0x58] sm:$0xff]
      %v3245 = vld [vmem:[%s25 + $0x60] sm:$0xff]
      %v3246 = vld [vmem:[%s25 + $0x68] sm:$0xff]
      %v3247 = vld [vmem:[%s25 + $0x70] sm:$0xff]
      %v3248 = vld [vmem:[%s25 + $0x78] sm:$0xff]
      %v3265 = vunpack.c.l.b16 %v3233
      %v3266 = vunpack.c.h.b16 %v3233
      %v3267 = vunpack.c.l.b16 %v3234
      %v3268 = vunpack.c.h.b16 %v3234
      %v3269 = vunpack.c.l.b16 %v3235
      %v3270 = vunpack.c.h.b16 %v3235
      %v3271 = vunpack.c.l.b16 %v3236
      %v3272 = vunpack.c.h.b16 %v3236
      %v3273 = vunpack.c.l.b16 %v3237
      %v3274 = vunpack.c.h.b16 %v3237
      %v3275 = vunpack.c.l.b16 %v3238
      %v3276 = vunpack.c.h.b16 %v3238
      %v3277 = vunpack.c.l.b16 %v3239
      %v3278 = vunpack.c.h.b16 %v3239
      %v3279 = vunpack.c.l.b16 %v3240
      %v3280 = vunpack.c.h.b16 %v3240
      %v3281 = vunpack.c.l.b16 %v3241
      %v3282 = vunpack.c.h.b16 %v3241
      %v3283 = vunpack.c.l.b16 %v3242
      %v3284 = vunpack.c.h.b16 %v3242
      %v3285 = vunpack.c.l.b16 %v3243
      %v3286 = vunpack.c.h.b16 %v3243
      %v3287 = vunpack.c.l.b16 %v3244
      %v3288 = vunpack.c.h.b16 %v3244
      %v3289 = vunpack.c.l.b16 %v3245
      %v3290 = vunpack.c.h.b16 %v3245
      %v3291 = vunpack.c.l.b16 %v3246
      %v3292 = vunpack.c.h.b16 %v3246
      %v3293 = vunpack.c.l.b16 %v3247
      %v3294 = vunpack.c.h.b16 %v3247
      %v3295 = vunpack.c.l.b16 %v3248
      %v3296 = vunpack.c.h.b16 %v3248
      %v3297 = vpack.c.b16 %v3267, %v3265
      %v3298 = vpack.c.b16 %v3268, %v3266
      %v3299 = vpack.c.b16 %v3271, %v3269
      %v3300 = vpack.c.b16 %v3272, %v3270
      %v3301 = vpack.c.b16 %v3275, %v3273
      %v3302 = vpack.c.b16 %v3276, %v3274
      %v3303 = vpack.c.b16 %v3279, %v3277
      %v3304 = vpack.c.b16 %v3280, %v3278
      %v3305 = vpack.c.b16 %v3283, %v3281
      %v3306 = vpack.c.b16 %v3284, %v3282
      %v3307 = vpack.c.b16 %v3287, %v3285
      %v3308 = vpack.c.b16 %v3288, %v3286
      %v3309 = vpack.c.b16 %v3291, %v3289
      %v3310 = vpack.c.b16 %v3292, %v3290
      %v3311 = vpack.c.b16 %v3295, %v3293
      %v3312 = vpack.c.b16 %v3296, %v3294
      %3329 = vmatpush.bf16.msra.mxu0 %v3311
      %3330 = vmatpush.bf16.msra.mxu0 %v3309
      %3331 = vmatpush.bf16.msra.mxu0 %v3307
      %3332 = vmatpush.bf16.msra.mxu0 %v3305
      %3333 = vmatpush.bf16.msra.mxu0 %v3303
      %3334 = vmatpush.bf16.msra.mxu0 %v3301
      %3335 = vmatpush.bf16.msra.mxu0 %v3299
      %3336 = vmatpush.bf16.msra.mxu0 %v3297
      %3337 = vmatmul.bf16.gmra.mxu0 %v2847
      %v3338 = vpop.f32.mrf.mxu0
      %v3339 = vadd.f32 0.0, %v3338
      %v3340 = vpop.f32.mrf.mxu0
      %3341 = vdwg.mxu0
      %3342 = vmatpush.bf16.msra.mxu0 %v3312
      %3343 = vmatpush.bf16.msra.mxu0 %v3310
      %3344 = vmatpush.bf16.msra.mxu0 %v3308
      %3345 = vmatpush.bf16.msra.mxu0 %v3306
      %3346 = vmatpush.bf16.msra.mxu0 %v3304
      %3347 = vmatpush.bf16.msra.mxu0 %v3302
      %3348 = vmatpush.bf16.msra.mxu0 %v3300
      %3349 = vmatpush.bf16.msra.mxu0 %v3298
      %3350 = vmatmul.bf16.gmra.mxu0 %v2847
      %v3351 = vpop.f32.mrf.mxu0
      %v3352 = vadd.f32 0.0, %v3351
      %v3353 = vpop.f32.mrf.mxu0
      %3354 = vdwg.mxu0
      %v3355 = vadd.f32 %v3231, %v3339
      %v3356 = vadd.f32 %v3232, %v3352
      %v3357 = vmax.f32 %v3355, 0.0
      %v3358 = vmax.f32 %v3356, 0.0
      %v3359 = vadd.f32 %v3357, 0.0
      %v3360 = vadd.f32 %v3358, 0.0
      %v3361 = vld [vmem:[%s26] sm:$0xff]
      %v3362 = vld [vmem:[%s26 + $0x8] sm:$0xff]
      %v3363 = vld [vmem:[%s26 + $0x10] sm:$0xff]
      %v3364 = vld [vmem:[%s26 + $0x18] sm:$0xff]
      %v3365 = vld [vmem:[%s26 + $0x20] sm:$0xff]
      %v3366 = vld [vmem:[%s26 + $0x28] sm:$0xff]
      %v3367 = vld [vmem:[%s26 + $0x30] sm:$0xff]
      %v3368 = vld [vmem:[%s26 + $0x38] sm:$0xff]
      %v3369 = vld [vmem:[%s26 + $0x40] sm:$0xff]
      %v3370 = vld [vmem:[%s26 + $0x48] sm:$0xff]
      %v3371 = vld [vmem:[%s26 + $0x50] sm:$0xff]
      %v3372 = vld [vmem:[%s26 + $0x58] sm:$0xff]
      %v3373 = vld [vmem:[%s26 + $0x60] sm:$0xff]
      %v3374 = vld [vmem:[%s26 + $0x68] sm:$0xff]
      %v3375 = vld [vmem:[%s26 + $0x70] sm:$0xff]
      %v3376 = vld [vmem:[%s26 + $0x78] sm:$0xff]
      %v3377 = vld [vmem:[%s26 + $0x80] sm:$0xff]
      %v3378 = vld [vmem:[%s26 + $0x88] sm:$0xff]
      %v3379 = vld [vmem:[%s26 + $0x90] sm:$0xff]
      %v3380 = vld [vmem:[%s26 + $0x98] sm:$0xff]
      %v3381 = vld [vmem:[%s26 + $0xa0] sm:$0xff]
      %v3382 = vld [vmem:[%s26 + $0xa8] sm:$0xff]
      %v3383 = vld [vmem:[%s26 + $0xb0] sm:$0xff]
      %v3384 = vld [vmem:[%s26 + $0xb8] sm:$0xff]
      %v3385 = vld [vmem:[%s26 + $0xc0] sm:$0xff]
      %v3386 = vld [vmem:[%s26 + $0xc8] sm:$0xff]
      %v3387 = vld [vmem:[%s26 + $0xd0] sm:$0xff]
      %v3388 = vld [vmem:[%s26 + $0xd8] sm:$0xff]
      %v3389 = vld [vmem:[%s26 + $0xe0] sm:$0xff]
      %v3390 = vld [vmem:[%s26 + $0xe8] sm:$0xff]
      %v3391 = vld [vmem:[%s26 + $0xf0] sm:$0xff]
      %v3392 = vld [vmem:[%s26 + $0xf8] sm:$0xff]
      %v3393 = vld [vmem:[%s27] sm:$0x1]
      %3394 = vmatpush.msra.mxu0 %v3376
      %3395 = vmatpush.msra.mxu0 %v3375
      %3396 = vmatpush.msra.mxu0 %v3374
      %3397 = vmatpush.msra.mxu0 %v3373
      %3398 = vmatpush.msra.mxu0 %v3372
      %3399 = vmatpush.msra.mxu0 %v3371
      %3400 = vmatpush.msra.mxu0 %v3370
      %3401 = vmatpush.msra.mxu0 %v3369
      %3402 = vmatpush.msra.mxu0 %v3368
      %3403 = vmatpush.msra.mxu0 %v3367
      %3404 = vmatpush.msra.mxu0 %v3366
      %3405 = vmatpush.msra.mxu0 %v3365
      %3406 = vmatpush.msra.mxu0 %v3364
      %3407 = vmatpush.msra.mxu0 %v3363
      %3408 = vmatpush.msra.mxu0 %v3362
      %3409 = vmatpush.msra.mxu0 %v3361
      %3410 = vmatmul.f32.gmra.mxu0 %v3359
      %v3411 = vpop.f32.mrf.mxu0
      %v3412 = vadd.f32 %v3393, %v3411
      %3413 = vdwg.mxu0
      %3414 = vmatpush.msra.mxu0 %v3392
      %3415 = vmatpush.msra.mxu0 %v3391
      %3416 = vmatpush.msra.mxu0 %v3390
      %3417 = vmatpush.msra.mxu0 %v3389
      %3418 = vmatpush.msra.mxu0 %v3388
      %3419 = vmatpush.msra.mxu0 %v3387
      %3420 = vmatpush.msra.mxu0 %v3386
      %3421 = vmatpush.msra.mxu0 %v3385
      %3422 = vmatpush.msra.mxu0 %v3384
      %3423 = vmatpush.msra.mxu0 %v3383
      %3424 = vmatpush.msra.mxu0 %v3382
      %3425 = vmatpush.msra.mxu0 %v3381
      %3426 = vmatpush.msra.mxu0 %v3380
      %3427 = vmatpush.msra.mxu0 %v3379
      %3428 = vmatpush.msra.mxu0 %v3378
      %3429 = vmatpush.msra.mxu0 %v3377
      %3430 = vmatmul.f32.gmra.mxu0 %v3360
      %v3431 = vpop.f32.mrf.mxu0
      %v3432 = vadd.f32 %v3412, %v3431
      %3433 = vdwg.mxu0
      %v3434 = vperm.slane %v3432, 0
      %3435 = vst [vmem:[%s845] sm:$0xff] %v3434
      %p3436 = scmp.lt.s32.totalorder %s39, 1
      %s3437 = scalar_select %p3436, %s39, 1
      %s3438 = smul.addr %s3437, 8
      %s3439 = scalar_lea.vmem %s28, %s3438
      // Predicated region
      $region133: #{resnet_forward.1} parent=131 // pred_check
        %p3440 = pneg %p650
      $region134: #{resnet_forward.1} parent=131 // pred_check_branch
        %3442 = sbr.rel (%p3440) target = $region136
      $region135: #{resnet_forward.1} parent=131 // pred_region
        _
      $region136: #{resnet_forward.1} parent=131 // pred_fallthru
        _
    $region132: #{resnet_forward.1} parent=5 // pred_fallthru
      _
    %p3443 = scmp.le.s32.totalorder 2, %s34
    // Predicated region
    $region137: #{resnet_forward.1} parent=5 // pred_check
      %p3444 = pneg %p3443
    $region138: #{resnet_forward.1} parent=5 // pred_check_branch
      %3446 = sbr.rel (%p3444) target = $region140
    $region139: #{resnet_forward.1} parent=5 // pred_region
      %s3447 = ssub.s32 %s34, 2
      // Predicated region
      $region141: #{resnet_forward.1} parent=139 // pred_check
        %p3448 = pneg %p656
      $region142: #{resnet_forward.1} parent=139 // pred_check_branch
        %3450 = sbr.rel (%p3448) target = $region144
      $region143: #{resnet_forward.1} parent=139 // pred_region
        %p3451 = scmp.lt.s32.totalorder %s40, 1
        %s3452 = scalar_select %p3451, %s40, 1
        %s3453 = smul.addr %s3452, 8
        %s3454 = scalar_lea.vmem %s28, %s3453
      $region144: #{resnet_forward.1} parent=139 // pred_fallthru
        _
    $region140: #{resnet_forward.1} parent=5 // pred_fallthru
      _
  $region6: #{resnet_forward.1} parent=0 // loop_footer
    %s38 = sadd.s32 1, %s34
  $region7: #{resnet_forward.1} parent=0 // loop_footer_branch
    %33 = sbr.rel target = $region3
  $region8: #{resnet_forward.1} parent=0 // loop_exit
    _

</llo_original>
